<compile_context>
chip_gen: v6e
topology: v6e:2x2x1
jax: 0.10.0
libtpu: 0.0.40
codegen_flags: <defaults>
</compile_context>

<pallas_src>
import functools

import jax
import jax.numpy as jnp
from jax import lax
from jax.experimental import pallas as pl
from jax.experimental.pallas import tpu as pltpu


# ----------------------------- fused Pallas kernel ------------------------------

def _digit_classifier_kernel(xr_ref, r1_ref, b1_ref, r2_ref, b2_ref,
                             wf1_ref, bf1_ref, wf2_ref, bf2_ref,
                             wf3_ref, bf3_ref, wf4_ref, bf4_ref, out_ref):
    """DigitClassifier forward for one block of BB images, fully resident in VMEM.

    xr_ref : [24*BB, 140] bf16  row ((s*6+q)*BB + b), col kh*28+c = x[b, 4q+s+kh, c]
    r1_ref : [140, 512]   bf16  conv1 RHS; lanes = dw*256 + pw*16 + c1 (pad lanes zero)
    b1_ref : [1, 192]     f32   conv1 bias tiled over pw
    r2_ref : [3, 192, 256] bf16 conv2 RHS per kh2; lanes = dw2*128 + ow*5 + c2
    b2_ref : [1, 128]     f32   conv2 bias tiled over ow (lanes >= 25 zero)
    wf1_ref: [5, 128, 256] bf16 fc1 weight per oh; K lanes = ow*5 + c2 (rows >= 25 zero)
    wf2/3  : [256,128] / [128,64] bf16;  wf4: [64,128] bf16 (cols >= 10 zero)
    out_ref: [BB, 128]    f32   padded logits (lane-dense block store)
    """
    f32, bf16 = jnp.float32, jnp.bfloat16
    BB = out_ref.shape[0]
    n6, n5 = 6 * BB, 5 * BB

    # ---- conv1 (5x5, 1->16) + ReLU + 2x2 max-pool: one MXU call --------------------
    z = jnp.dot(xr_ref[...], r1_ref[...], preferred_element_type=f32)   # [24BB, 512]
    # dh pooling max: the four s-slabs are contiguous, aligned 6*BB-row sublane blocks.
    m0 = jnp.maximum(z[0 * n6:1 * n6], z[1 * n6:2 * n6])   # even pooled rows (r = 2q)
    m1 = jnp.maximum(z[2 * n6:3 * n6], z[3 * n6:4 * n6])   # odd  pooled rows (r = 2q+1)
    # dw pooling max: dw blocks at lane offsets 0 / 256 (tile-aligned slices).
    # Bias + ReLU hoisted out of the pooling max (per-channel bias, ReLU monotone).
    p0 = jnp.maximum(jnp.maximum(m0[:, 0:192], m0[:, 256:448]) + b1_ref[...], 0.0)
    p1 = jnp.maximum(jnp.maximum(m1[:, 0:192], m1[:, 256:448]) + b1_ref[...], 0.0)
    p0 = p0.astype(bf16)            # [6BB, 192], row q*BB + b  ==  pooled1[b, 2q]
    p1 = p1.astype(bf16)            # [6BB, 192], row q*BB + b  ==  pooled1[b, 2q+1]

    # ---- conv2 (3x3, 16->5) + ReLU + 2x2 max-pool -----------------------------------
    # Row selections are aligned contiguous slices thanks to the q-major row order.
    a0 = p0[:n5]        # pooled1[b, 2oh]
    a1 = p1[:n5]        # pooled1[b, 2oh+1]
    s0 = p0[BB:]        # pooled1[b, 2oh+2]
    s1 = p1[BB:]        # pooled1[b, 2oh+3]
    z0 = (jnp.dot(a0, r2_ref[0], preferred_element_type=f32)
          + jnp.dot(a1, r2_ref[1], preferred_element_type=f32)
          + jnp.dot(s0, r2_ref[2], preferred_element_type=f32))   # conv2 rows 2oh
    z1 = (jnp.dot(a1, r2_ref[0], preferred_element_type=f32)
          + jnp.dot(s0, r2_ref[1], preferred_element_type=f32)
          + jnp.dot(s1, r2_ref[2], preferred_element_type=f32))   # conv2 rows 2oh+1
    zm = jnp.maximum(z0, z1)                                      # dh2 pooling max
    y2 = jnp.maximum(jnp.maximum(zm[:, 0:128], zm[:, 128:256]) + b2_ref[...], 0.0)
    y2 = y2.astype(bf16)            # [5BB, 128], row oh*BB + b, lane ow*5 + c2

    # ---- dense head ------------------------------------------------------------------
    # fc1 contracts over (oh, ow, c2): oh lives in M blocks -> 5 accumulated matmuls.
    h = jnp.dot(y2[0:BB], wf1_ref[0], preferred_element_type=f32)
    for oh in range(1, 5):
        h = h + jnp.dot(y2[oh * BB:(oh + 1) * BB], wf1_ref[oh],
                        preferred_element_type=f32)
    h = jnp.maximum(h + bf1_ref[...], 0.0).astype(bf16)            # [BB, 256]
    # TODO(synk): nn.Dropout(0.2) is the identity in eval/inference mode.
    h = jnp.maximum(jnp.dot(h, wf2_ref[...], preferred_element_type=f32)
                    + bf2_ref[...], 0.0).astype(bf16)              # [BB, 128]
    h = jnp.maximum(jnp.dot(h, wf3_ref[...], preferred_element_type=f32)
                    + bf3_ref[...], 0.0).astype(bf16)              # [BB, 64]
    out_ref[...] = (jnp.dot(h, wf4_ref[...], preferred_element_type=f32)
                    + bf4_ref[...])                                # [BB, 128]


# ------------------------------- wrapper (JAX) ----------------------------------

def _round_up(n, m):
    return (n + m - 1) // m * m


def _build_xr(x_hw, block_b):
    """x_hw [Bp,28,28] -> row-shifted flat input [nb*24*block_b, 140] with
    row ((blk*4+s)*6+q)*block_b + b and col kh*28+c = x[blk*block_b+b, 4q+s+kh, c]."""
    Bp = x_hw.shape[0]
    nb = Bp // block_b
    slabs = []
    for s in range(4):
        taps = [x_hw[:, s + kh: s + kh + 21: 4, :] for kh in range(5)]   # each [Bp, 6, 28]
        slabs.append(jnp.concatenate(taps, axis=-1))                     # [Bp, 6, 140]
    xr = jnp.stack(slabs, axis=1)                                        # [Bp, 4, 6, 140]
    xr = xr.reshape(nb, block_b, 4, 6, 140).transpose(0, 2, 3, 1, 4)     # [nb,4,6,BB,140]
    return xr.reshape(nb * 24 * block_b, 140).astype(jnp.bfloat16)


@functools.partial(jax.jit, static_argnames=("block_b",))
def digit_classifier_forward(x_nchw, packed, block_b=128):
    B = x_nchw.shape[0]
    bb = _round_up(min(block_b, _round_up(B, 16)), 16)   # images per grid step
    Bp = _round_up(B, bb)
    nb = Bp // bb

    x_hw = x_nchw[:, 0, :, :]
    if Bp != B:
        x_hw = jnp.pad(x_hw, ((0, Bp - B), (0, 0), (0, 0)))
    xr = _build_xr(x_hw, bb)

    (r1, b1r, r2, b2r, wf1, bf1, wf2, bf2, wf3, bf3, wf4, bf4) = packed

    grid_spec = pltpu.PrefetchScalarGridSpec(
        num_scalar_prefetch=0,
        grid=(nb,),
        in_specs=[
            pl.BlockSpec((24 * bb, 140), lambda i: (i, 0)),       # per-block input
            pl.BlockSpec((140, 512), lambda i: (0, 0)),           # weights: VMEM-resident
            pl.BlockSpec((1, 192), lambda i: (0, 0)),
            pl.BlockSpec((3, 192, 256), lambda i: (0, 0, 0)),
            pl.BlockSpec((1, 128), lambda i: (0, 0)),
            pl.BlockSpec((5, 128, 256), lambda i: (0, 0, 0)),
            pl.BlockSpec((1, 256), lambda i: (0, 0)),
            pl.BlockSpec((256, 128), lambda i: (0, 0)),
            pl.BlockSpec((1, 128), lambda i: (0, 0)),
            pl.BlockSpec((128, 64), lambda i: (0, 0)),
            pl.BlockSpec((1, 64), lambda i: (0, 0)),
            pl.BlockSpec((64, 128), lambda i: (0, 0)),
            pl.BlockSpec((1, 128), lambda i: (0, 0)),
        ],
        out_specs=pl.BlockSpec((bb, 128), lambda i: (i, 0)),
    )
    out = pl.pallas_call(
        _digit_classifier_kernel,
        out_shape=jax.ShapeDtypeStruct((Bp, 128), jnp.float32),
        grid_spec=grid_spec,
        compiler_params=pltpu.CompilerParams(
            dimension_semantics=("parallel",),        # shard image blocks across TCs
            vmem_limit_bytes=48 * 1024 * 1024),
    )(xr, r1, b1r, r2, b2r, wf1, bf1, wf2, bf2, wf3, bf3, wf4, bf4)
    return out[:B, :10]


# -------------------------- parameter preparation --------------------------------

def pack_params(params):
    """PyTorch-layout params -> kernel operands (run once, outside the hot forward)."""
    w_c1, b_c1 = params["conv1"]            # [16,1,5,5], [16]
    w_c2, b_c2 = params["conv2"]            # [5,16,3,3], [5]
    (w1, b1), (w2, b2), (w3, b3), (w4, b4) = params["dense"]
    bf16, f32 = jnp.bfloat16, jnp.float32

    # conv1 RHS: r1[kh*28 + c, dw*256 + pw*16 + c1] = W1[c1,0,kh, c - 2pw - dw] (masked)
    w1s = w_c1[:, 0]                                          # [16, 5, 5]
    kh = jnp.arange(5)[:, None, None, None]
    c = jnp.arange(28)[None, :, None, None]
    pw = jnp.arange(12)[None, None, :, None]
    o = jnp.arange(16)[None, None, None, :]
    blocks = []
    for dw in (0, 1):
        kw = c - 2 * pw - dw
        vals = w1s[o, kh, jnp.clip(kw, 0, 4)]                 # [5, 28, 12, 16]
        vals = jnp.where((kw >= 0) & (kw <= 4), vals, 0.0)
        blocks.append(jnp.pad(vals.reshape(140, 192), ((0, 0), (0, 64))))
    r1 = jnp.concatenate(blocks, axis=1).astype(bf16)         # [140, 512]
    b1r = jnp.tile(b_c1, (12,)).reshape(1, 192).astype(f32)

    # conv2 RHS per kh2: r2[kh2][pw*16 + c1, dw2*128 + ow*5 + c2]
    #                      = W2[c2, c1, kh2, pw - 2*ow - dw2] (masked)
    pw = jnp.arange(12)[:, None, None, None]
    c1i = jnp.arange(16)[None, :, None, None]
    ow = jnp.arange(5)[None, None, :, None]
    c2i = jnp.arange(5)[None, None, None, :]
    r2_list = []
    for kh2 in range(3):
        w2k = w_c2[:, :, kh2, :]                              # [5(c2), 16(c1), 3(kw)]
        per_dw = []
        for dw2 in (0, 1):
            kw = pw - 2 * ow - dw2
            vals = w2k[c2i, c1i, jnp.clip(kw, 0, 2)]          # [12, 16, 5, 5]
            vals = jnp.where((kw >= 0) & (kw <= 2), vals, 0.0)
            per_dw.append(jnp.pad(vals.reshape(192, 25), ((0, 0), (0, 103))))
        r2_list.append(jnp.concatenate(per_dw, axis=1))       # [192, 256]
    r2 = jnp.stack(r2_list, axis=0).astype(bf16)              # [3, 192, 256]
    b2r = jnp.pad(jnp.tile(b_c2, (5,)), (0, 103)).reshape(1, 128).astype(f32)

    # fc1: wf1[oh][ow*5 + c2, n] = w1[c2*25 + oh*5 + ow, n], K rows padded 25 -> 128
    w1r = jnp.transpose(w1.reshape(5, 5, 5, 256), (1, 2, 0, 3)).reshape(5, 25, 256)
    wf1 = jnp.pad(w1r, ((0, 0), (0, 103), (0, 0))).astype(bf16)     # [5, 128, 256]
    bf1 = b1.reshape(1, 256).astype(f32)
    wf2 = w2.astype(bf16)
    bf2 = b2.reshape(1, 128).astype(f32)
    wf3 = w3.astype(bf16)
    bf3 = b3.reshape(1, 64).astype(f32)
    # fc4: pad 10 -> 128 output lanes for a lane-dense store (sliced back in the wrapper)
    wf4 = jnp.zeros((64, 128), f32).at[:, :10].set(w4).astype(bf16)
    bf4 = jnp.zeros((1, 128), f32).at[:, :10].set(b4)

    return (r1, b1r, r2, b2r, wf1, bf1, wf2, bf2, wf3, bf3, wf4, bf4)


def init_params(key, image_size=28, num_classes=10):
    fl_s = ((image_size - 4) // 2 - 2) // 2
    fl_size = fl_s * fl_s * 5
    ks = jax.random.split(key, 12)

    def w(k, shape, fan_in):
        return jax.random.normal(k, shape, jnp.float32) / jnp.sqrt(fan_in)

    def b(k, n):
        return 0.01 * jax.random.normal(k, (1, n), jnp.float32)

    return {
        # conv weights in PyTorch OIHW layout, conv biases 1-D (like nn.Conv2d)
        "conv1": (w(ks[0], (16, 1, 5, 5), 25),
                  0.01 * jax.random.normal(ks[1], (16,), jnp.float32)),
        "conv2": (w(ks[2], (5, 16, 3, 3), 16 * 9),
                  0.01 * jax.random.normal(ks[3], (5,), jnp.float32)),
        # dense weights stored already transposed to [in, out]
        "dense": (
            (w(ks[4], (fl_size, 256), fl_size), b(ks[5], 256)),
            (w(ks[6], (256, 128), 256),         b(ks[7], 128)),
            (w(ks[8], (128, 64), 128),          b(ks[9], 64)),
            (w(ks[10], (64, num_classes), 64),  b(ks[11], num_classes)),
        ),
    }


def reference_forward(x_nchw, params):
    """Pure-JAX f32 reference mirroring the PyTorch module (eval mode)."""
    (w_c1, b_c1) = params["conv1"]
    (w_c2, b_c2) = params["conv2"]
    dn = ("NCHW", "OIHW", "NCHW")

    y = lax.conv_general_dilated(x_nchw, w_c1, (1, 1), "VALID", dimension_numbers=dn)
    y = jnp.maximum(y + b_c1.reshape(1, -1, 1, 1), 0.0)
    y = lax.reduce_window(y, -jnp.inf, lax.max, (1, 1, 2, 2), (1, 1, 2, 2), "VALID")
    y = lax.conv_general_dilated(y, w_c2, (1, 1), "VALID", dimension_numbers=dn)
    y = jnp.maximum(y + b_c2.reshape(1, -1, 1, 1), 0.0)
    y = lax.reduce_window(y, -jnp.inf, lax.max, (1, 1, 2, 2), (1, 1, 2, 2), "VALID")
    y = y.reshape(y.shape[0], -1)

    (w1, b1), (w2, b2), (w3, b3), (w4, b4) = params["dense"]
    y = jnp.maximum(y @ w1 + b1, 0.0)
    y = jnp.maximum(y @ w2 + b2, 0.0)
    y = jnp.maximum(y @ w3 + b3, 0.0)
    return y @ w4 + b4


# ------------------------------------ main ----------------------------------------

if __name__ == "__main__":
    key = jax.random.PRNGKey(0)
    k_x, k_p = jax.random.split(key)

    B, IMAGE_SIZE, NUM_CLASSES = 2, 28, 10
    x = jax.random.normal(k_x, (B, 1, IMAGE_SIZE, IMAGE_SIZE), jnp.float32)
    params = init_params(k_p, IMAGE_SIZE, NUM_CLASSES)
    packed = pack_params(params)

    out = jax.block_until_ready(digit_classifier_forward(x, packed))
    ref = jax.block_until_ready(reference_forward(x, params))

    assert out.shape == (B, NUM_CLASSES)
    # Kernel runs bf16 matmuls with f32 accumulation; compare loosely against f32 ref.
    assert jnp.allclose(out, ref, rtol=1e-1, atol=1e-1), (out, ref)

    print("KERNEL_OK")
</pallas_src>

<mosaic_0001>
module attributes {stable_mosaic.version = 11 : i64} {
  func.func @_digit_classifier_kernel(%arg0: i32, %arg1: memref<384x140xbf16, #tpu.memory_space<vmem>>, %arg2: memref<140x512xbf16, #tpu.memory_space<vmem>>, %arg3: memref<1x192xf32, #tpu.memory_space<vmem>>, %arg4: memref<3x192x256xbf16, #tpu.memory_space<vmem>>, %arg5: memref<1x128xf32, #tpu.memory_space<vmem>>, %arg6: memref<5x128x256xbf16, #tpu.memory_space<vmem>>, %arg7: memref<1x256xf32, #tpu.memory_space<vmem>>, %arg8: memref<256x128xbf16, #tpu.memory_space<vmem>>, %arg9: memref<1x128xf32, #tpu.memory_space<vmem>>, %arg10: memref<128x64xbf16, #tpu.memory_space<vmem>>, %arg11: memref<1x64xf32, #tpu.memory_space<vmem>>, %arg12: memref<64x128xbf16, #tpu.memory_space<vmem>>, %arg13: memref<1x128xf32, #tpu.memory_space<vmem>>, %arg14: memref<16x128xf32, #tpu.memory_space<vmem>>) attributes {dimension_semantics = [#tpu.dimension_semantics<parallel>], iteration_bounds = array<i64: 1>, scalar_prefetch = 0 : i64, scratch_operands = 0 : i64, tpu.core_type = #tpu.core_type<tc>, window_params = [{transform_indices = @transform_0, window_bounds = array<i64: 384, 140>}, {pipeline_mode = #tpu.pipeline_mode<synchronous>, transform_indices = @transform_1, window_bounds = array<i64: 140, 512>}, {pipeline_mode = #tpu.pipeline_mode<synchronous>, transform_indices = @transform_2, window_bounds = array<i64: 1, 192>}, {pipeline_mode = #tpu.pipeline_mode<synchronous>, transform_indices = @transform_3, window_bounds = array<i64: 3, 192, 256>}, {pipeline_mode = #tpu.pipeline_mode<synchronous>, transform_indices = @transform_4, window_bounds = array<i64: 1, 128>}, {pipeline_mode = #tpu.pipeline_mode<synchronous>, transform_indices = @transform_5, window_bounds = array<i64: 5, 128, 256>}, {pipeline_mode = #tpu.pipeline_mode<synchronous>, transform_indices = @transform_6, window_bounds = array<i64: 1, 256>}, {pipeline_mode = #tpu.pipeline_mode<synchronous>, transform_indices = @transform_7, window_bounds = array<i64: 256, 128>}, {pipeline_mode = #tpu.pipeline_mode<synchronous>, transform_indices = @transform_8, window_bounds = array<i64: 1, 128>}, {pipeline_mode = #tpu.pipeline_mode<synchronous>, transform_indices = @transform_9, window_bounds = array<i64: 128, 64>}, {pipeline_mode = #tpu.pipeline_mode<synchronous>, transform_indices = @transform_10, window_bounds = array<i64: 1, 64>}, {pipeline_mode = #tpu.pipeline_mode<synchronous>, transform_indices = @transform_11, window_bounds = array<i64: 64, 128>}, {pipeline_mode = #tpu.pipeline_mode<synchronous>, transform_indices = @transform_12, window_bounds = array<i64: 1, 128>}, {transform_indices = @transform_13, window_bounds = array<i64: 16, 128>}]} {
    %c0 = arith.constant 0 : index
    %c0_0 = arith.constant 0 : index
    %0 = vector.load %arg1[%c0, %c0_0] : memref<384x140xbf16, #tpu.memory_space<vmem>>, vector<384x140xbf16>
    %c0_1 = arith.constant 0 : index
    %c0_2 = arith.constant 0 : index
    %1 = vector.load %arg2[%c0_1, %c0_2] : memref<140x512xbf16, #tpu.memory_space<vmem>>, vector<140x512xbf16>
    %cst = arith.constant dense<0.000000e+00> : vector<384x512xf32>
    %2 = tpu.matmul %0, %1, %cst {dimension_numbers = #tpu.dot_dimension_numbers<[1], [0], [0], [1], [0, 0, 1, 1], [], []>} : vector<384x140xbf16>, vector<140x512xbf16>, vector<384x512xf32> -> vector<384x512xf32>
    %3 = vector.extract_strided_slice %2 {offsets = [0, 0], sizes = [96, 512], strides = [1, 1]} : vector<384x512xf32> to vector<96x512xf32>
    %4 = vector.extract_strided_slice %2 {offsets = [96, 0], sizes = [96, 512], strides = [1, 1]} : vector<384x512xf32> to vector<96x512xf32>
    %5 = arith.maximumf %3, %4 : vector<96x512xf32>
    %6 = vector.extract_strided_slice %2 {offsets = [192, 0], sizes = [96, 512], strides = [1, 1]} : vector<384x512xf32> to vector<96x512xf32>
    %7 = vector.extract_strided_slice %2 {offsets = [288, 0], sizes = [96, 512], strides = [1, 1]} : vector<384x512xf32> to vector<96x512xf32>
    %8 = arith.maximumf %6, %7 : vector<96x512xf32>
    %9 = vector.extract_strided_slice %5 {offsets = [0, 0], sizes = [96, 192], strides = [1, 1]} : vector<96x512xf32> to vector<96x192xf32>
    %10 = vector.extract_strided_slice %5 {offsets = [0, 256], sizes = [96, 192], strides = [1, 1]} : vector<96x512xf32> to vector<96x192xf32>
    %11 = arith.maximumf %9, %10 : vector<96x192xf32>
    %c0_3 = arith.constant 0 : index
    %c0_4 = arith.constant 0 : index
    %12 = vector.load %arg3[%c0_3, %c0_4] : memref<1x192xf32, #tpu.memory_space<vmem>>, vector<1x192xf32>
    %13 = vector.broadcast %12 : vector<1x192xf32> to vector<96x192xf32>
    %14 = arith.addf %11, %13 : vector<96x192xf32>
    %cst_5 = arith.constant 0.000000e+00 : f32
    %15 = vector.broadcast %cst_5 : f32 to vector<96x192xf32>
    %16 = arith.maximumf %14, %15 : vector<96x192xf32>
    %17 = vector.extract_strided_slice %8 {offsets = [0, 0], sizes = [96, 192], strides = [1, 1]} : vector<96x512xf32> to vector<96x192xf32>
    %18 = vector.extract_strided_slice %8 {offsets = [0, 256], sizes = [96, 192], strides = [1, 1]} : vector<96x512xf32> to vector<96x192xf32>
    %19 = arith.maximumf %17, %18 : vector<96x192xf32>
    %c0_6 = arith.constant 0 : index
    %c0_7 = arith.constant 0 : index
    %20 = vector.load %arg3[%c0_6, %c0_7] : memref<1x192xf32, #tpu.memory_space<vmem>>, vector<1x192xf32>
    %21 = vector.broadcast %20 : vector<1x192xf32> to vector<96x192xf32>
    %22 = arith.addf %19, %21 : vector<96x192xf32>
    %cst_8 = arith.constant 0.000000e+00 : f32
    %23 = vector.broadcast %cst_8 : f32 to vector<96x192xf32>
    %24 = arith.maximumf %22, %23 : vector<96x192xf32>
    %25 = arith.truncf %16 : vector<96x192xf32> to vector<96x192xbf16>
    %26 = arith.truncf %24 : vector<96x192xf32> to vector<96x192xbf16>
    %27 = vector.extract_strided_slice %25 {offsets = [0, 0], sizes = [80, 192], strides = [1, 1]} : vector<96x192xbf16> to vector<80x192xbf16>
    %28 = vector.extract_strided_slice %26 {offsets = [0, 0], sizes = [80, 192], strides = [1, 1]} : vector<96x192xbf16> to vector<80x192xbf16>
    %29 = vector.extract_strided_slice %25 {offsets = [16, 0], sizes = [80, 192], strides = [1, 1]} : vector<96x192xbf16> to vector<80x192xbf16>
    %30 = vector.extract_strided_slice %26 {offsets = [16, 0], sizes = [80, 192], strides = [1, 1]} : vector<96x192xbf16> to vector<80x192xbf16>
    %c0_9 = arith.constant 0 : index
    %c0_10 = arith.constant 0 : index
    %c0_11 = arith.constant 0 : index
    %31 = vector.load %arg4[%c0_9, %c0_10, %c0_11] : memref<3x192x256xbf16, #tpu.memory_space<vmem>>, vector<1x192x256xbf16>
    %32 = vector.shape_cast %31 : vector<1x192x256xbf16> to vector<192x256xbf16>
    %cst_12 = arith.constant dense<0.000000e+00> : vector<80x256xf32>
    %33 = tpu.matmul %27, %32, %cst_12 {dimension_numbers = #tpu.dot_dimension_numbers<[1], [0], [0], [1], [0, 0, 1, 1], [], []>} : vector<80x192xbf16>, vector<192x256xbf16>, vector<80x256xf32> -> vector<80x256xf32>
    %c1 = arith.constant 1 : index
    %c0_13 = arith.constant 0 : index
    %c0_14 = arith.constant 0 : index
    %34 = vector.load %arg4[%c1, %c0_13, %c0_14] : memref<3x192x256xbf16, #tpu.memory_space<vmem>>, vector<1x192x256xbf16>
    %35 = vector.shape_cast %34 : vector<1x192x256xbf16> to vector<192x256xbf16>
    %cst_15 = arith.constant dense<0.000000e+00> : vector<80x256xf32>
    %36 = tpu.matmul %28, %35, %cst_15 {dimension_numbers = #tpu.dot_dimension_numbers<[1], [0], [0], [1], [0, 0, 1, 1], [], []>} : vector<80x192xbf16>, vector<192x256xbf16>, vector<80x256xf32> -> vector<80x256xf32>
    %37 = arith.addf %33, %36 : vector<80x256xf32>
    %c2 = arith.constant 2 : index
    %c0_16 = arith.constant 0 : index
    %c0_17 = arith.constant 0 : index
    %38 = vector.load %arg4[%c2, %c0_16, %c0_17] : memref<3x192x256xbf16, #tpu.memory_space<vmem>>, vector<1x192x256xbf16>
    %39 = vector.shape_cast %38 : vector<1x192x256xbf16> to vector<192x256xbf16>
    %cst_18 = arith.constant dense<0.000000e+00> : vector<80x256xf32>
    %40 = tpu.matmul %29, %39, %cst_18 {dimension_numbers = #tpu.dot_dimension_numbers<[1], [0], [0], [1], [0, 0, 1, 1], [], []>} : vector<80x192xbf16>, vector<192x256xbf16>, vector<80x256xf32> -> vector<80x256xf32>
    %41 = arith.addf %37, %40 : vector<80x256xf32>
    %c0_19 = arith.constant 0 : index
    %c0_20 = arith.constant 0 : index
    %c0_21 = arith.constant 0 : index
    %42 = vector.load %arg4[%c0_19, %c0_20, %c0_21] : memref<3x192x256xbf16, #tpu.memory_space<vmem>>, vector<1x192x256xbf16>
    %43 = vector.shape_cast %42 : vector<1x192x256xbf16> to vector<192x256xbf16>
    %cst_22 = arith.constant dense<0.000000e+00> : vector<80x256xf32>
    %44 = tpu.matmul %28, %43, %cst_22 {dimension_numbers = #tpu.dot_dimension_numbers<[1], [0], [0], [1], [0, 0, 1, 1], [], []>} : vector<80x192xbf16>, vector<192x256xbf16>, vector<80x256xf32> -> vector<80x256xf32>
    %c1_23 = arith.constant 1 : index
    %c0_24 = arith.constant 0 : index
    %c0_25 = arith.constant 0 : index
    %45 = vector.load %arg4[%c1_23, %c0_24, %c0_25] : memref<3x192x256xbf16, #tpu.memory_space<vmem>>, vector<1x192x256xbf16>
    %46 = vector.shape_cast %45 : vector<1x192x256xbf16> to vector<192x256xbf16>
    %cst_26 = arith.constant dense<0.000000e+00> : vector<80x256xf32>
    %47 = tpu.matmul %29, %46, %cst_26 {dimension_numbers = #tpu.dot_dimension_numbers<[1], [0], [0], [1], [0, 0, 1, 1], [], []>} : vector<80x192xbf16>, vector<192x256xbf16>, vector<80x256xf32> -> vector<80x256xf32>
    %48 = arith.addf %44, %47 : vector<80x256xf32>
    %c2_27 = arith.constant 2 : index
    %c0_28 = arith.constant 0 : index
    %c0_29 = arith.constant 0 : index
    %49 = vector.load %arg4[%c2_27, %c0_28, %c0_29] : memref<3x192x256xbf16, #tpu.memory_space<vmem>>, vector<1x192x256xbf16>
    %50 = vector.shape_cast %49 : vector<1x192x256xbf16> to vector<192x256xbf16>
    %cst_30 = arith.constant dense<0.000000e+00> : vector<80x256xf32>
    %51 = tpu.matmul %30, %50, %cst_30 {dimension_numbers = #tpu.dot_dimension_numbers<[1], [0], [0], [1], [0, 0, 1, 1], [], []>} : vector<80x192xbf16>, vector<192x256xbf16>, vector<80x256xf32> -> vector<80x256xf32>
    %52 = arith.addf %48, %51 : vector<80x256xf32>
    %53 = arith.maximumf %41, %52 : vector<80x256xf32>
    %54 = vector.extract_strided_slice %53 {offsets = [0, 0], sizes = [80, 128], strides = [1, 1]} : vector<80x256xf32> to vector<80x128xf32>
    %55 = vector.extract_strided_slice %53 {offsets = [0, 128], sizes = [80, 128], strides = [1, 1]} : vector<80x256xf32> to vector<80x128xf32>
    %56 = arith.maximumf %54, %55 : vector<80x128xf32>
    %c0_31 = arith.constant 0 : index
    %c0_32 = arith.constant 0 : index
    %57 = vector.load %arg5[%c0_31, %c0_32] : memref<1x128xf32, #tpu.memory_space<vmem>>, vector<1x128xf32>
    %58 = vector.broadcast %57 : vector<1x128xf32> to vector<80x128xf32>
    %59 = arith.addf %56, %58 : vector<80x128xf32>
    %cst_33 = arith.constant 0.000000e+00 : f32
    %60 = vector.broadcast %cst_33 : f32 to vector<80x128xf32>
    %61 = arith.maximumf %59, %60 : vector<80x128xf32>
    %62 = arith.truncf %61 : vector<80x128xf32> to vector<80x128xbf16>
    %63 = vector.extract_strided_slice %62 {offsets = [0, 0], sizes = [16, 128], strides = [1, 1]} : vector<80x128xbf16> to vector<16x128xbf16>
    %c0_34 = arith.constant 0 : index
    %c0_35 = arith.constant 0 : index
    %c0_36 = arith.constant 0 : index
    %64 = vector.load %arg6[%c0_34, %c0_35, %c0_36] : memref<5x128x256xbf16, #tpu.memory_space<vmem>>, vector<1x128x256xbf16>
    %65 = vector.shape_cast %64 : vector<1x128x256xbf16> to vector<128x256xbf16>
    %cst_37 = arith.constant dense<0.000000e+00> : vector<16x256xf32>
    %66 = tpu.matmul %63, %65, %cst_37 {dimension_numbers = #tpu.dot_dimension_numbers<[1], [0], [0], [1], [0, 0, 1, 1], [], []>} : vector<16x128xbf16>, vector<128x256xbf16>, vector<16x256xf32> -> vector<16x256xf32>
    %67 = vector.extract_strided_slice %62 {offsets = [16, 0], sizes = [16, 128], strides = [1, 1]} : vector<80x128xbf16> to vector<16x128xbf16>
    %c1_38 = arith.constant 1 : index
    %c0_39 = arith.constant 0 : index
    %c0_40 = arith.constant 0 : index
    %68 = vector.load %arg6[%c1_38, %c0_39, %c0_40] : memref<5x128x256xbf16, #tpu.memory_space<vmem>>, vector<1x128x256xbf16>
    %69 = vector.shape_cast %68 : vector<1x128x256xbf16> to vector<128x256xbf16>
    %cst_41 = arith.constant dense<0.000000e+00> : vector<16x256xf32>
    %70 = tpu.matmul %67, %69, %cst_41 {dimension_numbers = #tpu.dot_dimension_numbers<[1], [0], [0], [1], [0, 0, 1, 1], [], []>} : vector<16x128xbf16>, vector<128x256xbf16>, vector<16x256xf32> -> vector<16x256xf32>
    %71 = arith.addf %66, %70 : vector<16x256xf32>
    %72 = vector.extract_strided_slice %62 {offsets = [32, 0], sizes = [16, 128], strides = [1, 1]} : vector<80x128xbf16> to vector<16x128xbf16>
    %c2_42 = arith.constant 2 : index
    %c0_43 = arith.constant 0 : index
    %c0_44 = arith.constant 0 : index
    %73 = vector.load %arg6[%c2_42, %c0_43, %c0_44] : memref<5x128x256xbf16, #tpu.memory_space<vmem>>, vector<1x128x256xbf16>
    %74 = vector.shape_cast %73 : vector<1x128x256xbf16> to vector<128x256xbf16>
    %cst_45 = arith.constant dense<0.000000e+00> : vector<16x256xf32>
    %75 = tpu.matmul %72, %74, %cst_45 {dimension_numbers = #tpu.dot_dimension_numbers<[1], [0], [0], [1], [0, 0, 1, 1], [], []>} : vector<16x128xbf16>, vector<128x256xbf16>, vector<16x256xf32> -> vector<16x256xf32>
    %76 = arith.addf %71, %75 : vector<16x256xf32>
    %77 = vector.extract_strided_slice %62 {offsets = [48, 0], sizes = [16, 128], strides = [1, 1]} : vector<80x128xbf16> to vector<16x128xbf16>
    %c3 = arith.constant 3 : index
    %c0_46 = arith.constant 0 : index
    %c0_47 = arith.constant 0 : index
    %78 = vector.load %arg6[%c3, %c0_46, %c0_47] : memref<5x128x256xbf16, #tpu.memory_space<vmem>>, vector<1x128x256xbf16>
    %79 = vector.shape_cast %78 : vector<1x128x256xbf16> to vector<128x256xbf16>
    %cst_48 = arith.constant dense<0.000000e+00> : vector<16x256xf32>
    %80 = tpu.matmul %77, %79, %cst_48 {dimension_numbers = #tpu.dot_dimension_numbers<[1], [0], [0], [1], [0, 0, 1, 1], [], []>} : vector<16x128xbf16>, vector<128x256xbf16>, vector<16x256xf32> -> vector<16x256xf32>
    %81 = arith.addf %76, %80 : vector<16x256xf32>
    %82 = vector.extract_strided_slice %62 {offsets = [64, 0], sizes = [16, 128], strides = [1, 1]} : vector<80x128xbf16> to vector<16x128xbf16>
    %c4 = arith.constant 4 : index
    %c0_49 = arith.constant 0 : index
    %c0_50 = arith.constant 0 : index
    %83 = vector.load %arg6[%c4, %c0_49, %c0_50] : memref<5x128x256xbf16, #tpu.memory_space<vmem>>, vector<1x128x256xbf16>
    %84 = vector.shape_cast %83 : vector<1x128x256xbf16> to vector<128x256xbf16>
    %cst_51 = arith.constant dense<0.000000e+00> : vector<16x256xf32>
    %85 = tpu.matmul %82, %84, %cst_51 {dimension_numbers = #tpu.dot_dimension_numbers<[1], [0], [0], [1], [0, 0, 1, 1], [], []>} : vector<16x128xbf16>, vector<128x256xbf16>, vector<16x256xf32> -> vector<16x256xf32>
    %86 = arith.addf %81, %85 : vector<16x256xf32>
    %c0_52 = arith.constant 0 : index
    %c0_53 = arith.constant 0 : index
    %87 = vector.load %arg7[%c0_52, %c0_53] : memref<1x256xf32, #tpu.memory_space<vmem>>, vector<1x256xf32>
    %88 = vector.broadcast %87 : vector<1x256xf32> to vector<16x256xf32>
    %89 = arith.addf %86, %88 : vector<16x256xf32>
    %cst_54 = arith.constant 0.000000e+00 : f32
    %90 = vector.broadcast %cst_54 : f32 to vector<16x256xf32>
    %91 = arith.maximumf %89, %90 : vector<16x256xf32>
    %92 = arith.truncf %91 : vector<16x256xf32> to vector<16x256xbf16>
    %c0_55 = arith.constant 0 : index
    %c0_56 = arith.constant 0 : index
    %93 = vector.load %arg8[%c0_55, %c0_56] : memref<256x128xbf16, #tpu.memory_space<vmem>>, vector<256x128xbf16>
    %cst_57 = arith.constant dense<0.000000e+00> : vector<16x128xf32>
    %94 = tpu.matmul %92, %93, %cst_57 {dimension_numbers = #tpu.dot_dimension_numbers<[1], [0], [0], [1], [0, 0, 1, 1], [], []>} : vector<16x256xbf16>, vector<256x128xbf16>, vector<16x128xf32> -> vector<16x128xf32>
    %c0_58 = arith.constant 0 : index
    %c0_59 = arith.constant 0 : index
    %95 = vector.load %arg9[%c0_58, %c0_59] : memref<1x128xf32, #tpu.memory_space<vmem>>, vector<1x128xf32>
    %96 = vector.broadcast %95 : vector<1x128xf32> to vector<16x128xf32>
    %97 = arith.addf %94, %96 : vector<16x128xf32>
    %cst_60 = arith.constant 0.000000e+00 : f32
    %98 = vector.broadcast %cst_60 : f32 to vector<16x128xf32>
    %99 = arith.maximumf %97, %98 : vector<16x128xf32>
    %100 = arith.truncf %99 : vector<16x128xf32> to vector<16x128xbf16>
    %c0_61 = arith.constant 0 : index
    %c0_62 = arith.constant 0 : index
    %101 = vector.load %arg10[%c0_61, %c0_62] : memref<128x64xbf16, #tpu.memory_space<vmem>>, vector<128x64xbf16>
    %cst_63 = arith.constant dense<0.000000e+00> : vector<16x64xf32>
    %102 = tpu.matmul %100, %101, %cst_63 {dimension_numbers = #tpu.dot_dimension_numbers<[1], [0], [0], [1], [0, 0, 1, 1], [], []>} : vector<16x128xbf16>, vector<128x64xbf16>, vector<16x64xf32> -> vector<16x64xf32>
    %c0_64 = arith.constant 0 : index
    %c0_65 = arith.constant 0 : index
    %103 = vector.load %arg11[%c0_64, %c0_65] : memref<1x64xf32, #tpu.memory_space<vmem>>, vector<1x64xf32>
    %104 = vector.broadcast %103 : vector<1x64xf32> to vector<16x64xf32>
    %105 = arith.addf %102, %104 : vector<16x64xf32>
    %cst_66 = arith.constant 0.000000e+00 : f32
    %106 = vector.broadcast %cst_66 : f32 to vector<16x64xf32>
    %107 = arith.maximumf %105, %106 : vector<16x64xf32>
    %108 = arith.truncf %107 : vector<16x64xf32> to vector<16x64xbf16>
    %c0_67 = arith.constant 0 : index
    %c0_68 = arith.constant 0 : index
    %109 = vector.load %arg12[%c0_67, %c0_68] : memref<64x128xbf16, #tpu.memory_space<vmem>>, vector<64x128xbf16>
    %cst_69 = arith.constant dense<0.000000e+00> : vector<16x128xf32>
    %110 = tpu.matmul %108, %109, %cst_69 {dimension_numbers = #tpu.dot_dimension_numbers<[1], [0], [0], [1], [0, 0, 1, 1], [], []>} : vector<16x64xbf16>, vector<64x128xbf16>, vector<16x128xf32> -> vector<16x128xf32>
    %c0_70 = arith.constant 0 : index
    %c0_71 = arith.constant 0 : index
    %111 = vector.load %arg13[%c0_70, %c0_71] : memref<1x128xf32, #tpu.memory_space<vmem>>, vector<1x128xf32>
    %112 = vector.broadcast %111 : vector<1x128xf32> to vector<16x128xf32>
    %113 = arith.addf %110, %112 : vector<16x128xf32>
    %c0_72 = arith.constant 0 : index
    %c0_73 = arith.constant 0 : index
    %114 = vector.load %arg14[%c0_72, %c0_73] : memref<16x128xf32, #tpu.memory_space<vmem>>, vector<16x128xf32>
    tpu.vector_store %arg14[%c0_72, %c0_73], %113 {strides = array<i32>} : memref<16x128xf32, #tpu.memory_space<vmem>>, vector<16x128xf32>,
    return
  }
  func.func @transform_0(%arg0: i32) -> (i32, i32) {
    %c0_i32 = arith.constant 0 : i32
    %c0_i32_0 = arith.constant 0 : i32
    return %arg0, %c0_i32 : i32, i32
  }
  func.func @transform_1(%arg0: i32) -> (i32, i32) {
    %c0_i32 = arith.constant 0 : i32
    %c0_i32_0 = arith.constant 0 : i32
    %c0_i32_1 = arith.constant 0 : i32
    return %c0_i32, %c0_i32_0 : i32, i32
  }
  func.func @transform_2(%arg0: i32) -> (i32, i32) {
    %c0_i32 = arith.constant 0 : i32
    %c0_i32_0 = arith.constant 0 : i32
    %c0_i32_1 = arith.constant 0 : i32
    return %c0_i32, %c0_i32_0 : i32, i32
  }
  func.func @transform_3(%arg0: i32) -> (i32, i32, i32) {
    %c0_i32 = arith.constant 0 : i32
    %c0_i32_0 = arith.constant 0 : i32
    %c0_i32_1 = arith.constant 0 : i32
    %c0_i32_2 = arith.constant 0 : i32
    return %c0_i32, %c0_i32_0, %c0_i32_1 : i32, i32, i32
  }
  func.func @transform_4(%arg0: i32) -> (i32, i32) {
    %c0_i32 = arith.constant 0 : i32
    %c0_i32_0 = arith.constant 0 : i32
    %c0_i32_1 = arith.constant 0 : i32
    return %c0_i32, %c0_i32_0 : i32, i32
  }
  func.func @transform_5(%arg0: i32) -> (i32, i32, i32) {
    %c0_i32 = arith.constant 0 : i32
    %c0_i32_0 = arith.constant 0 : i32
    %c0_i32_1 = arith.constant 0 : i32
    %c0_i32_2 = arith.constant 0 : i32
    return %c0_i32, %c0_i32_0, %c0_i32_1 : i32, i32, i32
  }
  func.func @transform_6(%arg0: i32) -> (i32, i32) {
    %c0_i32 = arith.constant 0 : i32
    %c0_i32_0 = arith.constant 0 : i32
    %c0_i32_1 = arith.constant 0 : i32
    return %c0_i32, %c0_i32_0 : i32, i32
  }
  func.func @transform_7(%arg0: i32) -> (i32, i32) {
    %c0_i32 = arith.constant 0 : i32
    %c0_i32_0 = arith.constant 0 : i32
    %c0_i32_1 = arith.constant 0 : i32
    return %c0_i32, %c0_i32_0 : i32, i32
  }
  func.func @transform_8(%arg0: i32) -> (i32, i32) {
    %c0_i32 = arith.constant 0 : i32
    %c0_i32_0 = arith.constant 0 : i32
    %c0_i32_1 = arith.constant 0 : i32
    return %c0_i32, %c0_i32_0 : i32, i32
  }
  func.func @transform_9(%arg0: i32) -> (i32, i32) {
    %c0_i32 = arith.constant 0 : i32
    %c0_i32_0 = arith.constant 0 : i32
    %c0_i32_1 = arith.constant 0 : i32
    return %c0_i32, %c0_i32_0 : i32, i32
  }
  func.func @transform_10(%arg0: i32) -> (i32, i32) {
    %c0_i32 = arith.constant 0 : i32
    %c0_i32_0 = arith.constant 0 : i32
    %c0_i32_1 = arith.constant 0 : i32
    return %c0_i32, %c0_i32_0 : i32, i32
  }
  func.func @transform_11(%arg0: i32) -> (i32, i32) {
    %c0_i32 = arith.constant 0 : i32
    %c0_i32_0 = arith.constant 0 : i32
    %c0_i32_1 = arith.constant 0 : i32
    return %c0_i32, %c0_i32_0 : i32, i32
  }
  func.func @transform_12(%arg0: i32) -> (i32, i32) {
    %c0_i32 = arith.constant 0 : i32
    %c0_i32_0 = arith.constant 0 : i32
    %c0_i32_1 = arith.constant 0 : i32
    return %c0_i32, %c0_i32_0 : i32, i32
  }
  func.func @transform_13(%arg0: i32) -> (i32, i32) {
    %c0_i32 = arith.constant 0 : i32
    %c0_i32_0 = arith.constant 0 : i32
    return %arg0, %c0_i32 : i32, i32
  }
}

</mosaic_0001>

<llo_original>
// kernel: digit_classifier_forward.1
$region0: #{digit_classifier_forward.1}
  #allocation0 [shape = 'u32[]', space=smem, size = 0x4, offset = 0x4, fixed_abs, tag = 'smem constant byte address 0x4 - core index']
  #allocation1 [shape = 'u32[144,128]{1,0:T(1,128)}', space=vmem, size = 0x12000, scoped, tag = 'internal scratch']
  %s0 = inlined_call_operand.vmem [shape: bf16[384,140], index: 0, kind: input, shape index: {}]
  %s1 = inlined_call_operand.vmem [shape: bf16[140,512], index: 1, kind: input, shape index: {}]
  %s2 = inlined_call_operand.vmem [shape: f32[1,192], index: 2, kind: input, shape index: {}]
  %s3 = inlined_call_operand.vmem [shape: bf16[3,192,256], index: 3, kind: input, shape index: {}]
  %s4 = inlined_call_operand.vmem [shape: f32[1,128], index: 4, kind: input, shape index: {}]
  %s5 = inlined_call_operand.vmem [shape: bf16[5,128,256], index: 5, kind: input, shape index: {}]
  %s6 = inlined_call_operand.vmem [shape: f32[1,256], index: 6, kind: input, shape index: {}]
  %s7 = inlined_call_operand.vmem [shape: bf16[256,128], index: 7, kind: input, shape index: {}]
  %s8 = inlined_call_operand.vmem [shape: f32[1,128], index: 8, kind: input, shape index: {}]
  %s9 = inlined_call_operand.vmem [shape: bf16[128,64], index: 9, kind: input, shape index: {}]
  %s10 = inlined_call_operand.vmem [shape: f32[1,64], index: 10, kind: input, shape index: {}]
  %s11 = inlined_call_operand.vmem [shape: bf16[64,128], index: 11, kind: input, shape index: {}]
  %s12 = inlined_call_operand.vmem [shape: f32[1,128], index: 12, kind: input, shape index: {}]
  %s13 = inlined_call_operand.vmem [shape: f32[16,128], index: 13, kind: output, shape index: {}]
  %s14 = sld [smem:[#allocation0]]
  $region62: #{digit_classifier_forward.1} parent=0
    _
  %s16 = ssub.s32 1, %s14
  %s17 = scalar_select 0, %s16, %s14
  // Predicated region
  $region2: #{digit_classifier_forward.1} parent=0 // pred_check
    _
  $region3: #{digit_classifier_forward.1} parent=0 // pred_check_branch
    %19 = sbr.rel (0) target = $region5
  $region4: #{digit_classifier_forward.1} parent=0 // pred_region
    _
  $region5: #{digit_classifier_forward.1} parent=0 // pred_fallthru
    _
  // Predicated region
  $region6: #{digit_classifier_forward.1} parent=0 // pred_check
    _
  $region7: #{digit_classifier_forward.1} parent=0 // pred_check_branch
    %21 = sbr.rel (0) target = $region9
  $region8: #{digit_classifier_forward.1} parent=0 // pred_region
    _
  $region9: #{digit_classifier_forward.1} parent=0 // pred_fallthru
    _
  // Predicated region
  $region10: #{digit_classifier_forward.1} parent=0 // pred_check
    _
  $region11: #{digit_classifier_forward.1} parent=0 // pred_check_branch
    %23 = sbr.rel (0) target = $region13
  $region12: #{digit_classifier_forward.1} parent=0 // pred_region
    _
  $region13: #{digit_classifier_forward.1} parent=0 // pred_fallthru
    _
  // Predicated region
  $region14: #{digit_classifier_forward.1} parent=0 // pred_check
    _
  $region15: #{digit_classifier_forward.1} parent=0 // pred_check_branch
    %25 = sbr.rel (0) target = $region17
  $region16: #{digit_classifier_forward.1} parent=0 // pred_region
    _
  $region17: #{digit_classifier_forward.1} parent=0 // pred_fallthru
    _
  // Predicated region
  $region18: #{digit_classifier_forward.1} parent=0 // pred_check
    _
  $region19: #{digit_classifier_forward.1} parent=0 // pred_check_branch
    %27 = sbr.rel (0) target = $region21
  $region20: #{digit_classifier_forward.1} parent=0 // pred_region
    _
  $region21: #{digit_classifier_forward.1} parent=0 // pred_fallthru
    _
  // Predicated region
  $region22: #{digit_classifier_forward.1} parent=0 // pred_check
    _
  $region23: #{digit_classifier_forward.1} parent=0 // pred_check_branch
    %29 = sbr.rel (0) target = $region25
  $region24: #{digit_classifier_forward.1} parent=0 // pred_region
    _
  $region25: #{digit_classifier_forward.1} parent=0 // pred_fallthru
    _
  // Predicated region
  $region26: #{digit_classifier_forward.1} parent=0 // pred_check
    _
  $region27: #{digit_classifier_forward.1} parent=0 // pred_check_branch
    %31 = sbr.rel (0) target = $region29
  $region28: #{digit_classifier_forward.1} parent=0 // pred_region
    _
  $region29: #{digit_classifier_forward.1} parent=0 // pred_fallthru
    _
  // Predicated region
  $region30: #{digit_classifier_forward.1} parent=0 // pred_check
    _
  $region31: #{digit_classifier_forward.1} parent=0 // pred_check_branch
    %33 = sbr.rel (0) target = $region33
  $region32: #{digit_classifier_forward.1} parent=0 // pred_region
    _
  $region33: #{digit_classifier_forward.1} parent=0 // pred_fallthru
    _
  // Predicated region
  $region34: #{digit_classifier_forward.1} parent=0 // pred_check
    _
  $region35: #{digit_classifier_forward.1} parent=0 // pred_check_branch
    %35 = sbr.rel (0) target = $region37
  $region36: #{digit_classifier_forward.1} parent=0 // pred_region
    _
  $region37: #{digit_classifier_forward.1} parent=0 // pred_fallthru
    _
  // Predicated region
  $region38: #{digit_classifier_forward.1} parent=0 // pred_check
    _
  $region39: #{digit_classifier_forward.1} parent=0 // pred_check_branch
    %37 = sbr.rel (0) target = $region41
  $region40: #{digit_classifier_forward.1} parent=0 // pred_region
    _
  $region41: #{digit_classifier_forward.1} parent=0 // pred_fallthru
    _
  // Predicated region
  $region42: #{digit_classifier_forward.1} parent=0 // pred_check
    _
  $region43: #{digit_classifier_forward.1} parent=0 // pred_check_branch
    %39 = sbr.rel (0) target = $region45
  $region44: #{digit_classifier_forward.1} parent=0 // pred_region
    _
  $region45: #{digit_classifier_forward.1} parent=0 // pred_fallthru
    _
  // Predicated region
  $region46: #{digit_classifier_forward.1} parent=0 // pred_check
    _
  $region47: #{digit_classifier_forward.1} parent=0 // pred_check_branch
    %41 = sbr.rel (0) target = $region49
  $region48: #{digit_classifier_forward.1} parent=0 // pred_region
    _
  $region49: #{digit_classifier_forward.1} parent=0 // pred_fallthru
    _
  // Predicated region
  $region50: #{digit_classifier_forward.1} parent=0 // pred_check
    _
  $region51: #{digit_classifier_forward.1} parent=0 // pred_check_branch
    %43 = sbr.rel (0) target = $region53
  $region52: #{digit_classifier_forward.1} parent=0 // pred_region
    _
  $region53: #{digit_classifier_forward.1} parent=0 // pred_fallthru
    _
  %v45 = vld [vmem:[%s0] sm:$0xff]
  %v46 = vld [vmem:[%s0 + $0x8] sm:$0xff]
  %v47 = vld [vmem:[%s0 + $0x10] sm:$0xff]
  %v48 = vld [vmem:[%s0 + $0x18] sm:$0xff]
  %v49 = vld [vmem:[%s0 + $0x20] sm:$0xff]
  %v50 = vld [vmem:[%s0 + $0x28] sm:$0xff]
  %v51 = vld [vmem:[%s0 + $0x30] sm:$0xff]
  %v52 = vld [vmem:[%s0 + $0x38] sm:$0xff]
  %v53 = vld [vmem:[%s0 + $0x40] sm:$0xff]
  %v54 = vld [vmem:[%s0 + $0x48] sm:$0xff]
  %v55 = vld [vmem:[%s0 + $0x50] sm:$0xff]
  %v56 = vld [vmem:[%s0 + $0x58] sm:$0xff]
  %v57 = vld [vmem:[%s0 + $0x60] sm:$0xff]
  %v58 = vld [vmem:[%s0 + $0x68] sm:$0xff]
  %v59 = vld [vmem:[%s0 + $0x70] sm:$0xff]
  %v60 = vld [vmem:[%s0 + $0x78] sm:$0xff]
  %v61 = vld [vmem:[%s0 + $0x80] sm:$0xff]
  %v62 = vld [vmem:[%s0 + $0x88] sm:$0xff]
  %v63 = vld [vmem:[%s0 + $0x90] sm:$0xff]
  %v64 = vld [vmem:[%s0 + $0x98] sm:$0xff]
  %v65 = vld [vmem:[%s0 + $0xa0] sm:$0xff]
  %v66 = vld [vmem:[%s0 + $0xa8] sm:$0xff]
  %v67 = vld [vmem:[%s0 + $0xb0] sm:$0xff]
  %v68 = vld [vmem:[%s0 + $0xb8] sm:$0xff]
  %v69 = vld [vmem:[%s0 + $0xc0] sm:$0xff]
  %v70 = vld [vmem:[%s0 + $0xc8] sm:$0xff]
  %v71 = vld [vmem:[%s0 + $0xd0] sm:$0xff]
  %v72 = vld [vmem:[%s0 + $0xd8] sm:$0xff]
  %v73 = vld [vmem:[%s0 + $0xe0] sm:$0xff]
  %v74 = vld [vmem:[%s0 + $0xe8] sm:$0xff]
  %v75 = vld [vmem:[%s0 + $0xf0] sm:$0xff]
  %v76 = vld [vmem:[%s0 + $0xf8] sm:$0xff]
  %v77 = vld [vmem:[%s0 + $0x100] sm:$0xff]
  %v78 = vld [vmem:[%s0 + $0x108] sm:$0xff]
  %v79 = vld [vmem:[%s0 + $0x110] sm:$0xff]
  %v80 = vld [vmem:[%s0 + $0x118] sm:$0xff]
  %v81 = vld [vmem:[%s0 + $0x120] sm:$0xff]
  %v82 = vld [vmem:[%s0 + $0x128] sm:$0xff]
  %v83 = vld [vmem:[%s0 + $0x130] sm:$0xff]
  %v84 = vld [vmem:[%s0 + $0x138] sm:$0xff]
  %v85 = vld [vmem:[%s0 + $0x140] sm:$0xff]
  %v86 = vld [vmem:[%s0 + $0x148] sm:$0xff]
  %v87 = vld [vmem:[%s0 + $0x150] sm:$0xff]
  %v88 = vld [vmem:[%s0 + $0x158] sm:$0xff]
  %v89 = vld [vmem:[%s0 + $0x160] sm:$0xff]
  %v90 = vld [vmem:[%s0 + $0x168] sm:$0xff]
  %v91 = vld [vmem:[%s0 + $0x170] sm:$0xff]
  %v92 = vld [vmem:[%s0 + $0x178] sm:$0xff]
  %v93 = vld [vmem:[%s1] sm:$0xff]
  %v94 = vld [vmem:[%s1 + $0x8] sm:$0xff]
  %v95 = vld [vmem:[%s1 + $0x10] sm:$0xff]
  %v96 = vld [vmem:[%s1 + $0x18] sm:$0xff]
  %v97 = vld [vmem:[%s1 + $0x20] sm:$0xff]
  %v98 = vld [vmem:[%s1 + $0x28] sm:$0xff]
  %v99 = vld [vmem:[%s1 + $0x30] sm:$0xff]
  %v100 = vld [vmem:[%s1 + $0x38] sm:$0xff]
  %v101 = vld [vmem:[%s1 + $0x40] sm:$0xff]
  %v102 = vld [vmem:[%s1 + $0x48] sm:$0xff]
  %v103 = vld [vmem:[%s1 + $0x50] sm:$0xff]
  %v104 = vld [vmem:[%s1 + $0x58] sm:$0xff]
  %v105 = vld [vmem:[%s1 + $0x60] sm:$0xff]
  %v106 = vld [vmem:[%s1 + $0x68] sm:$0xff]
  %v107 = vld [vmem:[%s1 + $0x70] sm:$0xff]
  %v108 = vld [vmem:[%s1 + $0x78] sm:$0xff]
  %v109 = vld [vmem:[%s1 + $0x80] sm:$0xff]
  %v110 = vld [vmem:[%s1 + $0x88] sm:$0xff]
  %v111 = vld [vmem:[%s1 + $0x90] sm:$0xff]
  %v112 = vld [vmem:[%s1 + $0x98] sm:$0xff]
  %v113 = vld [vmem:[%s1 + $0xa0] sm:$0xff]
  %v114 = vld [vmem:[%s1 + $0xa8] sm:$0xff]
  %v115 = vld [vmem:[%s1 + $0xb0] sm:$0xff]
  %v116 = vld [vmem:[%s1 + $0xb8] sm:$0xff]
  %v117 = vld [vmem:[%s1 + $0xc0] sm:$0xff]
  %v118 = vld [vmem:[%s1 + $0xc8] sm:$0xff]
  %v119 = vld [vmem:[%s1 + $0xd0] sm:$0xff]
  %v120 = vld [vmem:[%s1 + $0xd8] sm:$0xff]
  %v121 = vld [vmem:[%s1 + $0xe0] sm:$0xff]
  %v122 = vld [vmem:[%s1 + $0xe8] sm:$0xff]
  %v123 = vld [vmem:[%s1 + $0xf0] sm:$0xff]
  %v124 = vld [vmem:[%s1 + $0xf8] sm:$0xff]
  %v125 = vld [vmem:[%s1 + $0x100] sm:$0xff]
  %v126 = vld [vmem:[%s1 + $0x108] sm:$0xff]
  %v127 = vld [vmem:[%s1 + $0x110] sm:$0x33]
  %v128 = vld [vmem:[%s1 + $0x118] sm:$0x33]
  %v177 = vunpack.c.l.b16 %v45
  %v178 = vunpack.c.h.b16 %v45
  %v179 = vunpack.c.l.b16 %v46
  %v180 = vunpack.c.h.b16 %v46
  %v181 = vunpack.c.l.b16 %v47
  %v182 = vunpack.c.h.b16 %v47
  %v183 = vunpack.c.l.b16 %v48
  %v184 = vunpack.c.h.b16 %v48
  %v185 = vunpack.c.l.b16 %v49
  %v186 = vunpack.c.h.b16 %v49
  %v187 = vunpack.c.l.b16 %v50
  %v188 = vunpack.c.h.b16 %v50
  %v189 = vunpack.c.l.b16 %v51
  %v190 = vunpack.c.h.b16 %v51
  %v191 = vunpack.c.l.b16 %v52
  %v192 = vunpack.c.h.b16 %v52
  %v193 = vunpack.c.l.b16 %v53
  %v194 = vunpack.c.h.b16 %v53
  %v195 = vunpack.c.l.b16 %v54
  %v196 = vunpack.c.h.b16 %v54
  %v197 = vunpack.c.l.b16 %v55
  %v198 = vunpack.c.h.b16 %v55
  %v199 = vunpack.c.l.b16 %v56
  %v200 = vunpack.c.h.b16 %v56
  %v201 = vunpack.c.l.b16 %v57
  %v202 = vunpack.c.h.b16 %v57
  %v203 = vunpack.c.l.b16 %v58
  %v204 = vunpack.c.h.b16 %v58
  %v205 = vunpack.c.l.b16 %v59
  %v206 = vunpack.c.h.b16 %v59
  %v207 = vunpack.c.l.b16 %v60
  %v208 = vunpack.c.h.b16 %v60
  %v209 = vunpack.c.l.b16 %v61
  %v210 = vunpack.c.h.b16 %v61
  %v211 = vunpack.c.l.b16 %v62
  %v212 = vunpack.c.h.b16 %v62
  %v213 = vunpack.c.l.b16 %v63
  %v214 = vunpack.c.h.b16 %v63
  %v215 = vunpack.c.l.b16 %v64
  %v216 = vunpack.c.h.b16 %v64
  %v217 = vunpack.c.l.b16 %v65
  %v218 = vunpack.c.h.b16 %v65
  %v219 = vunpack.c.l.b16 %v66
  %v220 = vunpack.c.h.b16 %v66
  %v221 = vunpack.c.l.b16 %v67
  %v222 = vunpack.c.h.b16 %v67
  %v223 = vunpack.c.l.b16 %v68
  %v224 = vunpack.c.h.b16 %v68
  %v225 = vunpack.c.l.b16 %v69
  %v226 = vunpack.c.h.b16 %v69
  %v227 = vunpack.c.l.b16 %v70
  %v228 = vunpack.c.h.b16 %v70
  %v229 = vunpack.c.l.b16 %v71
  %v230 = vunpack.c.h.b16 %v71
  %v231 = vunpack.c.l.b16 %v72
  %v232 = vunpack.c.h.b16 %v72
  %v233 = vunpack.c.l.b16 %v73
  %v234 = vunpack.c.h.b16 %v73
  %v235 = vunpack.c.l.b16 %v74
  %v236 = vunpack.c.h.b16 %v74
  %v237 = vunpack.c.l.b16 %v75
  %v238 = vunpack.c.h.b16 %v75
  %v239 = vunpack.c.l.b16 %v76
  %v240 = vunpack.c.h.b16 %v76
  %v241 = vunpack.c.l.b16 %v77
  %v242 = vunpack.c.h.b16 %v77
  %v243 = vunpack.c.l.b16 %v78
  %v244 = vunpack.c.h.b16 %v78
  %v245 = vunpack.c.l.b16 %v79
  %v246 = vunpack.c.h.b16 %v79
  %v247 = vunpack.c.l.b16 %v80
  %v248 = vunpack.c.h.b16 %v80
  %v249 = vunpack.c.l.b16 %v81
  %v250 = vunpack.c.h.b16 %v81
  %v251 = vunpack.c.l.b16 %v82
  %v252 = vunpack.c.h.b16 %v82
  %v253 = vunpack.c.l.b16 %v83
  %v254 = vunpack.c.h.b16 %v83
  %v255 = vunpack.c.l.b16 %v84
  %v256 = vunpack.c.h.b16 %v84
  %v257 = vunpack.c.l.b16 %v85
  %v258 = vunpack.c.h.b16 %v85
  %v259 = vunpack.c.l.b16 %v86
  %v260 = vunpack.c.h.b16 %v86
  %v261 = vunpack.c.l.b16 %v87
  %v262 = vunpack.c.h.b16 %v87
  %v263 = vunpack.c.l.b16 %v88
  %v264 = vunpack.c.h.b16 %v88
  %v265 = vunpack.c.l.b16 %v89
  %v266 = vunpack.c.h.b16 %v89
  %v267 = vunpack.c.l.b16 %v90
  %v268 = vunpack.c.h.b16 %v90
  %v269 = vunpack.c.l.b16 %v91
  %v270 = vunpack.c.h.b16 %v91
  %v271 = vunpack.c.l.b16 %v92
  %v272 = vunpack.c.h.b16 %v92
  %v273 = vpack.c.b16 %v179, %v177
  %v274 = vpack.c.b16 %v180, %v178
  %v275 = vpack.c.b16 %v183, %v181
  %v276 = vpack.c.b16 %v184, %v182
  %v277 = vpack.c.b16 %v187, %v185
  %v278 = vpack.c.b16 %v188, %v186
  %v279 = vpack.c.b16 %v191, %v189
  %v280 = vpack.c.b16 %v192, %v190
  %v281 = vpack.c.b16 %v195, %v193
  %v282 = vpack.c.b16 %v196, %v194
  %v283 = vpack.c.b16 %v199, %v197
  %v284 = vpack.c.b16 %v200, %v198
  %v285 = vpack.c.b16 %v203, %v201
  %v286 = vpack.c.b16 %v204, %v202
  %v287 = vpack.c.b16 %v207, %v205
  %v288 = vpack.c.b16 %v208, %v206
  %v289 = vpack.c.b16 %v211, %v209
  %v290 = vpack.c.b16 %v212, %v210
  %v291 = vpack.c.b16 %v215, %v213
  %v292 = vpack.c.b16 %v216, %v214
  %v293 = vpack.c.b16 %v219, %v217
  %v294 = vpack.c.b16 %v220, %v218
  %v295 = vpack.c.b16 %v223, %v221
  %v296 = vpack.c.b16 %v224, %v222
  %v297 = vpack.c.b16 %v227, %v225
  %v298 = vpack.c.b16 %v228, %v226
  %v299 = vpack.c.b16 %v231, %v229
  %v300 = vpack.c.b16 %v232, %v230
  %v301 = vpack.c.b16 %v235, %v233
  %v302 = vpack.c.b16 %v236, %v234
  %v303 = vpack.c.b16 %v239, %v237
  %v304 = vpack.c.b16 %v240, %v238
  %v305 = vpack.c.b16 %v243, %v241
  %v306 = vpack.c.b16 %v244, %v242
  %v307 = vpack.c.b16 %v247, %v245
  %v308 = vpack.c.b16 %v248, %v246
  %v309 = vpack.c.b16 %v251, %v249
  %v310 = vpack.c.b16 %v252, %v250
  %v311 = vpack.c.b16 %v255, %v253
  %v312 = vpack.c.b16 %v256, %v254
  %v313 = vpack.c.b16 %v259, %v257
  %v314 = vpack.c.b16 %v260, %v258
  %v315 = vpack.c.b16 %v263, %v261
  %v316 = vpack.c.b16 %v264, %v262
  %v317 = vpack.c.b16 %v267, %v265
  %v318 = vpack.c.b16 %v268, %v266
  %v319 = vpack.c.b16 %v271, %v269
  %v320 = vpack.c.b16 %v272, %v270
  %v381 = vunpack.c.l.b16 %v93
  %v382 = vunpack.c.h.b16 %v93
  %v383 = vunpack.c.l.b16 %v94
  %v384 = vunpack.c.h.b16 %v94
  %v385 = vunpack.c.l.b16 %v95
  %v386 = vunpack.c.h.b16 %v95
  %v387 = vunpack.c.l.b16 %v96
  %v388 = vunpack.c.h.b16 %v96
  %v389 = vunpack.c.l.b16 %v97
  %v390 = vunpack.c.h.b16 %v97
  %v391 = vunpack.c.l.b16 %v98
  %v392 = vunpack.c.h.b16 %v98
  %v393 = vunpack.c.l.b16 %v99
  %v394 = vunpack.c.h.b16 %v99
  %v395 = vunpack.c.l.b16 %v100
  %v396 = vunpack.c.h.b16 %v100
  %v397 = vunpack.c.l.b16 %v101
  %v398 = vunpack.c.h.b16 %v101
  %v399 = vunpack.c.l.b16 %v102
  %v400 = vunpack.c.h.b16 %v102
  %v401 = vunpack.c.l.b16 %v103
  %v402 = vunpack.c.h.b16 %v103
  %v403 = vunpack.c.l.b16 %v104
  %v404 = vunpack.c.h.b16 %v104
  %v405 = vunpack.c.l.b16 %v105
  %v406 = vunpack.c.h.b16 %v105
  %v407 = vunpack.c.l.b16 %v106
  %v408 = vunpack.c.h.b16 %v106
  %v409 = vunpack.c.l.b16 %v107
  %v410 = vunpack.c.h.b16 %v107
  %v411 = vunpack.c.l.b16 %v108
  %v412 = vunpack.c.h.b16 %v108
  %v413 = vunpack.c.l.b16 %v109
  %v414 = vunpack.c.h.b16 %v109
  %v415 = vunpack.c.l.b16 %v110
  %v416 = vunpack.c.h.b16 %v110
  %v417 = vunpack.c.l.b16 %v111
  %v418 = vunpack.c.h.b16 %v111
  %v419 = vunpack.c.l.b16 %v112
  %v420 = vunpack.c.h.b16 %v112
  %v421 = vunpack.c.l.b16 %v113
  %v422 = vunpack.c.h.b16 %v113
  %v423 = vunpack.c.l.b16 %v114
  %v424 = vunpack.c.h.b16 %v114
  %v425 = vunpack.c.l.b16 %v115
  %v426 = vunpack.c.h.b16 %v115
  %v427 = vunpack.c.l.b16 %v116
  %v428 = vunpack.c.h.b16 %v116
  %v429 = vunpack.c.l.b16 %v117
  %v430 = vunpack.c.h.b16 %v117
  %v431 = vunpack.c.l.b16 %v118
  %v432 = vunpack.c.h.b16 %v118
  %v433 = vunpack.c.l.b16 %v119
  %v434 = vunpack.c.h.b16 %v119
  %v435 = vunpack.c.l.b16 %v120
  %v436 = vunpack.c.h.b16 %v120
  %v437 = vunpack.c.l.b16 %v121
  %v438 = vunpack.c.h.b16 %v121
  %v439 = vunpack.c.l.b16 %v122
  %v440 = vunpack.c.h.b16 %v122
  %v441 = vunpack.c.l.b16 %v123
  %v442 = vunpack.c.h.b16 %v123
  %v443 = vunpack.c.l.b16 %v124
  %v444 = vunpack.c.h.b16 %v124
  %v445 = vunpack.c.l.b16 %v125
  %v446 = vunpack.c.h.b16 %v125
  %v447 = vunpack.c.l.b16 %v126
  %v448 = vunpack.c.h.b16 %v126
  %v449 = vunpack.c.l.b16 %v127
  %v450 = vunpack.c.h.b16 %v127
  %v451 = vunpack.c.l.b16 %v128
  %v452 = vunpack.c.h.b16 %v128
  %v453 = vpack.c.b16 %v385, %v381
  %v454 = vpack.c.b16 %v386, %v382
  %v455 = vpack.c.b16 %v387, %v383
  %v456 = vpack.c.b16 %v388, %v384
  %v457 = vpack.c.b16 %v393, %v389
  %v458 = vpack.c.b16 %v394, %v390
  %v459 = vpack.c.b16 %v395, %v391
  %v460 = vpack.c.b16 %v396, %v392
  %v461 = vpack.c.b16 %v401, %v397
  %v462 = vpack.c.b16 %v402, %v398
  %v463 = vpack.c.b16 %v403, %v399
  %v464 = vpack.c.b16 %v404, %v400
  %v465 = vpack.c.b16 %v409, %v405
  %v466 = vpack.c.b16 %v410, %v406
  %v467 = vpack.c.b16 %v411, %v407
  %v468 = vpack.c.b16 %v412, %v408
  %v469 = vpack.c.b16 %v417, %v413
  %v470 = vpack.c.b16 %v418, %v414
  %v471 = vpack.c.b16 %v419, %v415
  %v472 = vpack.c.b16 %v420, %v416
  %v473 = vpack.c.b16 %v425, %v421
  %v474 = vpack.c.b16 %v426, %v422
  %v475 = vpack.c.b16 %v427, %v423
  %v476 = vpack.c.b16 %v428, %v424
  %v477 = vpack.c.b16 %v433, %v429
  %v478 = vpack.c.b16 %v434, %v430
  %v479 = vpack.c.b16 %v435, %v431
  %v480 = vpack.c.b16 %v436, %v432
  %v481 = vpack.c.b16 %v441, %v437
  %v482 = vpack.c.b16 %v442, %v438
  %v483 = vpack.c.b16 %v443, %v439
  %v484 = vpack.c.b16 %v444, %v440
  %v485 = vpack.c.b16 %v449, %v445
  %v486 = vpack.c.b16 %v450, %v446
  %v487 = vpack.c.b16 %v451, %v447
  %v488 = vpack.c.b16 %v452, %v448
  %vm521 = vcmask 97280
  %v523 = vsel %vm521, %v274, 0
  %v526 = vsel %vm521, %v276, 0
  %v529 = vsel %vm521, %v278, 0
  %v532 = vsel %vm521, %v280, 0
  %v535 = vsel %vm521, %v282, 0
  %v538 = vsel %vm521, %v284, 0
  %v541 = vsel %vm521, %v286, 0
  %v544 = vsel %vm521, %v288, 0
  %v547 = vsel %vm521, %v290, 0
  %v550 = vsel %vm521, %v292, 0
  %v553 = vsel %vm521, %v294, 0
  %v556 = vsel %vm521, %v296, 0
  %v559 = vsel %vm521, %v298, 0
  %v562 = vsel %vm521, %v300, 0
  %v565 = vsel %vm521, %v302, 0
  %v568 = vsel %vm521, %v304, 0
  %v571 = vsel %vm521, %v306, 0
  %v574 = vsel %vm521, %v308, 0
  %v577 = vsel %vm521, %v310, 0
  %v580 = vsel %vm521, %v312, 0
  %v583 = vsel %vm521, %v314, 0
  %v586 = vsel %vm521, %v316, 0
  %v589 = vsel %vm521, %v318, 0
  %v592 = vsel %vm521, %v320, 0
  %vm594 = vcmask 1045504
  %v596 = vsel %vm594, %v485, 0
  %v599 = vsel %vm594, %v486, 0
  %v602 = vsel %vm594, %v487, 0
  %v605 = vsel %vm594, %v488, 0
  %607 = vmatprep.subr.bf16.mxu0 %v482
  %608 = vmatpush1.bf16.msra.mxu0 %v481
  %609 = vmatprep.subr.bf16.mxu0 %v478
  %610 = vmatpush1.bf16.msra.mxu0 %v477
  %611 = vmatprep.subr.bf16.mxu0 %v474
  %612 = vmatpush1.bf16.msra.mxu0 %v473
  %613 = vmatprep.subr.bf16.mxu0 %v470
  %614 = vmatpush1.bf16.msra.mxu0 %v469
  %615 = vmatprep.subr.bf16.mxu0 %v466
  %616 = vmatpush1.bf16.msra.mxu0 %v465
  %617 = vmatprep.subr.bf16.mxu0 %v462
  %618 = vmatpush1.bf16.msra.mxu0 %v461
  %619 = vmatprep.subr.bf16.mxu0 %v458
  %620 = vmatpush1.bf16.msra.mxu0 %v457
  %621 = vmatprep.subr.bf16.mxu0 %v454
  %622 = vmatpush1.bf16.msra.mxu0 %v453
  %623 = vmatprep.subr.bf16.mxu0 0
  %624 = vmatpush2.bf16.msra.mxu0 0
  %625 = vmatprep.subr.bf16.mxu0 0
  %626 = vmatpush2.bf16.msra.mxu0 0
  %627 = vmatprep.subr.bf16.mxu0 0
  %628 = vmatpush2.bf16.msra.mxu0 0
  %629 = vmatprep.subr.bf16.mxu0 0
  %630 = vmatpush2.bf16.msra.mxu0 0
  %631 = vmatprep.subr.bf16.mxu0 0
  %632 = vmatpush2.bf16.msra.mxu0 0
  %633 = vmatprep.subr.bf16.mxu0 0
  %634 = vmatpush2.bf16.msra.mxu0 0
  %635 = vmatprep.subr.bf16.mxu0 0
  %636 = vmatpush2.bf16.msra.mxu0 0
  %637 = vmatprep.subr.bf16.mxu0 %v599
  %638 = vmatpush2.bf16.msra.mxu0 %v596
  %639 = vmatprep.mubr.bf16.mxu0 %v523
  %640 = vmatmul.mubr.bf16.gmra.mxu0 %v273
  %v641 = vpop.f32.mrf.mxu0
  %v642 = vadd.f32 0.0, %v641
  %v643 = vpop.f32.mrf.mxu0
  %v644 = vadd.f32 0.0, %v643
  %v645 = vpop.f32.mrf.mxu0
  %v646 = vadd.f32 0.0, %v645
  %v647 = vpop.f32.mrf.mxu0
  %v648 = vadd.f32 0.0, %v647
  %649 = vmatprep.mubr.bf16.mxu0 %v526
  %650 = vmatmul.mubr.bf16.gmra.mxu0 %v275
  %v651 = vpop.f32.mrf.mxu0
  %v652 = vadd.f32 0.0, %v651
  %v653 = vpop.f32.mrf.mxu0
  %v654 = vadd.f32 0.0, %v653
  %v655 = vpop.f32.mrf.mxu0
  %v656 = vadd.f32 0.0, %v655
  %v657 = vpop.f32.mrf.mxu0
  %v658 = vadd.f32 0.0, %v657
  %659 = vmatprep.mubr.bf16.mxu0 %v529
  %660 = vmatmul.mubr.bf16.gmra.mxu0 %v277
  %v661 = vpop.f32.mrf.mxu0
  %v662 = vadd.f32 0.0, %v661
  %v663 = vpop.f32.mrf.mxu0
  %v664 = vadd.f32 0.0, %v663
  %v665 = vpop.f32.mrf.mxu0
  %v666 = vadd.f32 0.0, %v665
  %v667 = vpop.f32.mrf.mxu0
  %v668 = vadd.f32 0.0, %v667
  %669 = vmatprep.mubr.bf16.mxu0 %v532
  %670 = vmatmul.mubr.bf16.gmra.mxu0 %v279
  %v671 = vpop.f32.mrf.mxu0
  %v672 = vadd.f32 0.0, %v671
  %v673 = vpop.f32.mrf.mxu0
  %v674 = vadd.f32 0.0, %v673
  %v675 = vpop.f32.mrf.mxu0
  %v676 = vadd.f32 0.0, %v675
  %v677 = vpop.f32.mrf.mxu0
  %v678 = vadd.f32 0.0, %v677
  %679 = vmatprep.mubr.bf16.mxu0 %v535
  %680 = vmatmul.mubr.bf16.gmra.mxu0 %v281
  %v681 = vpop.f32.mrf.mxu0
  %v682 = vadd.f32 0.0, %v681
  %v683 = vpop.f32.mrf.mxu0
  %v684 = vadd.f32 0.0, %v683
  %v685 = vpop.f32.mrf.mxu0
  %v686 = vadd.f32 0.0, %v685
  %v687 = vpop.f32.mrf.mxu0
  %v688 = vadd.f32 0.0, %v687
  %689 = vmatprep.mubr.bf16.mxu0 %v538
  %690 = vmatmul.mubr.bf16.gmra.mxu0 %v283
  %v691 = vpop.f32.mrf.mxu0
  %v692 = vadd.f32 0.0, %v691
  %v693 = vpop.f32.mrf.mxu0
  %v694 = vadd.f32 0.0, %v693
  %v695 = vpop.f32.mrf.mxu0
  %v696 = vadd.f32 0.0, %v695
  %v697 = vpop.f32.mrf.mxu0
  %v698 = vadd.f32 0.0, %v697
  %699 = vmatprep.mubr.bf16.mxu0 %v541
  %700 = vmatmul.mubr.bf16.gmra.mxu0 %v285
  %v701 = vpop.f32.mrf.mxu0
  %v702 = vadd.f32 0.0, %v701
  %v703 = vpop.f32.mrf.mxu0
  %v704 = vadd.f32 0.0, %v703
  %v705 = vpop.f32.mrf.mxu0
  %v706 = vadd.f32 0.0, %v705
  %v707 = vpop.f32.mrf.mxu0
  %v708 = vadd.f32 0.0, %v707
  %709 = vmatprep.mubr.bf16.mxu0 %v544
  %710 = vmatmul.mubr.bf16.gmra.mxu0 %v287
  %v711 = vpop.f32.mrf.mxu0
  %v712 = vadd.f32 0.0, %v711
  %v713 = vpop.f32.mrf.mxu0
  %v714 = vadd.f32 0.0, %v713
  %v715 = vpop.f32.mrf.mxu0
  %v716 = vadd.f32 0.0, %v715
  %v717 = vpop.f32.mrf.mxu0
  %v718 = vadd.f32 0.0, %v717
  %719 = vmatprep.mubr.bf16.mxu0 %v547
  %720 = vmatmul.mubr.bf16.gmra.mxu0 %v289
  %v721 = vpop.f32.mrf.mxu0
  %v722 = vadd.f32 0.0, %v721
  %v723 = vpop.f32.mrf.mxu0
  %v724 = vadd.f32 0.0, %v723
  %v725 = vpop.f32.mrf.mxu0
  %v726 = vadd.f32 0.0, %v725
  %v727 = vpop.f32.mrf.mxu0
  %v728 = vadd.f32 0.0, %v727
  %729 = vmatprep.mubr.bf16.mxu0 %v550
  %730 = vmatmul.mubr.bf16.gmra.mxu0 %v291
  %v731 = vpop.f32.mrf.mxu0
  %v732 = vadd.f32 0.0, %v731
  %v733 = vpop.f32.mrf.mxu0
  %v734 = vadd.f32 0.0, %v733
  %v735 = vpop.f32.mrf.mxu0
  %v736 = vadd.f32 0.0, %v735
  %v737 = vpop.f32.mrf.mxu0
  %v738 = vadd.f32 0.0, %v737
  %739 = vmatprep.mubr.bf16.mxu0 %v553
  %740 = vmatmul.mubr.bf16.gmra.mxu0 %v293
  %v741 = vpop.f32.mrf.mxu0
  %v742 = vadd.f32 0.0, %v741
  %v743 = vpop.f32.mrf.mxu0
  %v744 = vadd.f32 0.0, %v743
  %v745 = vpop.f32.mrf.mxu0
  %v746 = vadd.f32 0.0, %v745
  %v747 = vpop.f32.mrf.mxu0
  %v748 = vadd.f32 0.0, %v747
  %749 = vmatprep.mubr.bf16.mxu0 %v556
  %750 = vmatmul.mubr.bf16.gmra.mxu0 %v295
  %v751 = vpop.f32.mrf.mxu0
  %v752 = vadd.f32 0.0, %v751
  %v753 = vpop.f32.mrf.mxu0
  %v754 = vadd.f32 0.0, %v753
  %v755 = vpop.f32.mrf.mxu0
  %v756 = vadd.f32 0.0, %v755
  %v757 = vpop.f32.mrf.mxu0
  %v758 = vadd.f32 0.0, %v757
  %759 = vmatprep.mubr.bf16.mxu0 %v559
  %760 = vmatmul.mubr.bf16.gmra.mxu0 %v297
  %v761 = vpop.f32.mrf.mxu0
  %v762 = vadd.f32 0.0, %v761
  %v763 = vpop.f32.mrf.mxu0
  %v764 = vadd.f32 0.0, %v763
  %v765 = vpop.f32.mrf.mxu0
  %v766 = vadd.f32 0.0, %v765
  %v767 = vpop.f32.mrf.mxu0
  %v768 = vadd.f32 0.0, %v767
  %769 = vmatprep.mubr.bf16.mxu0 %v562
  %770 = vmatmul.mubr.bf16.gmra.mxu0 %v299
  %v771 = vpop.f32.mrf.mxu0
  %v772 = vadd.f32 0.0, %v771
  %v773 = vpop.f32.mrf.mxu0
  %v774 = vadd.f32 0.0, %v773
  %v775 = vpop.f32.mrf.mxu0
  %v776 = vadd.f32 0.0, %v775
  %v777 = vpop.f32.mrf.mxu0
  %v778 = vadd.f32 0.0, %v777
  %779 = vmatprep.mubr.bf16.mxu0 %v565
  %780 = vmatmul.mubr.bf16.gmra.mxu0 %v301
  %v781 = vpop.f32.mrf.mxu0
  %v782 = vadd.f32 0.0, %v781
  %v783 = vpop.f32.mrf.mxu0
  %v784 = vadd.f32 0.0, %v783
  %v785 = vpop.f32.mrf.mxu0
  %v786 = vadd.f32 0.0, %v785
  %v787 = vpop.f32.mrf.mxu0
  %v788 = vadd.f32 0.0, %v787
  %789 = vmatprep.mubr.bf16.mxu0 %v568
  %790 = vmatmul.mubr.bf16.gmra.mxu0 %v303
  %v791 = vpop.f32.mrf.mxu0
  %v792 = vadd.f32 0.0, %v791
  %v793 = vpop.f32.mrf.mxu0
  %v794 = vadd.f32 0.0, %v793
  %v795 = vpop.f32.mrf.mxu0
  %v796 = vadd.f32 0.0, %v795
  %v797 = vpop.f32.mrf.mxu0
  %v798 = vadd.f32 0.0, %v797
  %799 = vmatprep.mubr.bf16.mxu0 %v571
  %800 = vmatmul.mubr.bf16.gmra.mxu0 %v305
  %v801 = vpop.f32.mrf.mxu0
  %v802 = vadd.f32 0.0, %v801
  %v803 = vpop.f32.mrf.mxu0
  %v804 = vadd.f32 0.0, %v803
  %v805 = vpop.f32.mrf.mxu0
  %v806 = vadd.f32 0.0, %v805
  %v807 = vpop.f32.mrf.mxu0
  %v808 = vadd.f32 0.0, %v807
  %809 = vmatprep.mubr.bf16.mxu0 %v574
  %810 = vmatmul.mubr.bf16.gmra.mxu0 %v307
  %v811 = vpop.f32.mrf.mxu0
  %v812 = vadd.f32 0.0, %v811
  %v813 = vpop.f32.mrf.mxu0
  %v814 = vadd.f32 0.0, %v813
  %v815 = vpop.f32.mrf.mxu0
  %v816 = vadd.f32 0.0, %v815
  %v817 = vpop.f32.mrf.mxu0
  %v818 = vadd.f32 0.0, %v817
  %819 = vmatprep.mubr.bf16.mxu0 %v577
  %820 = vmatmul.mubr.bf16.gmra.mxu0 %v309
  %v821 = vpop.f32.mrf.mxu0
  %v822 = vadd.f32 0.0, %v821
  %v823 = vpop.f32.mrf.mxu0
  %v824 = vadd.f32 0.0, %v823
  %v825 = vpop.f32.mrf.mxu0
  %v826 = vadd.f32 0.0, %v825
  %v827 = vpop.f32.mrf.mxu0
  %v828 = vadd.f32 0.0, %v827
  %829 = vmatprep.mubr.bf16.mxu0 %v580
  %830 = vmatmul.mubr.bf16.gmra.mxu0 %v311
  %v831 = vpop.f32.mrf.mxu0
  %v832 = vadd.f32 0.0, %v831
  %v833 = vpop.f32.mrf.mxu0
  %v834 = vadd.f32 0.0, %v833
  %v835 = vpop.f32.mrf.mxu0
  %v836 = vadd.f32 0.0, %v835
  %v837 = vpop.f32.mrf.mxu0
  %v838 = vadd.f32 0.0, %v837
  %839 = vmatprep.mubr.bf16.mxu0 %v583
  %840 = vmatmul.mubr.bf16.gmra.mxu0 %v313
  %v841 = vpop.f32.mrf.mxu0
  %v842 = vadd.f32 0.0, %v841
  %v843 = vpop.f32.mrf.mxu0
  %v844 = vadd.f32 0.0, %v843
  %v845 = vpop.f32.mrf.mxu0
  %v846 = vadd.f32 0.0, %v845
  %v847 = vpop.f32.mrf.mxu0
  %v848 = vadd.f32 0.0, %v847
  %849 = vmatprep.mubr.bf16.mxu0 %v586
  %850 = vmatmul.mubr.bf16.gmra.mxu0 %v315
  %v851 = vpop.f32.mrf.mxu0
  %v852 = vadd.f32 0.0, %v851
  %v853 = vpop.f32.mrf.mxu0
  %v854 = vadd.f32 0.0, %v853
  %v855 = vpop.f32.mrf.mxu0
  %v856 = vadd.f32 0.0, %v855
  %v857 = vpop.f32.mrf.mxu0
  %v858 = vadd.f32 0.0, %v857
  %859 = vmatprep.mubr.bf16.mxu0 %v589
  %860 = vmatmul.mubr.bf16.gmra.mxu0 %v317
  %v861 = vpop.f32.mrf.mxu0
  %v862 = vadd.f32 0.0, %v861
  %v863 = vpop.f32.mrf.mxu0
  %v864 = vadd.f32 0.0, %v863
  %v865 = vpop.f32.mrf.mxu0
  %v866 = vadd.f32 0.0, %v865
  %v867 = vpop.f32.mrf.mxu0
  %v868 = vadd.f32 0.0, %v867
  %869 = vmatprep.mubr.bf16.mxu0 %v592
  %870 = vmatmul.mubr.bf16.gmra.mxu0 %v319
  %v871 = vpop.f32.mrf.mxu0
  %v872 = vadd.f32 0.0, %v871
  %v873 = vpop.f32.mrf.mxu0
  %v874 = vadd.f32 0.0, %v873
  %v875 = vpop.f32.mrf.mxu0
  %v876 = vadd.f32 0.0, %v875
  %v877 = vpop.f32.mrf.mxu0
  %v878 = vadd.f32 0.0, %v877
  %879 = vdwg.mxu0
  %880 = vmatprep.subr.bf16.mxu0 %v484
  %881 = vmatpush1.bf16.msra.mxu0 %v483
  %882 = vmatprep.subr.bf16.mxu0 %v480
  %883 = vmatpush1.bf16.msra.mxu0 %v479
  %884 = vmatprep.subr.bf16.mxu0 %v476
  %885 = vmatpush1.bf16.msra.mxu0 %v475
  %886 = vmatprep.subr.bf16.mxu0 %v472
  %887 = vmatpush1.bf16.msra.mxu0 %v471
  %888 = vmatprep.subr.bf16.mxu0 %v468
  %889 = vmatpush1.bf16.msra.mxu0 %v467
  %890 = vmatprep.subr.bf16.mxu0 %v464
  %891 = vmatpush1.bf16.msra.mxu0 %v463
  %892 = vmatprep.subr.bf16.mxu0 %v460
  %893 = vmatpush1.bf16.msra.mxu0 %v459
  %894 = vmatprep.subr.bf16.mxu0 %v456
  %895 = vmatpush1.bf16.msra.mxu0 %v455
  %896 = vmatprep.subr.bf16.mxu0 0
  %897 = vmatpush2.bf16.msra.mxu0 0
  %898 = vmatprep.subr.bf16.mxu0 0
  %899 = vmatpush2.bf16.msra.mxu0 0
  %900 = vmatprep.subr.bf16.mxu0 0
  %901 = vmatpush2.bf16.msra.mxu0 0
  %902 = vmatprep.subr.bf16.mxu0 0
  %903 = vmatpush2.bf16.msra.mxu0 0
  %904 = vmatprep.subr.bf16.mxu0 0
  %905 = vmatpush2.bf16.msra.mxu0 0
  %906 = vmatprep.subr.bf16.mxu0 0
  %907 = vmatpush2.bf16.msra.mxu0 0
  %908 = vmatprep.subr.bf16.mxu0 0
  %909 = vmatpush2.bf16.msra.mxu0 0
  %910 = vmatprep.subr.bf16.mxu0 %v605
  %911 = vmatpush2.bf16.msra.mxu0 %v602
  %912 = vmatprep.mubr.bf16.mxu0 %v523
  %913 = vmatmul.mubr.bf16.gmra.mxu0 %v273
  %v914 = vpop.f32.mrf.mxu0
  %v915 = vadd.f32 0.0, %v914
  %v916 = vpop.f32.mrf.mxu0
  %v917 = vadd.f32 0.0, %v916
  %v918 = vpop.f32.mrf.mxu0
  %v919 = vadd.f32 0.0, %v918
  %v920 = vpop.f32.mrf.mxu0
  %v921 = vadd.f32 0.0, %v920
  %922 = vmatprep.mubr.bf16.mxu0 %v526
  %923 = vmatmul.mubr.bf16.gmra.mxu0 %v275
  %v924 = vpop.f32.mrf.mxu0
  %v925 = vadd.f32 0.0, %v924
  %v926 = vpop.f32.mrf.mxu0
  %v927 = vadd.f32 0.0, %v926
  %v928 = vpop.f32.mrf.mxu0
  %v929 = vadd.f32 0.0, %v928
  %v930 = vpop.f32.mrf.mxu0
  %v931 = vadd.f32 0.0, %v930
  %932 = vmatprep.mubr.bf16.mxu0 %v529
  %933 = vmatmul.mubr.bf16.gmra.mxu0 %v277
  %v934 = vpop.f32.mrf.mxu0
  %v935 = vadd.f32 0.0, %v934
  %v936 = vpop.f32.mrf.mxu0
  %v937 = vadd.f32 0.0, %v936
  %v938 = vpop.f32.mrf.mxu0
  %v939 = vadd.f32 0.0, %v938
  %v940 = vpop.f32.mrf.mxu0
  %v941 = vadd.f32 0.0, %v940
  %942 = vmatprep.mubr.bf16.mxu0 %v532
  %943 = vmatmul.mubr.bf16.gmra.mxu0 %v279
  %v944 = vpop.f32.mrf.mxu0
  %v945 = vadd.f32 0.0, %v944
  %v946 = vpop.f32.mrf.mxu0
  %v947 = vadd.f32 0.0, %v946
  %v948 = vpop.f32.mrf.mxu0
  %v949 = vadd.f32 0.0, %v948
  %v950 = vpop.f32.mrf.mxu0
  %v951 = vadd.f32 0.0, %v950
  %952 = vmatprep.mubr.bf16.mxu0 %v535
  %953 = vmatmul.mubr.bf16.gmra.mxu0 %v281
  %v954 = vpop.f32.mrf.mxu0
  %v955 = vadd.f32 0.0, %v954
  %v956 = vpop.f32.mrf.mxu0
  %v957 = vadd.f32 0.0, %v956
  %v958 = vpop.f32.mrf.mxu0
  %v959 = vadd.f32 0.0, %v958
  %v960 = vpop.f32.mrf.mxu0
  %v961 = vadd.f32 0.0, %v960
  %962 = vmatprep.mubr.bf16.mxu0 %v538
  %963 = vmatmul.mubr.bf16.gmra.mxu0 %v283
  %v964 = vpop.f32.mrf.mxu0
  %v965 = vadd.f32 0.0, %v964
  %v966 = vpop.f32.mrf.mxu0
  %v967 = vadd.f32 0.0, %v966
  %v968 = vpop.f32.mrf.mxu0
  %v969 = vadd.f32 0.0, %v968
  %v970 = vpop.f32.mrf.mxu0
  %v971 = vadd.f32 0.0, %v970
  %972 = vmatprep.mubr.bf16.mxu0 %v541
  %973 = vmatmul.mubr.bf16.gmra.mxu0 %v285
  %v974 = vpop.f32.mrf.mxu0
  %v975 = vadd.f32 0.0, %v974
  %v976 = vpop.f32.mrf.mxu0
  %v977 = vadd.f32 0.0, %v976
  %v978 = vpop.f32.mrf.mxu0
  %v979 = vadd.f32 0.0, %v978
  %v980 = vpop.f32.mrf.mxu0
  %v981 = vadd.f32 0.0, %v980
  %982 = vmatprep.mubr.bf16.mxu0 %v544
  %983 = vmatmul.mubr.bf16.gmra.mxu0 %v287
  %v984 = vpop.f32.mrf.mxu0
  %v985 = vadd.f32 0.0, %v984
  %v986 = vpop.f32.mrf.mxu0
  %v987 = vadd.f32 0.0, %v986
  %v988 = vpop.f32.mrf.mxu0
  %v989 = vadd.f32 0.0, %v988
  %v990 = vpop.f32.mrf.mxu0
  %v991 = vadd.f32 0.0, %v990
  %992 = vmatprep.mubr.bf16.mxu0 %v547
  %993 = vmatmul.mubr.bf16.gmra.mxu0 %v289
  %v994 = vpop.f32.mrf.mxu0
  %v995 = vadd.f32 0.0, %v994
  %v996 = vpop.f32.mrf.mxu0
  %v997 = vadd.f32 0.0, %v996
  %v998 = vpop.f32.mrf.mxu0
  %v999 = vadd.f32 0.0, %v998
  %v1000 = vpop.f32.mrf.mxu0
  %v1001 = vadd.f32 0.0, %v1000
  %1002 = vmatprep.mubr.bf16.mxu0 %v550
  %1003 = vmatmul.mubr.bf16.gmra.mxu0 %v291
  %v1004 = vpop.f32.mrf.mxu0
  %v1005 = vadd.f32 0.0, %v1004
  %v1006 = vpop.f32.mrf.mxu0
  %v1007 = vadd.f32 0.0, %v1006
  %v1008 = vpop.f32.mrf.mxu0
  %v1009 = vadd.f32 0.0, %v1008
  %v1010 = vpop.f32.mrf.mxu0
  %v1011 = vadd.f32 0.0, %v1010
  %1012 = vmatprep.mubr.bf16.mxu0 %v553
  %1013 = vmatmul.mubr.bf16.gmra.mxu0 %v293
  %v1014 = vpop.f32.mrf.mxu0
  %v1015 = vadd.f32 0.0, %v1014
  %v1016 = vpop.f32.mrf.mxu0
  %v1017 = vadd.f32 0.0, %v1016
  %v1018 = vpop.f32.mrf.mxu0
  %v1019 = vadd.f32 0.0, %v1018
  %v1020 = vpop.f32.mrf.mxu0
  %v1021 = vadd.f32 0.0, %v1020
  %1022 = vmatprep.mubr.bf16.mxu0 %v556
  %1023 = vmatmul.mubr.bf16.gmra.mxu0 %v295
  %v1024 = vpop.f32.mrf.mxu0
  %v1025 = vadd.f32 0.0, %v1024
  %v1026 = vpop.f32.mrf.mxu0
  %v1027 = vadd.f32 0.0, %v1026
  %v1028 = vpop.f32.mrf.mxu0
  %v1029 = vadd.f32 0.0, %v1028
  %v1030 = vpop.f32.mrf.mxu0
  %v1031 = vadd.f32 0.0, %v1030
  %1032 = vmatprep.mubr.bf16.mxu0 %v559
  %1033 = vmatmul.mubr.bf16.gmra.mxu0 %v297
  %v1034 = vpop.f32.mrf.mxu0
  %v1035 = vadd.f32 0.0, %v1034
  %v1036 = vpop.f32.mrf.mxu0
  %v1037 = vadd.f32 0.0, %v1036
  %v1038 = vpop.f32.mrf.mxu0
  %v1039 = vadd.f32 0.0, %v1038
  %v1040 = vpop.f32.mrf.mxu0
  %v1041 = vadd.f32 0.0, %v1040
  %1042 = vmatprep.mubr.bf16.mxu0 %v562
  %1043 = vmatmul.mubr.bf16.gmra.mxu0 %v299
  %v1044 = vpop.f32.mrf.mxu0
  %v1045 = vadd.f32 0.0, %v1044
  %v1046 = vpop.f32.mrf.mxu0
  %v1047 = vadd.f32 0.0, %v1046
  %v1048 = vpop.f32.mrf.mxu0
  %v1049 = vadd.f32 0.0, %v1048
  %v1050 = vpop.f32.mrf.mxu0
  %v1051 = vadd.f32 0.0, %v1050
  %1052 = vmatprep.mubr.bf16.mxu0 %v565
  %1053 = vmatmul.mubr.bf16.gmra.mxu0 %v301
  %v1054 = vpop.f32.mrf.mxu0
  %v1055 = vadd.f32 0.0, %v1054
  %v1056 = vpop.f32.mrf.mxu0
  %v1057 = vadd.f32 0.0, %v1056
  %v1058 = vpop.f32.mrf.mxu0
  %v1059 = vadd.f32 0.0, %v1058
  %v1060 = vpop.f32.mrf.mxu0
  %v1061 = vadd.f32 0.0, %v1060
  %1062 = vmatprep.mubr.bf16.mxu0 %v568
  %1063 = vmatmul.mubr.bf16.gmra.mxu0 %v303
  %v1064 = vpop.f32.mrf.mxu0
  %v1065 = vadd.f32 0.0, %v1064
  %v1066 = vpop.f32.mrf.mxu0
  %v1067 = vadd.f32 0.0, %v1066
  %v1068 = vpop.f32.mrf.mxu0
  %v1069 = vadd.f32 0.0, %v1068
  %v1070 = vpop.f32.mrf.mxu0
  %v1071 = vadd.f32 0.0, %v1070
  %1072 = vmatprep.mubr.bf16.mxu0 %v571
  %1073 = vmatmul.mubr.bf16.gmra.mxu0 %v305
  %v1074 = vpop.f32.mrf.mxu0
  %v1075 = vadd.f32 0.0, %v1074
  %v1076 = vpop.f32.mrf.mxu0
  %v1077 = vadd.f32 0.0, %v1076
  %v1078 = vpop.f32.mrf.mxu0
  %v1079 = vadd.f32 0.0, %v1078
  %v1080 = vpop.f32.mrf.mxu0
  %v1081 = vadd.f32 0.0, %v1080
  %1082 = vmatprep.mubr.bf16.mxu0 %v574
  %1083 = vmatmul.mubr.bf16.gmra.mxu0 %v307
  %v1084 = vpop.f32.mrf.mxu0
  %v1085 = vadd.f32 0.0, %v1084
  %v1086 = vpop.f32.mrf.mxu0
  %v1087 = vadd.f32 0.0, %v1086
  %v1088 = vpop.f32.mrf.mxu0
  %v1089 = vadd.f32 0.0, %v1088
  %v1090 = vpop.f32.mrf.mxu0
  %v1091 = vadd.f32 0.0, %v1090
  %1092 = vmatprep.mubr.bf16.mxu0 %v577
  %1093 = vmatmul.mubr.bf16.gmra.mxu0 %v309
  %v1094 = vpop.f32.mrf.mxu0
  %v1095 = vadd.f32 0.0, %v1094
  %v1096 = vpop.f32.mrf.mxu0
  %v1097 = vadd.f32 0.0, %v1096
  %v1098 = vpop.f32.mrf.mxu0
  %v1099 = vadd.f32 0.0, %v1098
  %v1100 = vpop.f32.mrf.mxu0
  %v1101 = vadd.f32 0.0, %v1100
  %1102 = vmatprep.mubr.bf16.mxu0 %v580
  %1103 = vmatmul.mubr.bf16.gmra.mxu0 %v311
  %v1104 = vpop.f32.mrf.mxu0
  %v1105 = vadd.f32 0.0, %v1104
  %v1106 = vpop.f32.mrf.mxu0
  %v1107 = vadd.f32 0.0, %v1106
  %v1108 = vpop.f32.mrf.mxu0
  %v1109 = vadd.f32 0.0, %v1108
  %v1110 = vpop.f32.mrf.mxu0
  %v1111 = vadd.f32 0.0, %v1110
  %1112 = vmatprep.mubr.bf16.mxu0 %v583
  %1113 = vmatmul.mubr.bf16.gmra.mxu0 %v313
  %v1114 = vpop.f32.mrf.mxu0
  %v1115 = vadd.f32 0.0, %v1114
  %v1116 = vpop.f32.mrf.mxu0
  %v1117 = vadd.f32 0.0, %v1116
  %v1118 = vpop.f32.mrf.mxu0
  %v1119 = vadd.f32 0.0, %v1118
  %v1120 = vpop.f32.mrf.mxu0
  %v1121 = vadd.f32 0.0, %v1120
  %1122 = vmatprep.mubr.bf16.mxu0 %v586
  %1123 = vmatmul.mubr.bf16.gmra.mxu0 %v315
  %v1124 = vpop.f32.mrf.mxu0
  %v1125 = vadd.f32 0.0, %v1124
  %v1126 = vpop.f32.mrf.mxu0
  %v1127 = vadd.f32 0.0, %v1126
  %v1128 = vpop.f32.mrf.mxu0
  %v1129 = vadd.f32 0.0, %v1128
  %v1130 = vpop.f32.mrf.mxu0
  %v1131 = vadd.f32 0.0, %v1130
  %1132 = vmatprep.mubr.bf16.mxu0 %v589
  %1133 = vmatmul.mubr.bf16.gmra.mxu0 %v317
  %v1134 = vpop.f32.mrf.mxu0
  %v1135 = vadd.f32 0.0, %v1134
  %v1136 = vpop.f32.mrf.mxu0
  %v1137 = vadd.f32 0.0, %v1136
  %v1138 = vpop.f32.mrf.mxu0
  %v1139 = vadd.f32 0.0, %v1138
  %v1140 = vpop.f32.mrf.mxu0
  %v1141 = vadd.f32 0.0, %v1140
  %1142 = vmatprep.mubr.bf16.mxu0 %v592
  %1143 = vmatmul.mubr.bf16.gmra.mxu0 %v319
  %v1144 = vpop.f32.mrf.mxu0
  %v1145 = vadd.f32 0.0, %v1144
  %v1146 = vpop.f32.mrf.mxu0
  %v1147 = vadd.f32 0.0, %v1146
  %v1148 = vpop.f32.mrf.mxu0
  %v1149 = vadd.f32 0.0, %v1148
  %v1150 = vpop.f32.mrf.mxu0
  %v1151 = vadd.f32 0.0, %v1150
  %1152 = vdwg.mxu0
  %v1153 = vmax.f32 %v642, %v702
  %v1154 = vmax.f32 %v644, %v704
  %v1155 = vmax.f32 %v915, %v975
  %v1156 = vmax.f32 %v917, %v977
  %v1157 = vmax.f32 %v646, %v706
  %v1158 = vmax.f32 %v648, %v708
  %v1159 = vmax.f32 %v919, %v979
  %v1160 = vmax.f32 %v921, %v981
  %v1161 = vmax.f32 %v652, %v712
  %v1162 = vmax.f32 %v654, %v714
  %v1163 = vmax.f32 %v925, %v985
  %v1164 = vmax.f32 %v927, %v987
  %v1165 = vmax.f32 %v656, %v716
  %v1166 = vmax.f32 %v658, %v718
  %v1167 = vmax.f32 %v929, %v989
  %v1168 = vmax.f32 %v931, %v991
  %v1169 = vmax.f32 %v662, %v722
  %v1170 = vmax.f32 %v664, %v724
  %v1171 = vmax.f32 %v935, %v995
  %v1172 = vmax.f32 %v937, %v997
  %v1173 = vmax.f32 %v666, %v726
  %v1174 = vmax.f32 %v668, %v728
  %v1175 = vmax.f32 %v939, %v999
  %v1176 = vmax.f32 %v941, %v1001
  %v1177 = vmax.f32 %v672, %v732
  %v1178 = vmax.f32 %v674, %v734
  %v1179 = vmax.f32 %v945, %v1005
  %v1180 = vmax.f32 %v947, %v1007
  %v1181 = vmax.f32 %v676, %v736
  %v1182 = vmax.f32 %v678, %v738
  %v1183 = vmax.f32 %v949, %v1009
  %v1184 = vmax.f32 %v951, %v1011
  %v1185 = vmax.f32 %v682, %v742
  %v1186 = vmax.f32 %v684, %v744
  %v1187 = vmax.f32 %v955, %v1015
  %v1188 = vmax.f32 %v957, %v1017
  %v1189 = vmax.f32 %v686, %v746
  %v1190 = vmax.f32 %v688, %v748
  %v1191 = vmax.f32 %v959, %v1019
  %v1192 = vmax.f32 %v961, %v1021
  %v1193 = vmax.f32 %v692, %v752
  %v1194 = vmax.f32 %v694, %v754
  %v1195 = vmax.f32 %v965, %v1025
  %v1196 = vmax.f32 %v967, %v1027
  %v1197 = vmax.f32 %v696, %v756
  %v1198 = vmax.f32 %v698, %v758
  %v1199 = vmax.f32 %v969, %v1029
  %v1200 = vmax.f32 %v971, %v1031
  %v1201 = vmax.f32 %v762, %v822
  %v1202 = vmax.f32 %v764, %v824
  %v1203 = vmax.f32 %v1035, %v1095
  %v1204 = vmax.f32 %v1037, %v1097
  %v1205 = vmax.f32 %v766, %v826
  %v1206 = vmax.f32 %v768, %v828
  %v1207 = vmax.f32 %v1039, %v1099
  %v1208 = vmax.f32 %v1041, %v1101
  %v1209 = vmax.f32 %v772, %v832
  %v1210 = vmax.f32 %v774, %v834
  %v1211 = vmax.f32 %v1045, %v1105
  %v1212 = vmax.f32 %v1047, %v1107
  %v1213 = vmax.f32 %v776, %v836
  %v1214 = vmax.f32 %v778, %v838
  %v1215 = vmax.f32 %v1049, %v1109
  %v1216 = vmax.f32 %v1051, %v1111
  %v1217 = vmax.f32 %v782, %v842
  %v1218 = vmax.f32 %v784, %v844
  %v1219 = vmax.f32 %v1055, %v1115
  %v1220 = vmax.f32 %v1057, %v1117
  %v1221 = vmax.f32 %v786, %v846
  %v1222 = vmax.f32 %v788, %v848
  %v1223 = vmax.f32 %v1059, %v1119
  %v1224 = vmax.f32 %v1061, %v1121
  %v1225 = vmax.f32 %v792, %v852
  %v1226 = vmax.f32 %v794, %v854
  %v1227 = vmax.f32 %v1065, %v1125
  %v1228 = vmax.f32 %v1067, %v1127
  %v1229 = vmax.f32 %v796, %v856
  %v1230 = vmax.f32 %v798, %v858
  %v1231 = vmax.f32 %v1069, %v1129
  %v1232 = vmax.f32 %v1071, %v1131
  %v1233 = vmax.f32 %v802, %v862
  %v1234 = vmax.f32 %v804, %v864
  %v1235 = vmax.f32 %v1075, %v1135
  %v1236 = vmax.f32 %v1077, %v1137
  %v1237 = vmax.f32 %v806, %v866
  %v1238 = vmax.f32 %v808, %v868
  %v1239 = vmax.f32 %v1079, %v1139
  %v1240 = vmax.f32 %v1081, %v1141
  %v1241 = vmax.f32 %v812, %v872
  %v1242 = vmax.f32 %v814, %v874
  %v1243 = vmax.f32 %v1085, %v1145
  %v1244 = vmax.f32 %v1087, %v1147
  %v1245 = vmax.f32 %v816, %v876
  %v1246 = vmax.f32 %v818, %v878
  %v1247 = vmax.f32 %v1089, %v1149
  %v1248 = vmax.f32 %v1091, %v1151
  %v1249 = vmax.f32 %v1153, %v1155
  %v1250 = vmax.f32 %v1154, %v1156
  %v1251 = vmax.f32 %v1157, %v1159
  %v1252 = vmax.f32 %v1158, %v1160
  %v1253 = vmax.f32 %v1161, %v1163
  %v1254 = vmax.f32 %v1162, %v1164
  %v1255 = vmax.f32 %v1165, %v1167
  %v1256 = vmax.f32 %v1166, %v1168
  %v1257 = vmax.f32 %v1169, %v1171
  %v1258 = vmax.f32 %v1170, %v1172
  %v1259 = vmax.f32 %v1173, %v1175
  %v1260 = vmax.f32 %v1174, %v1176
  %v1261 = vmax.f32 %v1177, %v1179
  %v1262 = vmax.f32 %v1178, %v1180
  %v1263 = vmax.f32 %v1181, %v1183
  %v1264 = vmax.f32 %v1182, %v1184
  %v1265 = vmax.f32 %v1185, %v1187
  %v1266 = vmax.f32 %v1186, %v1188
  %v1267 = vmax.f32 %v1189, %v1191
  %v1268 = vmax.f32 %v1190, %v1192
  %v1269 = vmax.f32 %v1193, %v1195
  %v1270 = vmax.f32 %v1194, %v1196
  %v1271 = vmax.f32 %v1197, %v1199
  %v1272 = vmax.f32 %v1198, %v1200
  %v1273 = vld [vmem:[%s2] sm:$0x3]
  %v1275 = vlaneseq
  %v1276 = vshrl.u32 %v1275, 7
  %v1277 = vsub.s32 0, %v1276
  %v1278 = vrot.slane %v1273, %v1277
  %v1279 = vlaneseq
  %v1280 = vshrl.u32 %v1279, 7
  %v1281 = vsub.s32 1, %v1280
  %v1282 = vrot.slane %v1273, %v1281
  %v1285 = vadd.f32 %v1249, %v1278
  %v1286 = vadd.f32 %v1250, %v1282
  %v1287 = vadd.f32 %v1251, %v1278
  %v1288 = vadd.f32 %v1252, %v1282
  %v1289 = vadd.f32 %v1253, %v1278
  %v1290 = vadd.f32 %v1254, %v1282
  %v1291 = vadd.f32 %v1255, %v1278
  %v1292 = vadd.f32 %v1256, %v1282
  %v1293 = vadd.f32 %v1257, %v1278
  %v1294 = vadd.f32 %v1258, %v1282
  %v1295 = vadd.f32 %v1259, %v1278
  %v1296 = vadd.f32 %v1260, %v1282
  %v1297 = vadd.f32 %v1261, %v1278
  %v1298 = vadd.f32 %v1262, %v1282
  %v1299 = vadd.f32 %v1263, %v1278
  %v1300 = vadd.f32 %v1264, %v1282
  %v1301 = vadd.f32 %v1265, %v1278
  %v1302 = vadd.f32 %v1266, %v1282
  %v1303 = vadd.f32 %v1267, %v1278
  %v1304 = vadd.f32 %v1268, %v1282
  %v1305 = vadd.f32 %v1269, %v1278
  %v1306 = vadd.f32 %v1270, %v1282
  %v1307 = vadd.f32 %v1271, %v1278
  %v1308 = vadd.f32 %v1272, %v1282
  %v1309 = vmax.f32 %v1285, 0.0
  %v1310 = vmax.f32 %v1286, 0.0
  %v1311 = vmax.f32 %v1287, 0.0
  %v1312 = vmax.f32 %v1288, 0.0
  %v1313 = vmax.f32 %v1289, 0.0
  %v1314 = vmax.f32 %v1290, 0.0
  %v1315 = vmax.f32 %v1291, 0.0
  %v1316 = vmax.f32 %v1292, 0.0
  %v1317 = vmax.f32 %v1293, 0.0
  %v1318 = vmax.f32 %v1294, 0.0
  %v1319 = vmax.f32 %v1295, 0.0
  %v1320 = vmax.f32 %v1296, 0.0
  %v1321 = vmax.f32 %v1297, 0.0
  %v1322 = vmax.f32 %v1298, 0.0
  %v1323 = vmax.f32 %v1299, 0.0
  %v1324 = vmax.f32 %v1300, 0.0
  %v1325 = vmax.f32 %v1301, 0.0
  %v1326 = vmax.f32 %v1302, 0.0
  %v1327 = vmax.f32 %v1303, 0.0
  %v1328 = vmax.f32 %v1304, 0.0
  %v1329 = vmax.f32 %v1305, 0.0
  %v1330 = vmax.f32 %v1306, 0.0
  %v1331 = vmax.f32 %v1307, 0.0
  %v1332 = vmax.f32 %v1308, 0.0
  %v1333 = vmax.f32 %v1201, %v1203
  %v1334 = vmax.f32 %v1202, %v1204
  %v1335 = vmax.f32 %v1205, %v1207
  %v1336 = vmax.f32 %v1206, %v1208
  %v1337 = vmax.f32 %v1209, %v1211
  %v1338 = vmax.f32 %v1210, %v1212
  %v1339 = vmax.f32 %v1213, %v1215
  %v1340 = vmax.f32 %v1214, %v1216
  %v1341 = vmax.f32 %v1217, %v1219
  %v1342 = vmax.f32 %v1218, %v1220
  %v1343 = vmax.f32 %v1221, %v1223
  %v1344 = vmax.f32 %v1222, %v1224
  %v1345 = vmax.f32 %v1225, %v1227
  %v1346 = vmax.f32 %v1226, %v1228
  %v1347 = vmax.f32 %v1229, %v1231
  %v1348 = vmax.f32 %v1230, %v1232
  %v1349 = vmax.f32 %v1233, %v1235
  %v1350 = vmax.f32 %v1234, %v1236
  %v1351 = vmax.f32 %v1237, %v1239
  %v1352 = vmax.f32 %v1238, %v1240
  %v1353 = vmax.f32 %v1241, %v1243
  %v1354 = vmax.f32 %v1242, %v1244
  %v1355 = vmax.f32 %v1245, %v1247
  %v1356 = vmax.f32 %v1246, %v1248
  %v1357 = vadd.f32 %v1333, %v1278
  %v1358 = vadd.f32 %v1334, %v1282
  %v1359 = vadd.f32 %v1335, %v1278
  %v1360 = vadd.f32 %v1336, %v1282
  %v1361 = vadd.f32 %v1337, %v1278
  %v1362 = vadd.f32 %v1338, %v1282
  %v1363 = vadd.f32 %v1339, %v1278
  %v1364 = vadd.f32 %v1340, %v1282
  %v1365 = vadd.f32 %v1341, %v1278
  %v1366 = vadd.f32 %v1342, %v1282
  %v1367 = vadd.f32 %v1343, %v1278
  %v1368 = vadd.f32 %v1344, %v1282
  %v1369 = vadd.f32 %v1345, %v1278
  %v1370 = vadd.f32 %v1346, %v1282
  %v1371 = vadd.f32 %v1347, %v1278
  %v1372 = vadd.f32 %v1348, %v1282
  %v1373 = vadd.f32 %v1349, %v1278
  %v1374 = vadd.f32 %v1350, %v1282
  %v1375 = vadd.f32 %v1351, %v1278
  %v1376 = vadd.f32 %v1352, %v1282
  %v1377 = vadd.f32 %v1353, %v1278
  %v1378 = vadd.f32 %v1354, %v1282
  %v1379 = vadd.f32 %v1355, %v1278
  %v1380 = vadd.f32 %v1356, %v1282
  %v1381 = vmax.f32 %v1357, 0.0
  %v1382 = vmax.f32 %v1358, 0.0
  %v1383 = vmax.f32 %v1359, 0.0
  %v1384 = vmax.f32 %v1360, 0.0
  %v1385 = vmax.f32 %v1361, 0.0
  %v1386 = vmax.f32 %v1362, 0.0
  %v1387 = vmax.f32 %v1363, 0.0
  %v1388 = vmax.f32 %v1364, 0.0
  %v1389 = vmax.f32 %v1365, 0.0
  %v1390 = vmax.f32 %v1366, 0.0
  %v1391 = vmax.f32 %v1367, 0.0
  %v1392 = vmax.f32 %v1368, 0.0
  %v1393 = vmax.f32 %v1369, 0.0
  %v1394 = vmax.f32 %v1370, 0.0
  %v1395 = vmax.f32 %v1371, 0.0
  %v1396 = vmax.f32 %v1372, 0.0
  %v1397 = vmax.f32 %v1373, 0.0
  %v1398 = vmax.f32 %v1374, 0.0
  %v1399 = vmax.f32 %v1375, 0.0
  %v1400 = vmax.f32 %v1376, 0.0
  %v1401 = vmax.f32 %v1377, 0.0
  %v1402 = vmax.f32 %v1378, 0.0
  %v1403 = vmax.f32 %v1379, 0.0
  %v1404 = vmax.f32 %v1380, 0.0
  %v1405 = vpack.c.bf16 %v1311, %v1309
  %v1406 = vpack.c.bf16 %v1312, %v1310
  %v1407 = vpack.c.bf16 %v1315, %v1313
  %v1408 = vpack.c.bf16 %v1316, %v1314
  %v1409 = vpack.c.bf16 %v1319, %v1317
  %v1410 = vpack.c.bf16 %v1320, %v1318
  %v1411 = vpack.c.bf16 %v1323, %v1321
  %v1412 = vpack.c.bf16 %v1324, %v1322
  %v1413 = vpack.c.bf16 %v1327, %v1325
  %v1414 = vpack.c.bf16 %v1328, %v1326
  %v1415 = vpack.c.bf16 %v1331, %v1329
  %v1416 = vpack.c.bf16 %v1332, %v1330
  %v1417 = vpack.c.bf16 %v1383, %v1381
  %v1418 = vpack.c.bf16 %v1384, %v1382
  %v1419 = vpack.c.bf16 %v1387, %v1385
  %v1420 = vpack.c.bf16 %v1388, %v1386
  %v1421 = vpack.c.bf16 %v1391, %v1389
  %v1422 = vpack.c.bf16 %v1392, %v1390
  %v1423 = vpack.c.bf16 %v1395, %v1393
  %v1424 = vpack.c.bf16 %v1396, %v1394
  %v1425 = vpack.c.bf16 %v1399, %v1397
  %v1426 = vpack.c.bf16 %v1400, %v1398
  %v1427 = vpack.c.bf16 %v1403, %v1401
  %v1428 = vpack.c.bf16 %v1404, %v1402
  %v1429 = vld [vmem:[%s3] sm:$0xff]
  %v1430 = vld [vmem:[%s3 + $0x8] sm:$0xff]
  %v1431 = vld [vmem:[%s3 + $0x10] sm:$0xff]
  %v1432 = vld [vmem:[%s3 + $0x18] sm:$0xff]
  %v1433 = vld [vmem:[%s3 + $0x20] sm:$0xff]
  %v1434 = vld [vmem:[%s3 + $0x28] sm:$0xff]
  %v1435 = vld [vmem:[%s3 + $0x30] sm:$0xff]
  %v1436 = vld [vmem:[%s3 + $0x38] sm:$0xff]
  %v1437 = vld [vmem:[%s3 + $0x40] sm:$0xff]
  %v1438 = vld [vmem:[%s3 + $0x48] sm:$0xff]
  %v1439 = vld [vmem:[%s3 + $0x50] sm:$0xff]
  %v1440 = vld [vmem:[%s3 + $0x58] sm:$0xff]
  %v1441 = vld [vmem:[%s3 + $0x60] sm:$0xff]
  %v1442 = vld [vmem:[%s3 + $0x68] sm:$0xff]
  %v1443 = vld [vmem:[%s3 + $0x70] sm:$0xff]
  %v1444 = vld [vmem:[%s3 + $0x78] sm:$0xff]
  %v1445 = vld [vmem:[%s3 + $0x80] sm:$0xff]
  %v1446 = vld [vmem:[%s3 + $0x88] sm:$0xff]
  %v1447 = vld [vmem:[%s3 + $0x90] sm:$0xff]
  %v1448 = vld [vmem:[%s3 + $0x98] sm:$0xff]
  %v1449 = vld [vmem:[%s3 + $0xa0] sm:$0xff]
  %v1450 = vld [vmem:[%s3 + $0xa8] sm:$0xff]
  %v1451 = vld [vmem:[%s3 + $0xb0] sm:$0xff]
  %v1452 = vld [vmem:[%s3 + $0xb8] sm:$0xff]
  %s1453 = scalar_lea.vmem %s3, 192
  %v1454 = vld [vmem:[%s1453] sm:$0xff]
  %v1455 = vld [vmem:[%s1453 + $0x8] sm:$0xff]
  %v1456 = vld [vmem:[%s1453 + $0x10] sm:$0xff]
  %v1457 = vld [vmem:[%s1453 + $0x18] sm:$0xff]
  %v1458 = vld [vmem:[%s1453 + $0x20] sm:$0xff]
  %v1459 = vld [vmem:[%s1453 + $0x28] sm:$0xff]
  %v1460 = vld [vmem:[%s1453 + $0x30] sm:$0xff]
  %v1461 = vld [vmem:[%s1453 + $0x38] sm:$0xff]
  %v1462 = vld [vmem:[%s1453 + $0x40] sm:$0xff]
  %v1463 = vld [vmem:[%s1453 + $0x48] sm:$0xff]
  %v1464 = vld [vmem:[%s1453 + $0x50] sm:$0xff]
  %v1465 = vld [vmem:[%s1453 + $0x58] sm:$0xff]
  %v1466 = vld [vmem:[%s1453 + $0x60] sm:$0xff]
  %v1467 = vld [vmem:[%s1453 + $0x68] sm:$0xff]
  %v1468 = vld [vmem:[%s1453 + $0x70] sm:$0xff]
  %v1469 = vld [vmem:[%s1453 + $0x78] sm:$0xff]
  %v1470 = vld [vmem:[%s1453 + $0x80] sm:$0xff]
  %v1471 = vld [vmem:[%s1453 + $0x88] sm:$0xff]
  %v1472 = vld [vmem:[%s1453 + $0x90] sm:$0xff]
  %v1473 = vld [vmem:[%s1453 + $0x98] sm:$0xff]
  %v1474 = vld [vmem:[%s1453 + $0xa0] sm:$0xff]
  %v1475 = vld [vmem:[%s1453 + $0xa8] sm:$0xff]
  %v1476 = vld [vmem:[%s1453 + $0xb0] sm:$0xff]
  %v1477 = vld [vmem:[%s1453 + $0xb8] sm:$0xff]
  %v1502 = vunpack.c.l.b16 %v1454
  %v1503 = vunpack.c.h.b16 %v1454
  %v1504 = vunpack.c.l.b16 %v1455
  %v1505 = vunpack.c.h.b16 %v1455
  %v1506 = vunpack.c.l.b16 %v1456
  %v1507 = vunpack.c.h.b16 %v1456
  %v1508 = vunpack.c.l.b16 %v1457
  %v1509 = vunpack.c.h.b16 %v1457
  %v1510 = vunpack.c.l.b16 %v1458
  %v1511 = vunpack.c.h.b16 %v1458
  %v1512 = vunpack.c.l.b16 %v1459
  %v1513 = vunpack.c.h.b16 %v1459
  %v1514 = vunpack.c.l.b16 %v1460
  %v1515 = vunpack.c.h.b16 %v1460
  %v1516 = vunpack.c.l.b16 %v1461
  %v1517 = vunpack.c.h.b16 %v1461
  %v1518 = vunpack.c.l.b16 %v1462
  %v1519 = vunpack.c.h.b16 %v1462
  %v1520 = vunpack.c.l.b16 %v1463
  %v1521 = vunpack.c.h.b16 %v1463
  %v1522 = vunpack.c.l.b16 %v1464
  %v1523 = vunpack.c.h.b16 %v1464
  %v1524 = vunpack.c.l.b16 %v1465
  %v1525 = vunpack.c.h.b16 %v1465
  %v1526 = vunpack.c.l.b16 %v1466
  %v1527 = vunpack.c.h.b16 %v1466
  %v1528 = vunpack.c.l.b16 %v1467
  %v1529 = vunpack.c.h.b16 %v1467
  %v1530 = vunpack.c.l.b16 %v1468
  %v1531 = vunpack.c.h.b16 %v1468
  %v1532 = vunpack.c.l.b16 %v1469
  %v1533 = vunpack.c.h.b16 %v1469
  %v1534 = vunpack.c.l.b16 %v1470
  %v1535 = vunpack.c.h.b16 %v1470
  %v1536 = vunpack.c.l.b16 %v1471
  %v1537 = vunpack.c.h.b16 %v1471
  %v1538 = vunpack.c.l.b16 %v1472
  %v1539 = vunpack.c.h.b16 %v1472
  %v1540 = vunpack.c.l.b16 %v1473
  %v1541 = vunpack.c.h.b16 %v1473
  %v1542 = vunpack.c.l.b16 %v1474
  %v1543 = vunpack.c.h.b16 %v1474
  %v1544 = vunpack.c.l.b16 %v1475
  %v1545 = vunpack.c.h.b16 %v1475
  %v1546 = vunpack.c.l.b16 %v1476
  %v1547 = vunpack.c.h.b16 %v1476
  %v1548 = vunpack.c.l.b16 %v1477
  %v1549 = vunpack.c.h.b16 %v1477
  %v1550 = vpack.c.b16 %v1504, %v1502
  %v1551 = vpack.c.b16 %v1505, %v1503
  %v1552 = vpack.c.b16 %v1508, %v1506
  %v1553 = vpack.c.b16 %v1509, %v1507
  %v1554 = vpack.c.b16 %v1512, %v1510
  %v1555 = vpack.c.b16 %v1513, %v1511
  %v1556 = vpack.c.b16 %v1516, %v1514
  %v1557 = vpack.c.b16 %v1517, %v1515
  %v1558 = vpack.c.b16 %v1520, %v1518
  %v1559 = vpack.c.b16 %v1521, %v1519
  %v1560 = vpack.c.b16 %v1524, %v1522
  %v1561 = vpack.c.b16 %v1525, %v1523
  %v1562 = vpack.c.b16 %v1528, %v1526
  %v1563 = vpack.c.b16 %v1529, %v1527
  %v1564 = vpack.c.b16 %v1532, %v1530
  %v1565 = vpack.c.b16 %v1533, %v1531
  %v1566 = vpack.c.b16 %v1536, %v1534
  %v1567 = vpack.c.b16 %v1537, %v1535
  %v1568 = vpack.c.b16 %v1540, %v1538
  %v1569 = vpack.c.b16 %v1541, %v1539
  %v1570 = vpack.c.b16 %v1544, %v1542
  %v1571 = vpack.c.b16 %v1545, %v1543
  %v1572 = vpack.c.b16 %v1548, %v1546
  %v1573 = vpack.c.b16 %v1549, %v1547
  %vm1598 = vcmask 523264
  %v1600 = vsel %vm1598, %v1418, 0
  %v1603 = vsel %vm1598, %v1420, 0
  %v1606 = vsel %vm1598, %v1422, 0
  %v1609 = vsel %vm1598, %v1424, 0
  %v1612 = vsel %vm1598, %v1426, 0
  %1614 = vmatprep.subr.bf16.mxu0 %v1565
  %1615 = vmatpush1.bf16.msra.mxu0 %v1564
  %1616 = vmatprep.subr.bf16.mxu0 %v1563
  %1617 = vmatpush1.bf16.msra.mxu0 %v1562
  %1618 = vmatprep.subr.bf16.mxu0 %v1561
  %1619 = vmatpush1.bf16.msra.mxu0 %v1560
  %1620 = vmatprep.subr.bf16.mxu0 %v1559
  %1621 = vmatpush1.bf16.msra.mxu0 %v1558
  %1622 = vmatprep.subr.bf16.mxu0 %v1557
  %1623 = vmatpush1.bf16.msra.mxu0 %v1556
  %1624 = vmatprep.subr.bf16.mxu0 %v1555
  %1625 = vmatpush1.bf16.msra.mxu0 %v1554
  %1626 = vmatprep.subr.bf16.mxu0 %v1553
  %1627 = vmatpush1.bf16.msra.mxu0 %v1552
  %1628 = vmatprep.subr.bf16.mxu0 %v1551
  %1629 = vmatpush1.bf16.msra.mxu0 %v1550
  %1630 = vmatprep.subr.bf16.mxu0 0
  %1631 = vmatpush2.bf16.msra.mxu0 0
  %1632 = vmatprep.subr.bf16.mxu0 0
  %1633 = vmatpush2.bf16.msra.mxu0 0
  %1634 = vmatprep.subr.bf16.mxu0 0
  %1635 = vmatpush2.bf16.msra.mxu0 0
  %1636 = vmatprep.subr.bf16.mxu0 0
  %1637 = vmatpush2.bf16.msra.mxu0 0
  %1638 = vmatprep.subr.bf16.mxu0 %v1573
  %1639 = vmatpush2.bf16.msra.mxu0 %v1572
  %1640 = vmatprep.subr.bf16.mxu0 %v1571
  %1641 = vmatpush2.bf16.msra.mxu0 %v1570
  %1642 = vmatprep.subr.bf16.mxu0 %v1569
  %1643 = vmatpush2.bf16.msra.mxu0 %v1568
  %1644 = vmatprep.subr.bf16.mxu0 %v1567
  %1645 = vmatpush2.bf16.msra.mxu0 %v1566
  %1646 = vmatprep.mubr.bf16.mxu0 %v1600
  %1647 = vmatmul.mubr.bf16.gmra.mxu0 %v1417
  %v1648 = vpop.f32.mrf.mxu0
  %v1649 = vadd.f32 0.0, %v1648
  %v1650 = vpop.f32.mrf.mxu0
  %v1651 = vadd.f32 0.0, %v1650
  %v1652 = vpop.f32.mrf.mxu0
  %v1653 = vadd.f32 0.0, %v1652
  %v1654 = vpop.f32.mrf.mxu0
  %v1655 = vadd.f32 0.0, %v1654
  %1656 = vmatprep.mubr.bf16.mxu0 %v1603
  %1657 = vmatmul.mubr.bf16.gmra.mxu0 %v1419
  %v1658 = vpop.f32.mrf.mxu0
  %v1659 = vadd.f32 0.0, %v1658
  %v1660 = vpop.f32.mrf.mxu0
  %v1661 = vadd.f32 0.0, %v1660
  %v1662 = vpop.f32.mrf.mxu0
  %v1663 = vadd.f32 0.0, %v1662
  %v1664 = vpop.f32.mrf.mxu0
  %v1665 = vadd.f32 0.0, %v1664
  %1666 = vmatprep.mubr.bf16.mxu0 %v1606
  %1667 = vmatmul.mubr.bf16.gmra.mxu0 %v1421
  %v1668 = vpop.f32.mrf.mxu0
  %v1669 = vadd.f32 0.0, %v1668
  %v1670 = vpop.f32.mrf.mxu0
  %v1671 = vadd.f32 0.0, %v1670
  %v1672 = vpop.f32.mrf.mxu0
  %v1673 = vadd.f32 0.0, %v1672
  %v1674 = vpop.f32.mrf.mxu0
  %v1675 = vadd.f32 0.0, %v1674
  %1676 = vmatprep.mubr.bf16.mxu0 %v1609
  %1677 = vmatmul.mubr.bf16.gmra.mxu0 %v1423
  %v1678 = vpop.f32.mrf.mxu0
  %v1679 = vadd.f32 0.0, %v1678
  %v1680 = vpop.f32.mrf.mxu0
  %v1681 = vadd.f32 0.0, %v1680
  %v1682 = vpop.f32.mrf.mxu0
  %v1683 = vadd.f32 0.0, %v1682
  %v1684 = vpop.f32.mrf.mxu0
  %v1685 = vadd.f32 0.0, %v1684
  %1686 = vmatprep.mubr.bf16.mxu0 %v1612
  %1687 = vmatmul.mubr.bf16.gmra.mxu0 %v1425
  %v1688 = vpop.f32.mrf.mxu0
  %v1689 = vadd.f32 0.0, %v1688
  %v1690 = vpop.f32.mrf.mxu0
  %v1691 = vadd.f32 0.0, %v1690
  %v1692 = vpop.f32.mrf.mxu0
  %v1693 = vadd.f32 0.0, %v1692
  %v1694 = vpop.f32.mrf.mxu0
  %v1695 = vadd.f32 0.0, %v1694
  %1696 = vdwg.mxu0
  %v1721 = vunpack.c.l.b16 %v1429
  %v1722 = vunpack.c.h.b16 %v1429
  %v1723 = vunpack.c.l.b16 %v1430
  %v1724 = vunpack.c.h.b16 %v1430
  %v1725 = vunpack.c.l.b16 %v1431
  %v1726 = vunpack.c.h.b16 %v1431
  %v1727 = vunpack.c.l.b16 %v1432
  %v1728 = vunpack.c.h.b16 %v1432
  %v1729 = vunpack.c.l.b16 %v1433
  %v1730 = vunpack.c.h.b16 %v1433
  %v1731 = vunpack.c.l.b16 %v1434
  %v1732 = vunpack.c.h.b16 %v1434
  %v1733 = vunpack.c.l.b16 %v1435
  %v1734 = vunpack.c.h.b16 %v1435
  %v1735 = vunpack.c.l.b16 %v1436
  %v1736 = vunpack.c.h.b16 %v1436
  %v1737 = vunpack.c.l.b16 %v1437
  %v1738 = vunpack.c.h.b16 %v1437
  %v1739 = vunpack.c.l.b16 %v1438
  %v1740 = vunpack.c.h.b16 %v1438
  %v1741 = vunpack.c.l.b16 %v1439
  %v1742 = vunpack.c.h.b16 %v1439
  %v1743 = vunpack.c.l.b16 %v1440
  %v1744 = vunpack.c.h.b16 %v1440
  %v1745 = vunpack.c.l.b16 %v1441
  %v1746 = vunpack.c.h.b16 %v1441
  %v1747 = vunpack.c.l.b16 %v1442
  %v1748 = vunpack.c.h.b16 %v1442
  %v1749 = vunpack.c.l.b16 %v1443
  %v1750 = vunpack.c.h.b16 %v1443
  %v1751 = vunpack.c.l.b16 %v1444
  %v1752 = vunpack.c.h.b16 %v1444
  %v1753 = vunpack.c.l.b16 %v1445
  %v1754 = vunpack.c.h.b16 %v1445
  %v1755 = vunpack.c.l.b16 %v1446
  %v1756 = vunpack.c.h.b16 %v1446
  %v1757 = vunpack.c.l.b16 %v1447
  %v1758 = vunpack.c.h.b16 %v1447
  %v1759 = vunpack.c.l.b16 %v1448
  %v1760 = vunpack.c.h.b16 %v1448
  %v1761 = vunpack.c.l.b16 %v1449
  %v1762 = vunpack.c.h.b16 %v1449
  %v1763 = vunpack.c.l.b16 %v1450
  %v1764 = vunpack.c.h.b16 %v1450
  %v1765 = vunpack.c.l.b16 %v1451
  %v1766 = vunpack.c.h.b16 %v1451
  %v1767 = vunpack.c.l.b16 %v1452
  %v1768 = vunpack.c.h.b16 %v1452
  %v1769 = vpack.c.b16 %v1723, %v1721
  %v1770 = vpack.c.b16 %v1724, %v1722
  %v1771 = vpack.c.b16 %v1727, %v1725
  %v1772 = vpack.c.b16 %v1728, %v1726
  %v1773 = vpack.c.b16 %v1731, %v1729
  %v1774 = vpack.c.b16 %v1732, %v1730
  %v1775 = vpack.c.b16 %v1735, %v1733
  %v1776 = vpack.c.b16 %v1736, %v1734
  %v1777 = vpack.c.b16 %v1739, %v1737
  %v1778 = vpack.c.b16 %v1740, %v1738
  %v1779 = vpack.c.b16 %v1743, %v1741
  %v1780 = vpack.c.b16 %v1744, %v1742
  %v1781 = vpack.c.b16 %v1747, %v1745
  %v1782 = vpack.c.b16 %v1748, %v1746
  %v1783 = vpack.c.b16 %v1751, %v1749
  %v1784 = vpack.c.b16 %v1752, %v1750
  %v1785 = vpack.c.b16 %v1755, %v1753
  %v1786 = vpack.c.b16 %v1756, %v1754
  %v1787 = vpack.c.b16 %v1759, %v1757
  %v1788 = vpack.c.b16 %v1760, %v1758
  %v1789 = vpack.c.b16 %v1763, %v1761
  %v1790 = vpack.c.b16 %v1764, %v1762
  %v1791 = vpack.c.b16 %v1767, %v1765
  %v1792 = vpack.c.b16 %v1768, %v1766
  %v1818 = vsel %vm1598, %v1406, 0
  %v1821 = vsel %vm1598, %v1408, 0
  %v1824 = vsel %vm1598, %v1410, 0
  %v1827 = vsel %vm1598, %v1412, 0
  %v1830 = vsel %vm1598, %v1414, 0
  %1832 = vmatprep.subr.bf16.mxu0 %v1784
  %1833 = vmatpush1.bf16.msra.mxu0 %v1783
  %1834 = vmatprep.subr.bf16.mxu0 %v1782
  %1835 = vmatpush1.bf16.msra.mxu0 %v1781
  %1836 = vmatprep.subr.bf16.mxu0 %v1780
  %1837 = vmatpush1.bf16.msra.mxu0 %v1779
  %1838 = vmatprep.subr.bf16.mxu0 %v1778
  %1839 = vmatpush1.bf16.msra.mxu0 %v1777
  %1840 = vmatprep.subr.bf16.mxu0 %v1776
  %1841 = vmatpush1.bf16.msra.mxu0 %v1775
  %1842 = vmatprep.subr.bf16.mxu0 %v1774
  %1843 = vmatpush1.bf16.msra.mxu0 %v1773
  %1844 = vmatprep.subr.bf16.mxu0 %v1772
  %1845 = vmatpush1.bf16.msra.mxu0 %v1771
  %1846 = vmatprep.subr.bf16.mxu0 %v1770
  %1847 = vmatpush1.bf16.msra.mxu0 %v1769
  %1848 = vmatprep.subr.bf16.mxu0 0
  %1849 = vmatpush2.bf16.msra.mxu0 0
  %1850 = vmatprep.subr.bf16.mxu0 0
  %1851 = vmatpush2.bf16.msra.mxu0 0
  %1852 = vmatprep.subr.bf16.mxu0 0
  %1853 = vmatpush2.bf16.msra.mxu0 0
  %1854 = vmatprep.subr.bf16.mxu0 0
  %1855 = vmatpush2.bf16.msra.mxu0 0
  %1856 = vmatprep.subr.bf16.mxu0 %v1792
  %1857 = vmatpush2.bf16.msra.mxu0 %v1791
  %1858 = vmatprep.subr.bf16.mxu0 %v1790
  %1859 = vmatpush2.bf16.msra.mxu0 %v1789
  %1860 = vmatprep.subr.bf16.mxu0 %v1788
  %1861 = vmatpush2.bf16.msra.mxu0 %v1787
  %1862 = vmatprep.subr.bf16.mxu0 %v1786
  %1863 = vmatpush2.bf16.msra.mxu0 %v1785
  %1864 = vmatprep.mubr.bf16.mxu0 %v1818
  %1865 = vmatmul.mubr.bf16.gmra.mxu0 %v1405
  %v1866 = vpop.f32.mrf.mxu0
  %v1867 = vadd.f32 %v1649, %v1866
  %v1868 = vpop.f32.mrf.mxu0
  %v1869 = vadd.f32 %v1651, %v1868
  %v1870 = vpop.f32.mrf.mxu0
  %v1871 = vadd.f32 %v1653, %v1870
  %v1872 = vpop.f32.mrf.mxu0
  %v1873 = vadd.f32 %v1655, %v1872
  %1874 = vmatprep.mubr.bf16.mxu0 %v1821
  %1875 = vmatmul.mubr.bf16.gmra.mxu0 %v1407
  %v1876 = vpop.f32.mrf.mxu0
  %v1877 = vadd.f32 %v1659, %v1876
  %v1878 = vpop.f32.mrf.mxu0
  %v1879 = vadd.f32 %v1661, %v1878
  %v1880 = vpop.f32.mrf.mxu0
  %v1881 = vadd.f32 %v1663, %v1880
  %v1882 = vpop.f32.mrf.mxu0
  %v1883 = vadd.f32 %v1665, %v1882
  %1884 = vmatprep.mubr.bf16.mxu0 %v1824
  %1885 = vmatmul.mubr.bf16.gmra.mxu0 %v1409
  %v1886 = vpop.f32.mrf.mxu0
  %v1887 = vadd.f32 %v1669, %v1886
  %v1888 = vpop.f32.mrf.mxu0
  %v1889 = vadd.f32 %v1671, %v1888
  %v1890 = vpop.f32.mrf.mxu0
  %v1891 = vadd.f32 %v1673, %v1890
  %v1892 = vpop.f32.mrf.mxu0
  %v1893 = vadd.f32 %v1675, %v1892
  %1894 = vmatprep.mubr.bf16.mxu0 %v1827
  %1895 = vmatmul.mubr.bf16.gmra.mxu0 %v1411
  %v1896 = vpop.f32.mrf.mxu0
  %v1897 = vadd.f32 %v1679, %v1896
  %v1898 = vpop.f32.mrf.mxu0
  %v1899 = vadd.f32 %v1681, %v1898
  %v1900 = vpop.f32.mrf.mxu0
  %v1901 = vadd.f32 %v1683, %v1900
  %v1902 = vpop.f32.mrf.mxu0
  %v1903 = vadd.f32 %v1685, %v1902
  %1904 = vmatprep.mubr.bf16.mxu0 %v1830
  %1905 = vmatmul.mubr.bf16.gmra.mxu0 %v1413
  %v1906 = vpop.f32.mrf.mxu0
  %v1907 = vadd.f32 %v1689, %v1906
  %v1908 = vpop.f32.mrf.mxu0
  %v1909 = vadd.f32 %v1691, %v1908
  %v1910 = vpop.f32.mrf.mxu0
  %v1911 = vadd.f32 %v1693, %v1910
  %v1912 = vpop.f32.mrf.mxu0
  %v1913 = vadd.f32 %v1695, %v1912
  %1914 = vdwg.mxu0
  %s1915 = scalar_lea.vmem %s3, 384
  %v1916 = vld [vmem:[%s1915] sm:$0xff]
  %v1917 = vld [vmem:[%s1915 + $0x8] sm:$0xff]
  %v1918 = vld [vmem:[%s1915 + $0x10] sm:$0xff]
  %v1919 = vld [vmem:[%s1915 + $0x18] sm:$0xff]
  %v1920 = vld [vmem:[%s1915 + $0x20] sm:$0xff]
  %v1921 = vld [vmem:[%s1915 + $0x28] sm:$0xff]
  %v1922 = vld [vmem:[%s1915 + $0x30] sm:$0xff]
  %v1923 = vld [vmem:[%s1915 + $0x38] sm:$0xff]
  %v1924 = vld [vmem:[%s1915 + $0x40] sm:$0xff]
  %v1925 = vld [vmem:[%s1915 + $0x48] sm:$0xff]
  %v1926 = vld [vmem:[%s1915 + $0x50] sm:$0xff]
  %v1927 = vld [vmem:[%s1915 + $0x58] sm:$0xff]
  %v1928 = vld [vmem:[%s1915 + $0x60] sm:$0xff]
  %v1929 = vld [vmem:[%s1915 + $0x68] sm:$0xff]
  %v1930 = vld [vmem:[%s1915 + $0x70] sm:$0xff]
  %v1931 = vld [vmem:[%s1915 + $0x78] sm:$0xff]
  %v1932 = vld [vmem:[%s1915 + $0x80] sm:$0xff]
  %v1933 = vld [vmem:[%s1915 + $0x88] sm:$0xff]
  %v1934 = vld [vmem:[%s1915 + $0x90] sm:$0xff]
  %v1935 = vld [vmem:[%s1915 + $0x98] sm:$0xff]
  %v1936 = vld [vmem:[%s1915 + $0xa0] sm:$0xff]
  %v1937 = vld [vmem:[%s1915 + $0xa8] sm:$0xff]
  %v1938 = vld [vmem:[%s1915 + $0xb0] sm:$0xff]
  %v1939 = vld [vmem:[%s1915 + $0xb8] sm:$0xff]
  %v1964 = vunpack.c.l.b16 %v1916
  %v1965 = vunpack.c.h.b16 %v1916
  %v1966 = vunpack.c.l.b16 %v1917
  %v1967 = vunpack.c.h.b16 %v1917
  %v1968 = vunpack.c.l.b16 %v1918
  %v1969 = vunpack.c.h.b16 %v1918
  %v1970 = vunpack.c.l.b16 %v1919
  %v1971 = vunpack.c.h.b16 %v1919
  %v1972 = vunpack.c.l.b16 %v1920
  %v1973 = vunpack.c.h.b16 %v1920
  %v1974 = vunpack.c.l.b16 %v1921
  %v1975 = vunpack.c.h.b16 %v1921
  %v1976 = vunpack.c.l.b16 %v1922
  %v1977 = vunpack.c.h.b16 %v1922
  %v1978 = vunpack.c.l.b16 %v1923
  %v1979 = vunpack.c.h.b16 %v1923
  %v1980 = vunpack.c.l.b16 %v1924
  %v1981 = vunpack.c.h.b16 %v1924
  %v1982 = vunpack.c.l.b16 %v1925
  %v1983 = vunpack.c.h.b16 %v1925
  %v1984 = vunpack.c.l.b16 %v1926
  %v1985 = vunpack.c.h.b16 %v1926
  %v1986 = vunpack.c.l.b16 %v1927
  %v1987 = vunpack.c.h.b16 %v1927
  %v1988 = vunpack.c.l.b16 %v1928
  %v1989 = vunpack.c.h.b16 %v1928
  %v1990 = vunpack.c.l.b16 %v1929
  %v1991 = vunpack.c.h.b16 %v1929
  %v1992 = vunpack.c.l.b16 %v1930
  %v1993 = vunpack.c.h.b16 %v1930
  %v1994 = vunpack.c.l.b16 %v1931
  %v1995 = vunpack.c.h.b16 %v1931
  %v1996 = vunpack.c.l.b16 %v1932
  %v1997 = vunpack.c.h.b16 %v1932
  %v1998 = vunpack.c.l.b16 %v1933
  %v1999 = vunpack.c.h.b16 %v1933
  %v2000 = vunpack.c.l.b16 %v1934
  %v2001 = vunpack.c.h.b16 %v1934
  %v2002 = vunpack.c.l.b16 %v1935
  %v2003 = vunpack.c.h.b16 %v1935
  %v2004 = vunpack.c.l.b16 %v1936
  %v2005 = vunpack.c.h.b16 %v1936
  %v2006 = vunpack.c.l.b16 %v1937
  %v2007 = vunpack.c.h.b16 %v1937
  %v2008 = vunpack.c.l.b16 %v1938
  %v2009 = vunpack.c.h.b16 %v1938
  %v2010 = vunpack.c.l.b16 %v1939
  %v2011 = vunpack.c.h.b16 %v1939
  %v2012 = vpack.c.b16 %v1966, %v1964
  %v2013 = vpack.c.b16 %v1967, %v1965
  %v2014 = vpack.c.b16 %v1970, %v1968
  %v2015 = vpack.c.b16 %v1971, %v1969
  %v2016 = vpack.c.b16 %v1974, %v1972
  %v2017 = vpack.c.b16 %v1975, %v1973
  %v2018 = vpack.c.b16 %v1978, %v1976
  %v2019 = vpack.c.b16 %v1979, %v1977
  %v2020 = vpack.c.b16 %v1982, %v1980
  %v2021 = vpack.c.b16 %v1983, %v1981
  %v2022 = vpack.c.b16 %v1986, %v1984
  %v2023 = vpack.c.b16 %v1987, %v1985
  %v2024 = vpack.c.b16 %v1990, %v1988
  %v2025 = vpack.c.b16 %v1991, %v1989
  %v2026 = vpack.c.b16 %v1994, %v1992
  %v2027 = vpack.c.b16 %v1995, %v1993
  %v2028 = vpack.c.b16 %v1998, %v1996
  %v2029 = vpack.c.b16 %v1999, %v1997
  %v2030 = vpack.c.b16 %v2002, %v2000
  %v2031 = vpack.c.b16 %v2003, %v2001
  %v2032 = vpack.c.b16 %v2006, %v2004
  %v2033 = vpack.c.b16 %v2007, %v2005
  %v2034 = vpack.c.b16 %v2010, %v2008
  %v2035 = vpack.c.b16 %v2011, %v2009
  %v2061 = vsel %vm1598, %v1416, 0
  %2063 = vmatprep.subr.bf16.mxu0 %v2027
  %2064 = vmatpush1.bf16.msra.mxu0 %v2026
  %2065 = vmatprep.subr.bf16.mxu0 %v2025
  %2066 = vmatpush1.bf16.msra.mxu0 %v2024
  %2067 = vmatprep.subr.bf16.mxu0 %v2023
  %2068 = vmatpush1.bf16.msra.mxu0 %v2022
  %2069 = vmatprep.subr.bf16.mxu0 %v2021
  %2070 = vmatpush1.bf16.msra.mxu0 %v2020
  %2071 = vmatprep.subr.bf16.mxu0 %v2019
  %2072 = vmatpush1.bf16.msra.mxu0 %v2018
  %2073 = vmatprep.subr.bf16.mxu0 %v2017
  %2074 = vmatpush1.bf16.msra.mxu0 %v2016
  %2075 = vmatprep.subr.bf16.mxu0 %v2015
  %2076 = vmatpush1.bf16.msra.mxu0 %v2014
  %2077 = vmatprep.subr.bf16.mxu0 %v2013
  %2078 = vmatpush1.bf16.msra.mxu0 %v2012
  %2079 = vmatprep.subr.bf16.mxu0 0
  %2080 = vmatpush2.bf16.msra.mxu0 0
  %2081 = vmatprep.subr.bf16.mxu0 0
  %2082 = vmatpush2.bf16.msra.mxu0 0
  %2083 = vmatprep.subr.bf16.mxu0 0
  %2084 = vmatpush2.bf16.msra.mxu0 0
  %2085 = vmatprep.subr.bf16.mxu0 0
  %2086 = vmatpush2.bf16.msra.mxu0 0
  %2087 = vmatprep.subr.bf16.mxu0 %v2035
  %2088 = vmatpush2.bf16.msra.mxu0 %v2034
  %2089 = vmatprep.subr.bf16.mxu0 %v2033
  %2090 = vmatpush2.bf16.msra.mxu0 %v2032
  %2091 = vmatprep.subr.bf16.mxu0 %v2031
  %2092 = vmatpush2.bf16.msra.mxu0 %v2030
  %2093 = vmatprep.subr.bf16.mxu0 %v2029
  %2094 = vmatpush2.bf16.msra.mxu0 %v2028
  %2095 = vmatprep.mubr.bf16.mxu0 %v1821
  %2096 = vmatmul.mubr.bf16.gmra.mxu0 %v1407
  %v2097 = vpop.f32.mrf.mxu0
  %v2098 = vadd.f32 0.0, %v2097
  %v2099 = vpop.f32.mrf.mxu0
  %v2100 = vadd.f32 0.0, %v2099
  %v2101 = vpop.f32.mrf.mxu0
  %v2102 = vadd.f32 0.0, %v2101
  %v2103 = vpop.f32.mrf.mxu0
  %v2104 = vadd.f32 0.0, %v2103
  %2105 = vmatprep.mubr.bf16.mxu0 %v1824
  %2106 = vmatmul.mubr.bf16.gmra.mxu0 %v1409
  %v2107 = vpop.f32.mrf.mxu0
  %v2108 = vadd.f32 0.0, %v2107
  %v2109 = vpop.f32.mrf.mxu0
  %v2110 = vadd.f32 0.0, %v2109
  %v2111 = vpop.f32.mrf.mxu0
  %v2112 = vadd.f32 0.0, %v2111
  %v2113 = vpop.f32.mrf.mxu0
  %v2114 = vadd.f32 0.0, %v2113
  %2115 = vmatprep.mubr.bf16.mxu0 %v1827
  %2116 = vmatmul.mubr.bf16.gmra.mxu0 %v1411
  %v2117 = vpop.f32.mrf.mxu0
  %v2118 = vadd.f32 0.0, %v2117
  %v2119 = vpop.f32.mrf.mxu0
  %v2120 = vadd.f32 0.0, %v2119
  %v2121 = vpop.f32.mrf.mxu0
  %v2122 = vadd.f32 0.0, %v2121
  %v2123 = vpop.f32.mrf.mxu0
  %v2124 = vadd.f32 0.0, %v2123
  %2125 = vmatprep.mubr.bf16.mxu0 %v1830
  %2126 = vmatmul.mubr.bf16.gmra.mxu0 %v1413
  %v2127 = vpop.f32.mrf.mxu0
  %v2128 = vadd.f32 0.0, %v2127
  %v2129 = vpop.f32.mrf.mxu0
  %v2130 = vadd.f32 0.0, %v2129
  %v2131 = vpop.f32.mrf.mxu0
  %v2132 = vadd.f32 0.0, %v2131
  %v2133 = vpop.f32.mrf.mxu0
  %v2134 = vadd.f32 0.0, %v2133
  %2135 = vmatprep.mubr.bf16.mxu0 %v2061
  %2136 = vmatmul.mubr.bf16.gmra.mxu0 %v1415
  %v2137 = vpop.f32.mrf.mxu0
  %v2138 = vadd.f32 0.0, %v2137
  %v2139 = vpop.f32.mrf.mxu0
  %v2140 = vadd.f32 0.0, %v2139
  %v2141 = vpop.f32.mrf.mxu0
  %v2142 = vadd.f32 0.0, %v2141
  %v2143 = vpop.f32.mrf.mxu0
  %v2144 = vadd.f32 0.0, %v2143
  %2145 = vdwg.mxu0
  %v2146 = vadd.f32 %v1867, %v2098
  %v2147 = vadd.f32 %v1869, %v2100
  %v2148 = vadd.f32 %v1871, %v2102
  %v2149 = vadd.f32 %v1873, %v2104
  %v2150 = vadd.f32 %v1877, %v2108
  %v2151 = vadd.f32 %v1879, %v2110
  %v2152 = vadd.f32 %v1881, %v2112
  %v2153 = vadd.f32 %v1883, %v2114
  %v2154 = vadd.f32 %v1887, %v2118
  %v2155 = vadd.f32 %v1889, %v2120
  %v2156 = vadd.f32 %v1891, %v2122
  %v2157 = vadd.f32 %v1893, %v2124
  %v2158 = vadd.f32 %v1897, %v2128
  %v2159 = vadd.f32 %v1899, %v2130
  %v2160 = vadd.f32 %v1901, %v2132
  %v2161 = vadd.f32 %v1903, %v2134
  %v2162 = vadd.f32 %v1907, %v2138
  %v2163 = vadd.f32 %v1909, %v2140
  %v2164 = vadd.f32 %v1911, %v2142
  %v2165 = vadd.f32 %v1913, %v2144
  %2166 = vmatprep.subr.bf16.mxu0 %v1565
  %2167 = vmatpush1.bf16.msra.mxu0 %v1564
  %2168 = vmatprep.subr.bf16.mxu0 %v1563
  %2169 = vmatpush1.bf16.msra.mxu0 %v1562
  %2170 = vmatprep.subr.bf16.mxu0 %v1561
  %2171 = vmatpush1.bf16.msra.mxu0 %v1560
  %2172 = vmatprep.subr.bf16.mxu0 %v1559
  %2173 = vmatpush1.bf16.msra.mxu0 %v1558
  %2174 = vmatprep.subr.bf16.mxu0 %v1557
  %2175 = vmatpush1.bf16.msra.mxu0 %v1556
  %2176 = vmatprep.subr.bf16.mxu0 %v1555
  %2177 = vmatpush1.bf16.msra.mxu0 %v1554
  %2178 = vmatprep.subr.bf16.mxu0 %v1553
  %2179 = vmatpush1.bf16.msra.mxu0 %v1552
  %2180 = vmatprep.subr.bf16.mxu0 %v1551
  %2181 = vmatpush1.bf16.msra.mxu0 %v1550
  %2182 = vmatprep.subr.bf16.mxu0 0
  %2183 = vmatpush2.bf16.msra.mxu0 0
  %2184 = vmatprep.subr.bf16.mxu0 0
  %2185 = vmatpush2.bf16.msra.mxu0 0
  %2186 = vmatprep.subr.bf16.mxu0 0
  %2187 = vmatpush2.bf16.msra.mxu0 0
  %2188 = vmatprep.subr.bf16.mxu0 0
  %2189 = vmatpush2.bf16.msra.mxu0 0
  %2190 = vmatprep.subr.bf16.mxu0 %v1573
  %2191 = vmatpush2.bf16.msra.mxu0 %v1572
  %2192 = vmatprep.subr.bf16.mxu0 %v1571
  %2193 = vmatpush2.bf16.msra.mxu0 %v1570
  %2194 = vmatprep.subr.bf16.mxu0 %v1569
  %2195 = vmatpush2.bf16.msra.mxu0 %v1568
  %2196 = vmatprep.subr.bf16.mxu0 %v1567
  %2197 = vmatpush2.bf16.msra.mxu0 %v1566
  %2198 = vmatprep.mubr.bf16.mxu0 %v1821
  %2199 = vmatmul.mubr.bf16.gmra.mxu0 %v1407
  %v2200 = vpop.f32.mrf.mxu0
  %v2201 = vadd.f32 0.0, %v2200
  %v2202 = vpop.f32.mrf.mxu0
  %v2203 = vadd.f32 0.0, %v2202
  %v2204 = vpop.f32.mrf.mxu0
  %v2205 = vadd.f32 0.0, %v2204
  %v2206 = vpop.f32.mrf.mxu0
  %v2207 = vadd.f32 0.0, %v2206
  %2208 = vmatprep.mubr.bf16.mxu0 %v1824
  %2209 = vmatmul.mubr.bf16.gmra.mxu0 %v1409
  %v2210 = vpop.f32.mrf.mxu0
  %v2211 = vadd.f32 0.0, %v2210
  %v2212 = vpop.f32.mrf.mxu0
  %v2213 = vadd.f32 0.0, %v2212
  %v2214 = vpop.f32.mrf.mxu0
  %v2215 = vadd.f32 0.0, %v2214
  %v2216 = vpop.f32.mrf.mxu0
  %v2217 = vadd.f32 0.0, %v2216
  %2218 = vmatprep.mubr.bf16.mxu0 %v1827
  %2219 = vmatmul.mubr.bf16.gmra.mxu0 %v1411
  %v2220 = vpop.f32.mrf.mxu0
  %v2221 = vadd.f32 0.0, %v2220
  %v2222 = vpop.f32.mrf.mxu0
  %v2223 = vadd.f32 0.0, %v2222
  %v2224 = vpop.f32.mrf.mxu0
  %v2225 = vadd.f32 0.0, %v2224
  %v2226 = vpop.f32.mrf.mxu0
  %v2227 = vadd.f32 0.0, %v2226
  %2228 = vmatprep.mubr.bf16.mxu0 %v1830
  %2229 = vmatmul.mubr.bf16.gmra.mxu0 %v1413
  %v2230 = vpop.f32.mrf.mxu0
  %v2231 = vadd.f32 0.0, %v2230
  %v2232 = vpop.f32.mrf.mxu0
  %v2233 = vadd.f32 0.0, %v2232
  %v2234 = vpop.f32.mrf.mxu0
  %v2235 = vadd.f32 0.0, %v2234
  %v2236 = vpop.f32.mrf.mxu0
  %v2237 = vadd.f32 0.0, %v2236
  %2238 = vmatprep.mubr.bf16.mxu0 %v2061
  %2239 = vmatmul.mubr.bf16.gmra.mxu0 %v1415
  %v2240 = vpop.f32.mrf.mxu0
  %v2241 = vadd.f32 0.0, %v2240
  %v2242 = vpop.f32.mrf.mxu0
  %v2243 = vadd.f32 0.0, %v2242
  %v2244 = vpop.f32.mrf.mxu0
  %v2245 = vadd.f32 0.0, %v2244
  %v2246 = vpop.f32.mrf.mxu0
  %v2247 = vadd.f32 0.0, %v2246
  %2248 = vdwg.mxu0
  %2249 = vmatprep.subr.bf16.mxu0 %v1784
  %2250 = vmatpush1.bf16.msra.mxu0 %v1783
  %2251 = vmatprep.subr.bf16.mxu0 %v1782
  %2252 = vmatpush1.bf16.msra.mxu0 %v1781
  %2253 = vmatprep.subr.bf16.mxu0 %v1780
  %2254 = vmatpush1.bf16.msra.mxu0 %v1779
  %2255 = vmatprep.subr.bf16.mxu0 %v1778
  %2256 = vmatpush1.bf16.msra.mxu0 %v1777
  %2257 = vmatprep.subr.bf16.mxu0 %v1776
  %2258 = vmatpush1.bf16.msra.mxu0 %v1775
  %2259 = vmatprep.subr.bf16.mxu0 %v1774
  %2260 = vmatpush1.bf16.msra.mxu0 %v1773
  %2261 = vmatprep.subr.bf16.mxu0 %v1772
  %2262 = vmatpush1.bf16.msra.mxu0 %v1771
  %2263 = vmatprep.subr.bf16.mxu0 %v1770
  %2264 = vmatpush1.bf16.msra.mxu0 %v1769
  %2265 = vmatprep.subr.bf16.mxu0 0
  %2266 = vmatpush2.bf16.msra.mxu0 0
  %2267 = vmatprep.subr.bf16.mxu0 0
  %2268 = vmatpush2.bf16.msra.mxu0 0
  %2269 = vmatprep.subr.bf16.mxu0 0
  %2270 = vmatpush2.bf16.msra.mxu0 0
  %2271 = vmatprep.subr.bf16.mxu0 0
  %2272 = vmatpush2.bf16.msra.mxu0 0
  %2273 = vmatprep.subr.bf16.mxu0 %v1792
  %2274 = vmatpush2.bf16.msra.mxu0 %v1791
  %2275 = vmatprep.subr.bf16.mxu0 %v1790
  %2276 = vmatpush2.bf16.msra.mxu0 %v1789
  %2277 = vmatprep.subr.bf16.mxu0 %v1788
  %2278 = vmatpush2.bf16.msra.mxu0 %v1787
  %2279 = vmatprep.subr.bf16.mxu0 %v1786
  %2280 = vmatpush2.bf16.msra.mxu0 %v1785
  %2281 = vmatprep.mubr.bf16.mxu0 %v1600
  %2282 = vmatmul.mubr.bf16.gmra.mxu0 %v1417
  %v2283 = vpop.f32.mrf.mxu0
  %v2284 = vadd.f32 %v2201, %v2283
  %v2285 = vpop.f32.mrf.mxu0
  %v2286 = vadd.f32 %v2203, %v2285
  %v2287 = vpop.f32.mrf.mxu0
  %v2288 = vadd.f32 %v2205, %v2287
  %v2289 = vpop.f32.mrf.mxu0
  %v2290 = vadd.f32 %v2207, %v2289
  %2291 = vmatprep.mubr.bf16.mxu0 %v1603
  %2292 = vmatmul.mubr.bf16.gmra.mxu0 %v1419
  %v2293 = vpop.f32.mrf.mxu0
  %v2294 = vadd.f32 %v2211, %v2293
  %v2295 = vpop.f32.mrf.mxu0
  %v2296 = vadd.f32 %v2213, %v2295
  %v2297 = vpop.f32.mrf.mxu0
  %v2298 = vadd.f32 %v2215, %v2297
  %v2299 = vpop.f32.mrf.mxu0
  %v2300 = vadd.f32 %v2217, %v2299
  %2301 = vmatprep.mubr.bf16.mxu0 %v1606
  %2302 = vmatmul.mubr.bf16.gmra.mxu0 %v1421
  %v2303 = vpop.f32.mrf.mxu0
  %v2304 = vadd.f32 %v2221, %v2303
  %v2305 = vpop.f32.mrf.mxu0
  %v2306 = vadd.f32 %v2223, %v2305
  %v2307 = vpop.f32.mrf.mxu0
  %v2308 = vadd.f32 %v2225, %v2307
  %v2309 = vpop.f32.mrf.mxu0
  %v2310 = vadd.f32 %v2227, %v2309
  %2311 = vmatprep.mubr.bf16.mxu0 %v1609
  %2312 = vmatmul.mubr.bf16.gmra.mxu0 %v1423
  %v2313 = vpop.f32.mrf.mxu0
  %v2314 = vadd.f32 %v2231, %v2313
  %v2315 = vpop.f32.mrf.mxu0
  %v2316 = vadd.f32 %v2233, %v2315
  %v2317 = vpop.f32.mrf.mxu0
  %v2318 = vadd.f32 %v2235, %v2317
  %v2319 = vpop.f32.mrf.mxu0
  %v2320 = vadd.f32 %v2237, %v2319
  %2321 = vmatprep.mubr.bf16.mxu0 %v1612
  %2322 = vmatmul.mubr.bf16.gmra.mxu0 %v1425
  %v2323 = vpop.f32.mrf.mxu0
  %v2324 = vadd.f32 %v2241, %v2323
  %v2325 = vpop.f32.mrf.mxu0
  %v2326 = vadd.f32 %v2243, %v2325
  %v2327 = vpop.f32.mrf.mxu0
  %v2328 = vadd.f32 %v2245, %v2327
  %v2329 = vpop.f32.mrf.mxu0
  %v2330 = vadd.f32 %v2247, %v2329
  %2331 = vdwg.mxu0
  %v2333 = vsel %vm1598, %v1428, 0
  %2335 = vmatprep.subr.bf16.mxu0 %v2027
  %2336 = vmatpush1.bf16.msra.mxu0 %v2026
  %2337 = vmatprep.subr.bf16.mxu0 %v2025
  %2338 = vmatpush1.bf16.msra.mxu0 %v2024
  %2339 = vmatprep.subr.bf16.mxu0 %v2023
  %2340 = vmatpush1.bf16.msra.mxu0 %v2022
  %2341 = vmatprep.subr.bf16.mxu0 %v2021
  %2342 = vmatpush1.bf16.msra.mxu0 %v2020
  %2343 = vmatprep.subr.bf16.mxu0 %v2019
  %2344 = vmatpush1.bf16.msra.mxu0 %v2018
  %2345 = vmatprep.subr.bf16.mxu0 %v2017
  %2346 = vmatpush1.bf16.msra.mxu0 %v2016
  %2347 = vmatprep.subr.bf16.mxu0 %v2015
  %2348 = vmatpush1.bf16.msra.mxu0 %v2014
  %2349 = vmatprep.subr.bf16.mxu0 %v2013
  %2350 = vmatpush1.bf16.msra.mxu0 %v2012
  %2351 = vmatprep.subr.bf16.mxu0 0
  %2352 = vmatpush2.bf16.msra.mxu0 0
  %2353 = vmatprep.subr.bf16.mxu0 0
  %2354 = vmatpush2.bf16.msra.mxu0 0
  %2355 = vmatprep.subr.bf16.mxu0 0
  %2356 = vmatpush2.bf16.msra.mxu0 0
  %2357 = vmatprep.subr.bf16.mxu0 0
  %2358 = vmatpush2.bf16.msra.mxu0 0
  %2359 = vmatprep.subr.bf16.mxu0 %v2035
  %2360 = vmatpush2.bf16.msra.mxu0 %v2034
  %2361 = vmatprep.subr.bf16.mxu0 %v2033
  %2362 = vmatpush2.bf16.msra.mxu0 %v2032
  %2363 = vmatprep.subr.bf16.mxu0 %v2031
  %2364 = vmatpush2.bf16.msra.mxu0 %v2030
  %2365 = vmatprep.subr.bf16.mxu0 %v2029
  %2366 = vmatpush2.bf16.msra.mxu0 %v2028
  %2367 = vmatprep.mubr.bf16.mxu0 %v1603
  %2368 = vmatmul.mubr.bf16.gmra.mxu0 %v1419
  %v2369 = vpop.f32.mrf.mxu0
  %v2370 = vadd.f32 0.0, %v2369
  %v2371 = vpop.f32.mrf.mxu0
  %v2372 = vadd.f32 0.0, %v2371
  %v2373 = vpop.f32.mrf.mxu0
  %v2374 = vadd.f32 0.0, %v2373
  %v2375 = vpop.f32.mrf.mxu0
  %v2376 = vadd.f32 0.0, %v2375
  %2377 = vmatprep.mubr.bf16.mxu0 %v1606
  %2378 = vmatmul.mubr.bf16.gmra.mxu0 %v1421
  %v2379 = vpop.f32.mrf.mxu0
  %v2380 = vadd.f32 0.0, %v2379
  %v2381 = vpop.f32.mrf.mxu0
  %v2382 = vadd.f32 0.0, %v2381
  %v2383 = vpop.f32.mrf.mxu0
  %v2384 = vadd.f32 0.0, %v2383
  %v2385 = vpop.f32.mrf.mxu0
  %v2386 = vadd.f32 0.0, %v2385
  %2387 = vmatprep.mubr.bf16.mxu0 %v1609
  %2388 = vmatmul.mubr.bf16.gmra.mxu0 %v1423
  %v2389 = vpop.f32.mrf.mxu0
  %v2390 = vadd.f32 0.0, %v2389
  %v2391 = vpop.f32.mrf.mxu0
  %v2392 = vadd.f32 0.0, %v2391
  %v2393 = vpop.f32.mrf.mxu0
  %v2394 = vadd.f32 0.0, %v2393
  %v2395 = vpop.f32.mrf.mxu0
  %v2396 = vadd.f32 0.0, %v2395
  %2397 = vmatprep.mubr.bf16.mxu0 %v1612
  %2398 = vmatmul.mubr.bf16.gmra.mxu0 %v1425
  %v2399 = vpop.f32.mrf.mxu0
  %v2400 = vadd.f32 0.0, %v2399
  %v2401 = vpop.f32.mrf.mxu0
  %v2402 = vadd.f32 0.0, %v2401
  %v2403 = vpop.f32.mrf.mxu0
  %v2404 = vadd.f32 0.0, %v2403
  %v2405 = vpop.f32.mrf.mxu0
  %v2406 = vadd.f32 0.0, %v2405
  %2407 = vmatprep.mubr.bf16.mxu0 %v2333
  %2408 = vmatmul.mubr.bf16.gmra.mxu0 %v1427
  %v2409 = vpop.f32.mrf.mxu0
  %v2410 = vadd.f32 0.0, %v2409
  %v2411 = vpop.f32.mrf.mxu0
  %v2412 = vadd.f32 0.0, %v2411
  %v2413 = vpop.f32.mrf.mxu0
  %v2414 = vadd.f32 0.0, %v2413
  %v2415 = vpop.f32.mrf.mxu0
  %v2416 = vadd.f32 0.0, %v2415
  %2417 = vdwg.mxu0
  %v2418 = vadd.f32 %v2284, %v2370
  %v2419 = vadd.f32 %v2286, %v2372
  %v2420 = vadd.f32 %v2288, %v2374
  %v2421 = vadd.f32 %v2290, %v2376
  %v2422 = vadd.f32 %v2294, %v2380
  %v2423 = vadd.f32 %v2296, %v2382
  %v2424 = vadd.f32 %v2298, %v2384
  %v2425 = vadd.f32 %v2300, %v2386
  %v2426 = vadd.f32 %v2304, %v2390
  %v2427 = vadd.f32 %v2306, %v2392
  %v2428 = vadd.f32 %v2308, %v2394
  %v2429 = vadd.f32 %v2310, %v2396
  %v2430 = vadd.f32 %v2314, %v2400
  %v2431 = vadd.f32 %v2316, %v2402
  %v2432 = vadd.f32 %v2318, %v2404
  %v2433 = vadd.f32 %v2320, %v2406
  %v2434 = vadd.f32 %v2324, %v2410
  %v2435 = vadd.f32 %v2326, %v2412
  %v2436 = vadd.f32 %v2328, %v2414
  %v2437 = vadd.f32 %v2330, %v2416
  %v2438 = vmax.f32 %v2146, %v2418
  %v2439 = vmax.f32 %v2147, %v2419
  %v2440 = vmax.f32 %v2148, %v2420
  %v2441 = vmax.f32 %v2149, %v2421
  %v2442 = vmax.f32 %v2150, %v2422
  %v2443 = vmax.f32 %v2151, %v2423
  %v2444 = vmax.f32 %v2152, %v2424
  %v2445 = vmax.f32 %v2153, %v2425
  %v2446 = vmax.f32 %v2154, %v2426
  %v2447 = vmax.f32 %v2155, %v2427
  %v2448 = vmax.f32 %v2156, %v2428
  %v2449 = vmax.f32 %v2157, %v2429
  %v2450 = vmax.f32 %v2158, %v2430
  %v2451 = vmax.f32 %v2159, %v2431
  %v2452 = vmax.f32 %v2160, %v2432
  %v2453 = vmax.f32 %v2161, %v2433
  %v2454 = vmax.f32 %v2162, %v2434
  %v2455 = vmax.f32 %v2163, %v2435
  %v2456 = vmax.f32 %v2164, %v2436
  %v2457 = vmax.f32 %v2165, %v2437
  %v2458 = vmax.f32 %v2438, %v2439
  %v2459 = vmax.f32 %v2440, %v2441
  %v2460 = vmax.f32 %v2442, %v2443
  %v2461 = vmax.f32 %v2444, %v2445
  %v2462 = vmax.f32 %v2446, %v2447
  %v2463 = vmax.f32 %v2448, %v2449
  %v2464 = vmax.f32 %v2450, %v2451
  %v2465 = vmax.f32 %v2452, %v2453
  %v2466 = vmax.f32 %v2454, %v2455
  %v2467 = vmax.f32 %v2456, %v2457
  %v2468 = vld [vmem:[%s4] sm:$0x1]
  %v2470 = vlaneseq
  %v2471 = vshrl.u32 %v2470, 7
  %v2472 = vsub.s32 0, %v2471
  %v2473 = vrot.slane %v2468, %v2472
  %v2475 = vadd.f32 %v2458, %v2473
  %v2476 = vadd.f32 %v2459, %v2473
  %v2477 = vadd.f32 %v2460, %v2473
  %v2478 = vadd.f32 %v2461, %v2473
  %v2479 = vadd.f32 %v2462, %v2473
  %v2480 = vadd.f32 %v2463, %v2473
  %v2481 = vadd.f32 %v2464, %v2473
  %v2482 = vadd.f32 %v2465, %v2473
  %v2483 = vadd.f32 %v2466, %v2473
  %v2484 = vadd.f32 %v2467, %v2473
  %v2485 = vmax.f32 %v2475, 0.0
  %v2486 = vmax.f32 %v2476, 0.0
  %v2487 = vmax.f32 %v2477, 0.0
  %v2488 = vmax.f32 %v2478, 0.0
  %v2489 = vmax.f32 %v2479, 0.0
  %v2490 = vmax.f32 %v2480, 0.0
  %v2491 = vmax.f32 %v2481, 0.0
  %v2492 = vmax.f32 %v2482, 0.0
  %v2493 = vmax.f32 %v2483, 0.0
  %v2494 = vmax.f32 %v2484, 0.0
  %v2495 = vpack.c.bf16 %v2486, %v2485
  %v2496 = vpack.c.bf16 %v2488, %v2487
  %v2497 = vpack.c.bf16 %v2490, %v2489
  %v2498 = vpack.c.bf16 %v2492, %v2491
  %v2499 = vpack.c.bf16 %v2494, %v2493
  %v2500 = vld [vmem:[%s5] sm:$0xff]
  %v2501 = vld [vmem:[%s5 + $0x8] sm:$0xff]
  %v2502 = vld [vmem:[%s5 + $0x10] sm:$0xff]
  %v2503 = vld [vmem:[%s5 + $0x18] sm:$0xff]
  %v2504 = vld [vmem:[%s5 + $0x20] sm:$0xff]
  %v2505 = vld [vmem:[%s5 + $0x28] sm:$0xff]
  %v2506 = vld [vmem:[%s5 + $0x30] sm:$0xff]
  %v2507 = vld [vmem:[%s5 + $0x38] sm:$0xff]
  %v2508 = vld [vmem:[%s5 + $0x40] sm:$0xff]
  %v2509 = vld [vmem:[%s5 + $0x48] sm:$0xff]
  %v2510 = vld [vmem:[%s5 + $0x50] sm:$0xff]
  %v2511 = vld [vmem:[%s5 + $0x58] sm:$0xff]
  %v2512 = vld [vmem:[%s5 + $0x60] sm:$0xff]
  %v2513 = vld [vmem:[%s5 + $0x68] sm:$0xff]
  %v2514 = vld [vmem:[%s5 + $0x70] sm:$0xff]
  %v2515 = vld [vmem:[%s5 + $0x78] sm:$0xff]
  %s2516 = scalar_lea.vmem %s5, 128
  %v2517 = vld [vmem:[%s2516] sm:$0xff]
  %v2518 = vld [vmem:[%s2516 + $0x8] sm:$0xff]
  %v2519 = vld [vmem:[%s2516 + $0x10] sm:$0xff]
  %v2520 = vld [vmem:[%s2516 + $0x18] sm:$0xff]
  %v2521 = vld [vmem:[%s2516 + $0x20] sm:$0xff]
  %v2522 = vld [vmem:[%s2516 + $0x28] sm:$0xff]
  %v2523 = vld [vmem:[%s2516 + $0x30] sm:$0xff]
  %v2524 = vld [vmem:[%s2516 + $0x38] sm:$0xff]
  %v2525 = vld [vmem:[%s2516 + $0x40] sm:$0xff]
  %v2526 = vld [vmem:[%s2516 + $0x48] sm:$0xff]
  %v2527 = vld [vmem:[%s2516 + $0x50] sm:$0xff]
  %v2528 = vld [vmem:[%s2516 + $0x58] sm:$0xff]
  %v2529 = vld [vmem:[%s2516 + $0x60] sm:$0xff]
  %v2530 = vld [vmem:[%s2516 + $0x68] sm:$0xff]
  %v2531 = vld [vmem:[%s2516 + $0x70] sm:$0xff]
  %v2532 = vld [vmem:[%s2516 + $0x78] sm:$0xff]
  %v2549 = vunpack.c.l.b16 %v2517
  %v2550 = vunpack.c.h.b16 %v2517
  %v2551 = vunpack.c.l.b16 %v2518
  %v2552 = vunpack.c.h.b16 %v2518
  %v2553 = vunpack.c.l.b16 %v2519
  %v2554 = vunpack.c.h.b16 %v2519
  %v2555 = vunpack.c.l.b16 %v2520
  %v2556 = vunpack.c.h.b16 %v2520
  %v2557 = vunpack.c.l.b16 %v2521
  %v2558 = vunpack.c.h.b16 %v2521
  %v2559 = vunpack.c.l.b16 %v2522
  %v2560 = vunpack.c.h.b16 %v2522
  %v2561 = vunpack.c.l.b16 %v2523
  %v2562 = vunpack.c.h.b16 %v2523
  %v2563 = vunpack.c.l.b16 %v2524
  %v2564 = vunpack.c.h.b16 %v2524
  %v2565 = vunpack.c.l.b16 %v2525
  %v2566 = vunpack.c.h.b16 %v2525
  %v2567 = vunpack.c.l.b16 %v2526
  %v2568 = vunpack.c.h.b16 %v2526
  %v2569 = vunpack.c.l.b16 %v2527
  %v2570 = vunpack.c.h.b16 %v2527
  %v2571 = vunpack.c.l.b16 %v2528
  %v2572 = vunpack.c.h.b16 %v2528
  %v2573 = vunpack.c.l.b16 %v2529
  %v2574 = vunpack.c.h.b16 %v2529
  %v2575 = vunpack.c.l.b16 %v2530
  %v2576 = vunpack.c.h.b16 %v2530
  %v2577 = vunpack.c.l.b16 %v2531
  %v2578 = vunpack.c.h.b16 %v2531
  %v2579 = vunpack.c.l.b16 %v2532
  %v2580 = vunpack.c.h.b16 %v2532
  %v2581 = vpack.c.b16 %v2551, %v2549
  %v2582 = vpack.c.b16 %v2552, %v2550
  %v2583 = vpack.c.b16 %v2555, %v2553
  %v2584 = vpack.c.b16 %v2556, %v2554
  %v2585 = vpack.c.b16 %v2559, %v2557
  %v2586 = vpack.c.b16 %v2560, %v2558
  %v2587 = vpack.c.b16 %v2563, %v2561
  %v2588 = vpack.c.b16 %v2564, %v2562
  %v2589 = vpack.c.b16 %v2567, %v2565
  %v2590 = vpack.c.b16 %v2568, %v2566
  %v2591 = vpack.c.b16 %v2571, %v2569
  %v2592 = vpack.c.b16 %v2572, %v2570
  %v2593 = vpack.c.b16 %v2575, %v2573
  %v2594 = vpack.c.b16 %v2576, %v2574
  %v2595 = vpack.c.b16 %v2579, %v2577
  %v2596 = vpack.c.b16 %v2580, %v2578
  %2613 = vmatprep.subr.bf16.mxu0 %v2596
  %2614 = vmatpush1.bf16.msra.mxu0 %v2595
  %2615 = vmatprep.subr.bf16.mxu0 %v2594
  %2616 = vmatpush1.bf16.msra.mxu0 %v2593
  %2617 = vmatprep.subr.bf16.mxu0 %v2592
  %2618 = vmatpush1.bf16.msra.mxu0 %v2591
  %2619 = vmatprep.subr.bf16.mxu0 %v2590
  %2620 = vmatpush1.bf16.msra.mxu0 %v2589
  %2621 = vmatprep.subr.bf16.mxu0 %v2588
  %2622 = vmatpush1.bf16.msra.mxu0 %v2587
  %2623 = vmatprep.subr.bf16.mxu0 %v2586
  %2624 = vmatpush1.bf16.msra.mxu0 %v2585
  %2625 = vmatprep.subr.bf16.mxu0 %v2584
  %2626 = vmatpush1.bf16.msra.mxu0 %v2583
  %2627 = vmatprep.subr.bf16.mxu0 %v2582
  %2628 = vmatpush1.bf16.msra.mxu0 %v2581
  %2629 = vmatprep.subr.bf16.mxu0 0
  %2630 = vmatpush2.bf16.msra.mxu0 0
  %2631 = vmatprep.subr.bf16.mxu0 0
  %2632 = vmatpush2.bf16.msra.mxu0 0
  %2633 = vmatprep.subr.bf16.mxu0 0
  %2634 = vmatpush2.bf16.msra.mxu0 0
  %2635 = vmatprep.subr.bf16.mxu0 0
  %2636 = vmatpush2.bf16.msra.mxu0 0
  %2637 = vmatprep.subr.bf16.mxu0 0
  %2638 = vmatpush2.bf16.msra.mxu0 0
  %2639 = vmatprep.subr.bf16.mxu0 0
  %2640 = vmatpush2.bf16.msra.mxu0 0
  %2641 = vmatprep.subr.bf16.mxu0 0
  %2642 = vmatpush2.bf16.msra.mxu0 0
  %2643 = vmatprep.subr.bf16.mxu0 0
  %2644 = vmatpush2.bf16.msra.mxu0 0
  %2645 = vmatprep.mubr.bf16.mxu0 0
  %2646 = vmatmul.mubr.bf16.gmra.mxu0 %v2496
  %v2647 = vpop.f32.mrf.mxu0
  %v2648 = vadd.f32 0.0, %v2647
  %v2649 = vpop.f32.mrf.mxu0
  %v2650 = vadd.f32 0.0, %v2649
  %v2651 = vpop.f32.mrf.mxu0
  %v2652 = vadd.f32 0.0, %v2651
  %v2653 = vpop.f32.mrf.mxu0
  %v2654 = vadd.f32 0.0, %v2653
  %2655 = vdwg.mxu0
  %v2672 = vunpack.c.l.b16 %v2500
  %v2673 = vunpack.c.h.b16 %v2500
  %v2674 = vunpack.c.l.b16 %v2501
  %v2675 = vunpack.c.h.b16 %v2501
  %v2676 = vunpack.c.l.b16 %v2502
  %v2677 = vunpack.c.h.b16 %v2502
  %v2678 = vunpack.c.l.b16 %v2503
  %v2679 = vunpack.c.h.b16 %v2503
  %v2680 = vunpack.c.l.b16 %v2504
  %v2681 = vunpack.c.h.b16 %v2504
  %v2682 = vunpack.c.l.b16 %v2505
  %v2683 = vunpack.c.h.b16 %v2505
  %v2684 = vunpack.c.l.b16 %v2506
  %v2685 = vunpack.c.h.b16 %v2506
  %v2686 = vunpack.c.l.b16 %v2507
  %v2687 = vunpack.c.h.b16 %v2507
  %v2688 = vunpack.c.l.b16 %v2508
  %v2689 = vunpack.c.h.b16 %v2508
  %v2690 = vunpack.c.l.b16 %v2509
  %v2691 = vunpack.c.h.b16 %v2509
  %v2692 = vunpack.c.l.b16 %v2510
  %v2693 = vunpack.c.h.b16 %v2510
  %v2694 = vunpack.c.l.b16 %v2511
  %v2695 = vunpack.c.h.b16 %v2511
  %v2696 = vunpack.c.l.b16 %v2512
  %v2697 = vunpack.c.h.b16 %v2512
  %v2698 = vunpack.c.l.b16 %v2513
  %v2699 = vunpack.c.h.b16 %v2513
  %v2700 = vunpack.c.l.b16 %v2514
  %v2701 = vunpack.c.h.b16 %v2514
  %v2702 = vunpack.c.l.b16 %v2515
  %v2703 = vunpack.c.h.b16 %v2515
  %v2704 = vpack.c.b16 %v2674, %v2672
  %v2705 = vpack.c.b16 %v2675, %v2673
  %v2706 = vpack.c.b16 %v2678, %v2676
  %v2707 = vpack.c.b16 %v2679, %v2677
  %v2708 = vpack.c.b16 %v2682, %v2680
  %v2709 = vpack.c.b16 %v2683, %v2681
  %v2710 = vpack.c.b16 %v2686, %v2684
  %v2711 = vpack.c.b16 %v2687, %v2685
  %v2712 = vpack.c.b16 %v2690, %v2688
  %v2713 = vpack.c.b16 %v2691, %v2689
  %v2714 = vpack.c.b16 %v2694, %v2692
  %v2715 = vpack.c.b16 %v2695, %v2693
  %v2716 = vpack.c.b16 %v2698, %v2696
  %v2717 = vpack.c.b16 %v2699, %v2697
  %v2718 = vpack.c.b16 %v2702, %v2700
  %v2719 = vpack.c.b16 %v2703, %v2701
  %2736 = vmatprep.subr.bf16.mxu0 %v2719
  %2737 = vmatpush1.bf16.msra.mxu0 %v2718
  %2738 = vmatprep.subr.bf16.mxu0 %v2717
  %2739 = vmatpush1.bf16.msra.mxu0 %v2716
  %2740 = vmatprep.subr.bf16.mxu0 %v2715
  %2741 = vmatpush1.bf16.msra.mxu0 %v2714
  %2742 = vmatprep.subr.bf16.mxu0 %v2713
  %2743 = vmatpush1.bf16.msra.mxu0 %v2712
  %2744 = vmatprep.subr.bf16.mxu0 %v2711
  %2745 = vmatpush1.bf16.msra.mxu0 %v2710
  %2746 = vmatprep.subr.bf16.mxu0 %v2709
  %2747 = vmatpush1.bf16.msra.mxu0 %v2708
  %2748 = vmatprep.subr.bf16.mxu0 %v2707
  %2749 = vmatpush1.bf16.msra.mxu0 %v2706
  %2750 = vmatprep.subr.bf16.mxu0 %v2705
  %2751 = vmatpush1.bf16.msra.mxu0 %v2704
  %2752 = vmatprep.subr.bf16.mxu0 0
  %2753 = vmatpush2.bf16.msra.mxu0 0
  %2754 = vmatprep.subr.bf16.mxu0 0
  %2755 = vmatpush2.bf16.msra.mxu0 0
  %2756 = vmatprep.subr.bf16.mxu0 0
  %2757 = vmatpush2.bf16.msra.mxu0 0
  %2758 = vmatprep.subr.bf16.mxu0 0
  %2759 = vmatpush2.bf16.msra.mxu0 0
  %2760 = vmatprep.subr.bf16.mxu0 0
  %2761 = vmatpush2.bf16.msra.mxu0 0
  %2762 = vmatprep.subr.bf16.mxu0 0
  %2763 = vmatpush2.bf16.msra.mxu0 0
  %2764 = vmatprep.subr.bf16.mxu0 0
  %2765 = vmatpush2.bf16.msra.mxu0 0
  %2766 = vmatprep.subr.bf16.mxu0 0
  %2767 = vmatpush2.bf16.msra.mxu0 0
  %2768 = vmatprep.mubr.bf16.mxu0 0
  %2769 = vmatmul.mubr.bf16.gmra.mxu0 %v2495
  %v2770 = vpop.f32.mrf.mxu0
  %v2771 = vadd.f32 %v2648, %v2770
  %v2772 = vpop.f32.mrf.mxu0
  %v2773 = vadd.f32 %v2650, %v2772
  %v2774 = vpop.f32.mrf.mxu0
  %v2775 = vadd.f32 %v2652, %v2774
  %v2776 = vpop.f32.mrf.mxu0
  %v2777 = vadd.f32 %v2654, %v2776
  %2778 = vdwg.mxu0
  %s2779 = scalar_lea.vmem %s5, 256
  %v2780 = vld [vmem:[%s2779] sm:$0xff]
  %v2781 = vld [vmem:[%s2779 + $0x8] sm:$0xff]
  %v2782 = vld [vmem:[%s2779 + $0x10] sm:$0xff]
  %v2783 = vld [vmem:[%s2779 + $0x18] sm:$0xff]
  %v2784 = vld [vmem:[%s2779 + $0x20] sm:$0xff]
  %v2785 = vld [vmem:[%s2779 + $0x28] sm:$0xff]
  %v2786 = vld [vmem:[%s2779 + $0x30] sm:$0xff]
  %v2787 = vld [vmem:[%s2779 + $0x38] sm:$0xff]
  %v2788 = vld [vmem:[%s2779 + $0x40] sm:$0xff]
  %v2789 = vld [vmem:[%s2779 + $0x48] sm:$0xff]
  %v2790 = vld [vmem:[%s2779 + $0x50] sm:$0xff]
  %v2791 = vld [vmem:[%s2779 + $0x58] sm:$0xff]
  %v2792 = vld [vmem:[%s2779 + $0x60] sm:$0xff]
  %v2793 = vld [vmem:[%s2779 + $0x68] sm:$0xff]
  %v2794 = vld [vmem:[%s2779 + $0x70] sm:$0xff]
  %v2795 = vld [vmem:[%s2779 + $0x78] sm:$0xff]
  %v2812 = vunpack.c.l.b16 %v2780
  %v2813 = vunpack.c.h.b16 %v2780
  %v2814 = vunpack.c.l.b16 %v2781
  %v2815 = vunpack.c.h.b16 %v2781
  %v2816 = vunpack.c.l.b16 %v2782
  %v2817 = vunpack.c.h.b16 %v2782
  %v2818 = vunpack.c.l.b16 %v2783
  %v2819 = vunpack.c.h.b16 %v2783
  %v2820 = vunpack.c.l.b16 %v2784
  %v2821 = vunpack.c.h.b16 %v2784
  %v2822 = vunpack.c.l.b16 %v2785
  %v2823 = vunpack.c.h.b16 %v2785
  %v2824 = vunpack.c.l.b16 %v2786
  %v2825 = vunpack.c.h.b16 %v2786
  %v2826 = vunpack.c.l.b16 %v2787
  %v2827 = vunpack.c.h.b16 %v2787
  %v2828 = vunpack.c.l.b16 %v2788
  %v2829 = vunpack.c.h.b16 %v2788
  %v2830 = vunpack.c.l.b16 %v2789
  %v2831 = vunpack.c.h.b16 %v2789
  %v2832 = vunpack.c.l.b16 %v2790
  %v2833 = vunpack.c.h.b16 %v2790
  %v2834 = vunpack.c.l.b16 %v2791
  %v2835 = vunpack.c.h.b16 %v2791
  %v2836 = vunpack.c.l.b16 %v2792
  %v2837 = vunpack.c.h.b16 %v2792
  %v2838 = vunpack.c.l.b16 %v2793
  %v2839 = vunpack.c.h.b16 %v2793
  %v2840 = vunpack.c.l.b16 %v2794
  %v2841 = vunpack.c.h.b16 %v2794
  %v2842 = vunpack.c.l.b16 %v2795
  %v2843 = vunpack.c.h.b16 %v2795
  %v2844 = vpack.c.b16 %v2814, %v2812
  %v2845 = vpack.c.b16 %v2815, %v2813
  %v2846 = vpack.c.b16 %v2818, %v2816
  %v2847 = vpack.c.b16 %v2819, %v2817
  %v2848 = vpack.c.b16 %v2822, %v2820
  %v2849 = vpack.c.b16 %v2823, %v2821
  %v2850 = vpack.c.b16 %v2826, %v2824
  %v2851 = vpack.c.b16 %v2827, %v2825
  %v2852 = vpack.c.b16 %v2830, %v2828
  %v2853 = vpack.c.b16 %v2831, %v2829
  %v2854 = vpack.c.b16 %v2834, %v2832
  %v2855 = vpack.c.b16 %v2835, %v2833
  %v2856 = vpack.c.b16 %v2838, %v2836
  %v2857 = vpack.c.b16 %v2839, %v2837
  %v2858 = vpack.c.b16 %v2842, %v2840
  %v2859 = vpack.c.b16 %v2843, %v2841
  %2876 = vmatprep.subr.bf16.mxu0 %v2859
  %2877 = vmatpush1.bf16.msra.mxu0 %v2858
  %2878 = vmatprep.subr.bf16.mxu0 %v2857
  %2879 = vmatpush1.bf16.msra.mxu0 %v2856
  %2880 = vmatprep.subr.bf16.mxu0 %v2855
  %2881 = vmatpush1.bf16.msra.mxu0 %v2854
  %2882 = vmatprep.subr.bf16.mxu0 %v2853
  %2883 = vmatpush1.bf16.msra.mxu0 %v2852
  %2884 = vmatprep.subr.bf16.mxu0 %v2851
  %2885 = vmatpush1.bf16.msra.mxu0 %v2850
  %2886 = vmatprep.subr.bf16.mxu0 %v2849
  %2887 = vmatpush1.bf16.msra.mxu0 %v2848
  %2888 = vmatprep.subr.bf16.mxu0 %v2847
  %2889 = vmatpush1.bf16.msra.mxu0 %v2846
  %2890 = vmatprep.subr.bf16.mxu0 %v2845
  %2891 = vmatpush1.bf16.msra.mxu0 %v2844
  %2892 = vmatprep.subr.bf16.mxu0 0
  %2893 = vmatpush2.bf16.msra.mxu0 0
  %2894 = vmatprep.subr.bf16.mxu0 0
  %2895 = vmatpush2.bf16.msra.mxu0 0
  %2896 = vmatprep.subr.bf16.mxu0 0
  %2897 = vmatpush2.bf16.msra.mxu0 0
  %2898 = vmatprep.subr.bf16.mxu0 0
  %2899 = vmatpush2.bf16.msra.mxu0 0
  %2900 = vmatprep.subr.bf16.mxu0 0
  %2901 = vmatpush2.bf16.msra.mxu0 0
  %2902 = vmatprep.subr.bf16.mxu0 0
  %2903 = vmatpush2.bf16.msra.mxu0 0
  %2904 = vmatprep.subr.bf16.mxu0 0
  %2905 = vmatpush2.bf16.msra.mxu0 0
  %2906 = vmatprep.subr.bf16.mxu0 0
  %2907 = vmatpush2.bf16.msra.mxu0 0
  %2908 = vmatprep.mubr.bf16.mxu0 0
  %2909 = vmatmul.mubr.bf16.gmra.mxu0 %v2497
  %v2910 = vpop.f32.mrf.mxu0
  %v2911 = vadd.f32 0.0, %v2910
  %v2912 = vpop.f32.mrf.mxu0
  %v2913 = vadd.f32 0.0, %v2912
  %v2914 = vpop.f32.mrf.mxu0
  %v2915 = vadd.f32 0.0, %v2914
  %v2916 = vpop.f32.mrf.mxu0
  %v2917 = vadd.f32 0.0, %v2916
  %2918 = vdwg.mxu0
  %v2919 = vadd.f32 %v2771, %v2911
  %v2920 = vadd.f32 %v2773, %v2913
  %v2921 = vadd.f32 %v2775, %v2915
  %v2922 = vadd.f32 %v2777, %v2917
  %s2923 = scalar_lea.vmem %s5, 384
  %v2924 = vld [vmem:[%s2923] sm:$0xff]
  %v2925 = vld [vmem:[%s2923 + $0x8] sm:$0xff]
  %v2926 = vld [vmem:[%s2923 + $0x10] sm:$0xff]
  %v2927 = vld [vmem:[%s2923 + $0x18] sm:$0xff]
  %v2928 = vld [vmem:[%s2923 + $0x20] sm:$0xff]
  %v2929 = vld [vmem:[%s2923 + $0x28] sm:$0xff]
  %v2930 = vld [vmem:[%s2923 + $0x30] sm:$0xff]
  %v2931 = vld [vmem:[%s2923 + $0x38] sm:$0xff]
  %v2932 = vld [vmem:[%s2923 + $0x40] sm:$0xff]
  %v2933 = vld [vmem:[%s2923 + $0x48] sm:$0xff]
  %v2934 = vld [vmem:[%s2923 + $0x50] sm:$0xff]
  %v2935 = vld [vmem:[%s2923 + $0x58] sm:$0xff]
  %v2936 = vld [vmem:[%s2923 + $0x60] sm:$0xff]
  %v2937 = vld [vmem:[%s2923 + $0x68] sm:$0xff]
  %v2938 = vld [vmem:[%s2923 + $0x70] sm:$0xff]
  %v2939 = vld [vmem:[%s2923 + $0x78] sm:$0xff]
  %v2956 = vunpack.c.l.b16 %v2924
  %v2957 = vunpack.c.h.b16 %v2924
  %v2958 = vunpack.c.l.b16 %v2925
  %v2959 = vunpack.c.h.b16 %v2925
  %v2960 = vunpack.c.l.b16 %v2926
  %v2961 = vunpack.c.h.b16 %v2926
  %v2962 = vunpack.c.l.b16 %v2927
  %v2963 = vunpack.c.h.b16 %v2927
  %v2964 = vunpack.c.l.b16 %v2928
  %v2965 = vunpack.c.h.b16 %v2928
  %v2966 = vunpack.c.l.b16 %v2929
  %v2967 = vunpack.c.h.b16 %v2929
  %v2968 = vunpack.c.l.b16 %v2930
  %v2969 = vunpack.c.h.b16 %v2930
  %v2970 = vunpack.c.l.b16 %v2931
  %v2971 = vunpack.c.h.b16 %v2931
  %v2972 = vunpack.c.l.b16 %v2932
  %v2973 = vunpack.c.h.b16 %v2932
  %v2974 = vunpack.c.l.b16 %v2933
  %v2975 = vunpack.c.h.b16 %v2933
  %v2976 = vunpack.c.l.b16 %v2934
  %v2977 = vunpack.c.h.b16 %v2934
  %v2978 = vunpack.c.l.b16 %v2935
  %v2979 = vunpack.c.h.b16 %v2935
  %v2980 = vunpack.c.l.b16 %v2936
  %v2981 = vunpack.c.h.b16 %v2936
  %v2982 = vunpack.c.l.b16 %v2937
  %v2983 = vunpack.c.h.b16 %v2937
  %v2984 = vunpack.c.l.b16 %v2938
  %v2985 = vunpack.c.h.b16 %v2938
  %v2986 = vunpack.c.l.b16 %v2939
  %v2987 = vunpack.c.h.b16 %v2939
  %v2988 = vpack.c.b16 %v2958, %v2956
  %v2989 = vpack.c.b16 %v2959, %v2957
  %v2990 = vpack.c.b16 %v2962, %v2960
  %v2991 = vpack.c.b16 %v2963, %v2961
  %v2992 = vpack.c.b16 %v2966, %v2964
  %v2993 = vpack.c.b16 %v2967, %v2965
  %v2994 = vpack.c.b16 %v2970, %v2968
  %v2995 = vpack.c.b16 %v2971, %v2969
  %v2996 = vpack.c.b16 %v2974, %v2972
  %v2997 = vpack.c.b16 %v2975, %v2973
  %v2998 = vpack.c.b16 %v2978, %v2976
  %v2999 = vpack.c.b16 %v2979, %v2977
  %v3000 = vpack.c.b16 %v2982, %v2980
  %v3001 = vpack.c.b16 %v2983, %v2981
  %v3002 = vpack.c.b16 %v2986, %v2984
  %v3003 = vpack.c.b16 %v2987, %v2985
  %3020 = vmatprep.subr.bf16.mxu0 %v3003
  %3021 = vmatpush1.bf16.msra.mxu0 %v3002
  %3022 = vmatprep.subr.bf16.mxu0 %v3001
  %3023 = vmatpush1.bf16.msra.mxu0 %v3000
  %3024 = vmatprep.subr.bf16.mxu0 %v2999
  %3025 = vmatpush1.bf16.msra.mxu0 %v2998
  %3026 = vmatprep.subr.bf16.mxu0 %v2997
  %3027 = vmatpush1.bf16.msra.mxu0 %v2996
  %3028 = vmatprep.subr.bf16.mxu0 %v2995
  %3029 = vmatpush1.bf16.msra.mxu0 %v2994
  %3030 = vmatprep.subr.bf16.mxu0 %v2993
  %3031 = vmatpush1.bf16.msra.mxu0 %v2992
  %3032 = vmatprep.subr.bf16.mxu0 %v2991
  %3033 = vmatpush1.bf16.msra.mxu0 %v2990
  %3034 = vmatprep.subr.bf16.mxu0 %v2989
  %3035 = vmatpush1.bf16.msra.mxu0 %v2988
  %3036 = vmatprep.subr.bf16.mxu0 0
  %3037 = vmatpush2.bf16.msra.mxu0 0
  %3038 = vmatprep.subr.bf16.mxu0 0
  %3039 = vmatpush2.bf16.msra.mxu0 0
  %3040 = vmatprep.subr.bf16.mxu0 0
  %3041 = vmatpush2.bf16.msra.mxu0 0
  %3042 = vmatprep.subr.bf16.mxu0 0
  %3043 = vmatpush2.bf16.msra.mxu0 0
  %3044 = vmatprep.subr.bf16.mxu0 0
  %3045 = vmatpush2.bf16.msra.mxu0 0
  %3046 = vmatprep.subr.bf16.mxu0 0
  %3047 = vmatpush2.bf16.msra.mxu0 0
  %3048 = vmatprep.subr.bf16.mxu0 0
  %3049 = vmatpush2.bf16.msra.mxu0 0
  %3050 = vmatprep.subr.bf16.mxu0 0
  %3051 = vmatpush2.bf16.msra.mxu0 0
  %3052 = vmatprep.mubr.bf16.mxu0 0
  %3053 = vmatmul.mubr.bf16.gmra.mxu0 %v2498
  %v3054 = vpop.f32.mrf.mxu0
  %v3055 = vadd.f32 0.0, %v3054
  %v3056 = vpop.f32.mrf.mxu0
  %v3057 = vadd.f32 0.0, %v3056
  %v3058 = vpop.f32.mrf.mxu0
  %v3059 = vadd.f32 0.0, %v3058
  %v3060 = vpop.f32.mrf.mxu0
  %v3061 = vadd.f32 0.0, %v3060
  %3062 = vdwg.mxu0
  %v3063 = vadd.f32 %v2919, %v3055
  %v3064 = vadd.f32 %v2920, %v3057
  %v3065 = vadd.f32 %v2921, %v3059
  %v3066 = vadd.f32 %v2922, %v3061
  %s3067 = scalar_lea.vmem %s5, 512
  %v3068 = vld [vmem:[%s3067] sm:$0xff]
  %v3069 = vld [vmem:[%s3067 + $0x8] sm:$0xff]
  %v3070 = vld [vmem:[%s3067 + $0x10] sm:$0xff]
  %v3071 = vld [vmem:[%s3067 + $0x18] sm:$0xff]
  %v3072 = vld [vmem:[%s3067 + $0x20] sm:$0xff]
  %v3073 = vld [vmem:[%s3067 + $0x28] sm:$0xff]
  %v3074 = vld [vmem:[%s3067 + $0x30] sm:$0xff]
  %v3075 = vld [vmem:[%s3067 + $0x38] sm:$0xff]
  %v3076 = vld [vmem:[%s3067 + $0x40] sm:$0xff]
  %v3077 = vld [vmem:[%s3067 + $0x48] sm:$0xff]
  %v3078 = vld [vmem:[%s3067 + $0x50] sm:$0xff]
  %v3079 = vld [vmem:[%s3067 + $0x58] sm:$0xff]
  %v3080 = vld [vmem:[%s3067 + $0x60] sm:$0xff]
  %v3081 = vld [vmem:[%s3067 + $0x68] sm:$0xff]
  %v3082 = vld [vmem:[%s3067 + $0x70] sm:$0xff]
  %v3083 = vld [vmem:[%s3067 + $0x78] sm:$0xff]
  %v3100 = vunpack.c.l.b16 %v3068
  %v3101 = vunpack.c.h.b16 %v3068
  %v3102 = vunpack.c.l.b16 %v3069
  %v3103 = vunpack.c.h.b16 %v3069
  %v3104 = vunpack.c.l.b16 %v3070
  %v3105 = vunpack.c.h.b16 %v3070
  %v3106 = vunpack.c.l.b16 %v3071
  %v3107 = vunpack.c.h.b16 %v3071
  %v3108 = vunpack.c.l.b16 %v3072
  %v3109 = vunpack.c.h.b16 %v3072
  %v3110 = vunpack.c.l.b16 %v3073
  %v3111 = vunpack.c.h.b16 %v3073
  %v3112 = vunpack.c.l.b16 %v3074
  %v3113 = vunpack.c.h.b16 %v3074
  %v3114 = vunpack.c.l.b16 %v3075
  %v3115 = vunpack.c.h.b16 %v3075
  %v3116 = vunpack.c.l.b16 %v3076
  %v3117 = vunpack.c.h.b16 %v3076
  %v3118 = vunpack.c.l.b16 %v3077
  %v3119 = vunpack.c.h.b16 %v3077
  %v3120 = vunpack.c.l.b16 %v3078
  %v3121 = vunpack.c.h.b16 %v3078
  %v3122 = vunpack.c.l.b16 %v3079
  %v3123 = vunpack.c.h.b16 %v3079
  %v3124 = vunpack.c.l.b16 %v3080
  %v3125 = vunpack.c.h.b16 %v3080
  %v3126 = vunpack.c.l.b16 %v3081
  %v3127 = vunpack.c.h.b16 %v3081
  %v3128 = vunpack.c.l.b16 %v3082
  %v3129 = vunpack.c.h.b16 %v3082
  %v3130 = vunpack.c.l.b16 %v3083
  %v3131 = vunpack.c.h.b16 %v3083
  %v3132 = vpack.c.b16 %v3102, %v3100
  %v3133 = vpack.c.b16 %v3103, %v3101
  %v3134 = vpack.c.b16 %v3106, %v3104
  %v3135 = vpack.c.b16 %v3107, %v3105
  %v3136 = vpack.c.b16 %v3110, %v3108
  %v3137 = vpack.c.b16 %v3111, %v3109
  %v3138 = vpack.c.b16 %v3114, %v3112
  %v3139 = vpack.c.b16 %v3115, %v3113
  %v3140 = vpack.c.b16 %v3118, %v3116
  %v3141 = vpack.c.b16 %v3119, %v3117
  %v3142 = vpack.c.b16 %v3122, %v3120
  %v3143 = vpack.c.b16 %v3123, %v3121
  %v3144 = vpack.c.b16 %v3126, %v3124
  %v3145 = vpack.c.b16 %v3127, %v3125
  %v3146 = vpack.c.b16 %v3130, %v3128
  %v3147 = vpack.c.b16 %v3131, %v3129
  %3164 = vmatprep.subr.bf16.mxu0 %v3147
  %3165 = vmatpush1.bf16.msra.mxu0 %v3146
  %3166 = vmatprep.subr.bf16.mxu0 %v3145
  %3167 = vmatpush1.bf16.msra.mxu0 %v3144
  %3168 = vmatprep.subr.bf16.mxu0 %v3143
  %3169 = vmatpush1.bf16.msra.mxu0 %v3142
  %3170 = vmatprep.subr.bf16.mxu0 %v3141
  %3171 = vmatpush1.bf16.msra.mxu0 %v3140
  %3172 = vmatprep.subr.bf16.mxu0 %v3139
  %3173 = vmatpush1.bf16.msra.mxu0 %v3138
  %3174 = vmatprep.subr.bf16.mxu0 %v3137
  %3175 = vmatpush1.bf16.msra.mxu0 %v3136
  %3176 = vmatprep.subr.bf16.mxu0 %v3135
  %3177 = vmatpush1.bf16.msra.mxu0 %v3134
  %3178 = vmatprep.subr.bf16.mxu0 %v3133
  %3179 = vmatpush1.bf16.msra.mxu0 %v3132
  %3180 = vmatprep.subr.bf16.mxu0 0
  %3181 = vmatpush2.bf16.msra.mxu0 0
  %3182 = vmatprep.subr.bf16.mxu0 0
  %3183 = vmatpush2.bf16.msra.mxu0 0
  %3184 = vmatprep.subr.bf16.mxu0 0
  %3185 = vmatpush2.bf16.msra.mxu0 0
  %3186 = vmatprep.subr.bf16.mxu0 0
  %3187 = vmatpush2.bf16.msra.mxu0 0
  %3188 = vmatprep.subr.bf16.mxu0 0
  %3189 = vmatpush2.bf16.msra.mxu0 0
  %3190 = vmatprep.subr.bf16.mxu0 0
  %3191 = vmatpush2.bf16.msra.mxu0 0
  %3192 = vmatprep.subr.bf16.mxu0 0
  %3193 = vmatpush2.bf16.msra.mxu0 0
  %3194 = vmatprep.subr.bf16.mxu0 0
  %3195 = vmatpush2.bf16.msra.mxu0 0
  %3196 = vmatprep.mubr.bf16.mxu0 0
  %3197 = vmatmul.mubr.bf16.gmra.mxu0 %v2499
  %v3198 = vpop.f32.mrf.mxu0
  %v3199 = vadd.f32 0.0, %v3198
  %v3200 = vpop.f32.mrf.mxu0
  %v3201 = vadd.f32 0.0, %v3200
  %v3202 = vpop.f32.mrf.mxu0
  %v3203 = vadd.f32 0.0, %v3202
  %v3204 = vpop.f32.mrf.mxu0
  %v3205 = vadd.f32 0.0, %v3204
  %3206 = vdwg.mxu0
  %v3207 = vadd.f32 %v3063, %v3199
  %v3208 = vadd.f32 %v3064, %v3201
  %v3209 = vadd.f32 %v3065, %v3203
  %v3210 = vadd.f32 %v3066, %v3205
  %v3211 = vld [vmem:[%s6] sm:$0x3]
  %v3213 = vlaneseq
  %v3214 = vshrl.u32 %v3213, 7
  %v3215 = vsub.s32 0, %v3214
  %v3216 = vrot.slane %v3211, %v3215
  %v3217 = vlaneseq
  %v3218 = vshrl.u32 %v3217, 7
  %v3219 = vsub.s32 1, %v3218
  %v3220 = vrot.slane %v3211, %v3219
  %v3223 = vadd.f32 %v3207, %v3216
  %v3224 = vadd.f32 %v3208, %v3220
  %v3225 = vadd.f32 %v3209, %v3216
  %v3226 = vadd.f32 %v3210, %v3220
  %v3227 = vmax.f32 %v3223, 0.0
  %v3228 = vmax.f32 %v3224, 0.0
  %v3229 = vmax.f32 %v3225, 0.0
  %v3230 = vmax.f32 %v3226, 0.0
  %v3231 = vpack.c.bf16 %v3229, %v3227
  %v3232 = vpack.c.bf16 %v3230, %v3228
  %v3233 = vld [vmem:[%s7] sm:$0xf]
  %v3234 = vld [vmem:[%s7 + $0x4] sm:$0xf]
  %v3235 = vld [vmem:[%s7 + $0x8] sm:$0xf]
  %v3236 = vld [vmem:[%s7 + $0xc] sm:$0xf]
  %v3237 = vld [vmem:[%s7 + $0x10] sm:$0xf]
  %v3238 = vld [vmem:[%s7 + $0x14] sm:$0xf]
  %v3239 = vld [vmem:[%s7 + $0x18] sm:$0xf]
  %v3240 = vld [vmem:[%s7 + $0x1c] sm:$0xf]
  %v3241 = vld [vmem:[%s7 + $0x20] sm:$0xf]
  %v3242 = vld [vmem:[%s7 + $0x24] sm:$0xf]
  %v3243 = vld [vmem:[%s7 + $0x28] sm:$0xf]
  %v3244 = vld [vmem:[%s7 + $0x2c] sm:$0xf]
  %v3245 = vld [vmem:[%s7 + $0x30] sm:$0xf]
  %v3246 = vld [vmem:[%s7 + $0x34] sm:$0xf]
  %v3247 = vld [vmem:[%s7 + $0x38] sm:$0xf]
  %v3248 = vld [vmem:[%s7 + $0x3c] sm:$0xf]
  %v3249 = vld [vmem:[%s7 + $0x40] sm:$0xf]
  %v3250 = vld [vmem:[%s7 + $0x44] sm:$0xf]
  %v3251 = vld [vmem:[%s7 + $0x48] sm:$0xf]
  %v3252 = vld [vmem:[%s7 + $0x4c] sm:$0xf]
  %v3253 = vld [vmem:[%s7 + $0x50] sm:$0xf]
  %v3254 = vld [vmem:[%s7 + $0x54] sm:$0xf]
  %v3255 = vld [vmem:[%s7 + $0x58] sm:$0xf]
  %v3256 = vld [vmem:[%s7 + $0x5c] sm:$0xf]
  %v3257 = vld [vmem:[%s7 + $0x60] sm:$0xf]
  %v3258 = vld [vmem:[%s7 + $0x64] sm:$0xf]
  %v3259 = vld [vmem:[%s7 + $0x68] sm:$0xf]
  %v3260 = vld [vmem:[%s7 + $0x6c] sm:$0xf]
  %v3261 = vld [vmem:[%s7 + $0x70] sm:$0xf]
  %v3262 = vld [vmem:[%s7 + $0x74] sm:$0xf]
  %v3263 = vld [vmem:[%s7 + $0x78] sm:$0xf]
  %v3264 = vld [vmem:[%s7 + $0x7c] sm:$0xf]
  %v3265 = vld [vmem:[%s8] sm:$0x1]
  %v3267 = vlaneseq
  %v3268 = vshrl.u32 %v3267, 7
  %v3269 = vsub.s32 0, %v3268
  %v3270 = vrot.slane %v3265, %v3269
  %v3304 = vunpack.c.l.b16 %v3233
  %v3305 = vunpack.c.l.b16 %v3234
  %v3306 = vunpack.c.l.b16 %v3235
  %v3307 = vunpack.c.l.b16 %v3236
  %v3308 = vunpack.c.l.b16 %v3237
  %v3309 = vunpack.c.l.b16 %v3238
  %v3310 = vunpack.c.l.b16 %v3239
  %v3311 = vunpack.c.l.b16 %v3240
  %v3312 = vunpack.c.l.b16 %v3241
  %v3313 = vunpack.c.l.b16 %v3242
  %v3314 = vunpack.c.l.b16 %v3243
  %v3315 = vunpack.c.l.b16 %v3244
  %v3316 = vunpack.c.l.b16 %v3245
  %v3317 = vunpack.c.l.b16 %v3246
  %v3318 = vunpack.c.l.b16 %v3247
  %v3319 = vunpack.c.l.b16 %v3248
  %v3320 = vunpack.c.l.b16 %v3249
  %v3321 = vunpack.c.l.b16 %v3250
  %v3322 = vunpack.c.l.b16 %v3251
  %v3323 = vunpack.c.l.b16 %v3252
  %v3324 = vunpack.c.l.b16 %v3253
  %v3325 = vunpack.c.l.b16 %v3254
  %v3326 = vunpack.c.l.b16 %v3255
  %v3327 = vunpack.c.l.b16 %v3256
  %v3328 = vunpack.c.l.b16 %v3257
  %v3329 = vunpack.c.l.b16 %v3258
  %v3330 = vunpack.c.l.b16 %v3259
  %v3331 = vunpack.c.l.b16 %v3260
  %v3332 = vunpack.c.l.b16 %v3261
  %v3333 = vunpack.c.l.b16 %v3262
  %v3334 = vunpack.c.l.b16 %v3263
  %v3335 = vunpack.c.l.b16 %v3264
  %v3336 = vpack.c.b16 %v3305, %v3304
  %v3337 = vpack.c.b16 %v3307, %v3306
  %v3338 = vpack.c.b16 %v3309, %v3308
  %v3339 = vpack.c.b16 %v3311, %v3310
  %v3340 = vpack.c.b16 %v3313, %v3312
  %v3341 = vpack.c.b16 %v3315, %v3314
  %v3342 = vpack.c.b16 %v3317, %v3316
  %v3343 = vpack.c.b16 %v3319, %v3318
  %v3344 = vpack.c.b16 %v3321, %v3320
  %v3345 = vpack.c.b16 %v3323, %v3322
  %v3346 = vpack.c.b16 %v3325, %v3324
  %v3347 = vpack.c.b16 %v3327, %v3326
  %v3348 = vpack.c.b16 %v3329, %v3328
  %v3349 = vpack.c.b16 %v3331, %v3330
  %v3350 = vpack.c.b16 %v3333, %v3332
  %v3351 = vpack.c.b16 %v3335, %v3334
  %3368 = vmatprep.subr.bf16.mxu0 0
  %3369 = vmatpush1.bf16.msra.mxu0 %v3343
  %3370 = vmatprep.subr.bf16.mxu0 0
  %3371 = vmatpush1.bf16.msra.mxu0 %v3342
  %3372 = vmatprep.subr.bf16.mxu0 0
  %3373 = vmatpush1.bf16.msra.mxu0 %v3341
  %3374 = vmatprep.subr.bf16.mxu0 0
  %3375 = vmatpush1.bf16.msra.mxu0 %v3340
  %3376 = vmatprep.subr.bf16.mxu0 0
  %3377 = vmatpush1.bf16.msra.mxu0 %v3339
  %3378 = vmatprep.subr.bf16.mxu0 0
  %3379 = vmatpush1.bf16.msra.mxu0 %v3338
  %3380 = vmatprep.subr.bf16.mxu0 0
  %3381 = vmatpush1.bf16.msra.mxu0 %v3337
  %3382 = vmatprep.subr.bf16.mxu0 0
  %3383 = vmatpush1.bf16.msra.mxu0 %v3336
  %3384 = vmatprep.subr.bf16.mxu0 0
  %3385 = vmatpush2.bf16.msra.mxu0 %v3351
  %3386 = vmatprep.subr.bf16.mxu0 0
  %3387 = vmatpush2.bf16.msra.mxu0 %v3350
  %3388 = vmatprep.subr.bf16.mxu0 0
  %3389 = vmatpush2.bf16.msra.mxu0 %v3349
  %3390 = vmatprep.subr.bf16.mxu0 0
  %3391 = vmatpush2.bf16.msra.mxu0 %v3348
  %3392 = vmatprep.subr.bf16.mxu0 0
  %3393 = vmatpush2.bf16.msra.mxu0 %v3347
  %3394 = vmatprep.subr.bf16.mxu0 0
  %3395 = vmatpush2.bf16.msra.mxu0 %v3346
  %3396 = vmatprep.subr.bf16.mxu0 0
  %3397 = vmatpush2.bf16.msra.mxu0 %v3345
  %3398 = vmatprep.subr.bf16.mxu0 0
  %3399 = vmatpush2.bf16.msra.mxu0 %v3344
  %3400 = vmatprep.mubr.bf16.mxu0 %v3232
  %3401 = vmatmul.mubr.bf16.gmra.mxu0 %v3231
  %v3402 = vpop.f32.mrf.mxu0
  %v3403 = vadd.f32 %v3270, %v3402
  %v3404 = vpop.f32.mrf.mxu0
  %v3405 = vpop.f32.mrf.mxu0
  %v3406 = vadd.f32 %v3270, %v3405
  %v3407 = vpop.f32.mrf.mxu0
  %3408 = vdwg.mxu0
  %v3409 = vmax.f32 %v3403, 0.0
  %v3410 = vmax.f32 %v3406, 0.0
  %v3411 = vpack.c.bf16 %v3410, %v3409
  %v3412 = vld [vmem:[%s9] sm:$0xf]
  %v3413 = vld [vmem:[%s9 + $0x4] sm:$0xf]
  %v3414 = vld [vmem:[%s9 + $0x8] sm:$0xf]
  %v3415 = vld [vmem:[%s9 + $0xc] sm:$0xf]
  %v3416 = vld [vmem:[%s9 + $0x10] sm:$0xf]
  %v3417 = vld [vmem:[%s9 + $0x14] sm:$0xf]
  %v3418 = vld [vmem:[%s9 + $0x18] sm:$0xf]
  %v3419 = vld [vmem:[%s9 + $0x1c] sm:$0xf]
  %v3420 = vld [vmem:[%s9 + $0x20] sm:$0xf]
  %v3421 = vld [vmem:[%s9 + $0x24] sm:$0xf]
  %v3422 = vld [vmem:[%s9 + $0x28] sm:$0xf]
  %v3423 = vld [vmem:[%s9 + $0x2c] sm:$0xf]
  %v3424 = vld [vmem:[%s9 + $0x30] sm:$0xf]
  %v3425 = vld [vmem:[%s9 + $0x34] sm:$0xf]
  %v3426 = vld [vmem:[%s9 + $0x38] sm:$0xf]
  %v3427 = vld [vmem:[%s9 + $0x3c] sm:$0xf]
  %v3428 = vld [vmem:[%s10] sm:$0x1]
  %v3430 = vlaneseq
  %v3431 = vshrl.u32 %v3430, 7
  %v3432 = vsub.s32 0, %v3431
  %v3433 = vrot.slane %v3428, %v3432
  %v3451 = vunpack.c.l.b16 %v3412
  %v3452 = vunpack.c.l.b16 %v3413
  %v3453 = vunpack.c.l.b16 %v3414
  %v3454 = vunpack.c.l.b16 %v3415
  %v3455 = vunpack.c.l.b16 %v3416
  %v3456 = vunpack.c.l.b16 %v3417
  %v3457 = vunpack.c.l.b16 %v3418
  %v3458 = vunpack.c.l.b16 %v3419
  %v3459 = vunpack.c.l.b16 %v3420
  %v3460 = vunpack.c.l.b16 %v3421
  %v3461 = vunpack.c.l.b16 %v3422
  %v3462 = vunpack.c.l.b16 %v3423
  %v3463 = vunpack.c.l.b16 %v3424
  %v3464 = vunpack.c.l.b16 %v3425
  %v3465 = vunpack.c.l.b16 %v3426
  %v3466 = vunpack.c.l.b16 %v3427
  %v3467 = vpack.c.b16 %v3452, %v3451
  %v3468 = vpack.c.b16 %v3454, %v3453
  %v3469 = vpack.c.b16 %v3456, %v3455
  %v3470 = vpack.c.b16 %v3458, %v3457
  %v3471 = vpack.c.b16 %v3460, %v3459
  %v3472 = vpack.c.b16 %v3462, %v3461
  %v3473 = vpack.c.b16 %v3464, %v3463
  %v3474 = vpack.c.b16 %v3466, %v3465
  %3483 = vmatprep.subr.bf16.mxu0 0
  %3484 = vmatpush1.bf16.msra.mxu0 %v3474
  %3485 = vmatprep.subr.bf16.mxu0 0
  %3486 = vmatpush1.bf16.msra.mxu0 %v3473
  %3487 = vmatprep.subr.bf16.mxu0 0
  %3488 = vmatpush1.bf16.msra.mxu0 %v3472
  %3489 = vmatprep.subr.bf16.mxu0 0
  %3490 = vmatpush1.bf16.msra.mxu0 %v3471
  %3491 = vmatprep.subr.bf16.mxu0 0
  %3492 = vmatpush1.bf16.msra.mxu0 %v3470
  %3493 = vmatprep.subr.bf16.mxu0 0
  %3494 = vmatpush1.bf16.msra.mxu0 %v3469
  %3495 = vmatprep.subr.bf16.mxu0 0
  %3496 = vmatpush1.bf16.msra.mxu0 %v3468
  %3497 = vmatprep.subr.bf16.mxu0 0
  %3498 = vmatpush1.bf16.msra.mxu0 %v3467
  %3499 = vmatprep.subr.bf16.mxu0 0
  %3500 = vmatpush2.bf16.msra.mxu0 0
  %3501 = vmatprep.subr.bf16.mxu0 0
  %3502 = vmatpush2.bf16.msra.mxu0 0
  %3503 = vmatprep.subr.bf16.mxu0 0
  %3504 = vmatpush2.bf16.msra.mxu0 0
  %3505 = vmatprep.subr.bf16.mxu0 0
  %3506 = vmatpush2.bf16.msra.mxu0 0
  %3507 = vmatprep.subr.bf16.mxu0 0
  %3508 = vmatpush2.bf16.msra.mxu0 0
  %3509 = vmatprep.subr.bf16.mxu0 0
  %3510 = vmatpush2.bf16.msra.mxu0 0
  %3511 = vmatprep.subr.bf16.mxu0 0
  %3512 = vmatpush2.bf16.msra.mxu0 0
  %3513 = vmatprep.subr.bf16.mxu0 0
  %3514 = vmatpush2.bf16.msra.mxu0 0
  %3515 = vmatprep.mubr.bf16.mxu0 0
  %3516 = vmatmul.mubr.bf16.gmra.mxu0 %v3411
  %v3517 = vpop.f32.mrf.mxu0
  %v3518 = vadd.f32 %v3433, %v3517
  %v3519 = vpop.f32.mrf.mxu0
  %v3520 = vpop.f32.mrf.mxu0
  %v3521 = vadd.f32 %v3433, %v3520
  %v3522 = vpop.f32.mrf.mxu0
  %3523 = vdwg.mxu0
  %v3524 = vmax.f32 %v3518, 0.0
  %v3525 = vmax.f32 %v3521, 0.0
  %v3526 = vpack.c.bf16 %v3525, %v3524
  %v3527 = vld [vmem:[%s11] sm:$0xf]
  %v3528 = vld [vmem:[%s11 + $0x4] sm:$0xf]
  %v3529 = vld [vmem:[%s11 + $0x8] sm:$0xf]
  %v3530 = vld [vmem:[%s11 + $0xc] sm:$0xf]
  %v3531 = vld [vmem:[%s11 + $0x10] sm:$0xf]
  %v3532 = vld [vmem:[%s11 + $0x14] sm:$0xf]
  %v3533 = vld [vmem:[%s11 + $0x18] sm:$0xf]
  %v3534 = vld [vmem:[%s11 + $0x1c] sm:$0xf]
  %v3535 = vld [vmem:[%s12] sm:$0x1]
  %v3537 = vlaneseq
  %v3538 = vshrl.u32 %v3537, 7
  %v3539 = vsub.s32 0, %v3538
  %v3540 = vrot.slane %v3535, %v3539
  %v3550 = vunpack.c.l.b16 %v3527
  %v3551 = vunpack.c.l.b16 %v3528
  %v3552 = vunpack.c.l.b16 %v3529
  %v3553 = vunpack.c.l.b16 %v3530
  %v3554 = vunpack.c.l.b16 %v3531
  %v3555 = vunpack.c.l.b16 %v3532
  %v3556 = vunpack.c.l.b16 %v3533
  %v3557 = vunpack.c.l.b16 %v3534
  %v3558 = vpack.c.b16 %v3551, %v3550
  %v3559 = vpack.c.b16 %v3553, %v3552
  %v3560 = vpack.c.b16 %v3555, %v3554
  %v3561 = vpack.c.b16 %v3557, %v3556
  %v3567 = vsel %vm1598, %v3526, 0
  %3569 = vmatprep.subr.bf16.mxu0 0
  %3570 = vmatpush1.bf16.msra.mxu0 0
  %3571 = vmatprep.subr.bf16.mxu0 0
  %3572 = vmatpush1.bf16.msra.mxu0 0
  %3573 = vmatprep.subr.bf16.mxu0 0
  %3574 = vmatpush1.bf16.msra.mxu0 0
  %3575 = vmatprep.subr.bf16.mxu0 0
  %3576 = vmatpush1.bf16.msra.mxu0 0
  %3577 = vmatprep.subr.bf16.mxu0 0
  %3578 = vmatpush1.bf16.msra.mxu0 %v3561
  %3579 = vmatprep.subr.bf16.mxu0 0
  %3580 = vmatpush1.bf16.msra.mxu0 %v3560
  %3581 = vmatprep.subr.bf16.mxu0 0
  %3582 = vmatpush1.bf16.msra.mxu0 %v3559
  %3583 = vmatprep.subr.bf16.mxu0 0
  %3584 = vmatpush1.bf16.msra.mxu0 %v3558
  %3585 = vmatprep.subr.bf16.mxu0 0
  %3586 = vmatpush2.bf16.msra.mxu0 0
  %3587 = vmatprep.subr.bf16.mxu0 0
  %3588 = vmatpush2.bf16.msra.mxu0 0
  %3589 = vmatprep.subr.bf16.mxu0 0
  %3590 = vmatpush2.bf16.msra.mxu0 0
  %3591 = vmatprep.subr.bf16.mxu0 0
  %3592 = vmatpush2.bf16.msra.mxu0 0
  %3593 = vmatprep.subr.bf16.mxu0 0
  %3594 = vmatpush2.bf16.msra.mxu0 0
  %3595 = vmatprep.subr.bf16.mxu0 0
  %3596 = vmatpush2.bf16.msra.mxu0 0
  %3597 = vmatprep.subr.bf16.mxu0 0
  %3598 = vmatpush2.bf16.msra.mxu0 0
  %3599 = vmatprep.subr.bf16.mxu0 0
  %3600 = vmatpush2.bf16.msra.mxu0 0
  %3601 = vmatprep.mubr.bf16.mxu0 0
  %3602 = vmatmul.mubr.bf16.gmra.mxu0 %v3567
  %v3603 = vpop.f32.mrf.mxu0
  %v3604 = vadd.f32 %v3540, %v3603
  %v3605 = vpop.f32.mrf.mxu0
  %v3606 = vpop.f32.mrf.mxu0
  %v3607 = vadd.f32 %v3540, %v3606
  %v3608 = vpop.f32.mrf.mxu0
  %3609 = vdwg.mxu0
  %3610 = vst [vmem:[%s13] sm:$0xff] %v3604
  %3611 = vst [vmem:[%s13 + $0x8] sm:$0xff] %v3607
  // Predicated region
  $region54: #{digit_classifier_forward.1} parent=0 // pred_check
    _
  $region55: #{digit_classifier_forward.1} parent=0 // pred_check_branch
    %3613 = sbr.rel (0) target = $region57
  $region56: #{digit_classifier_forward.1} parent=0 // pred_region
    _
  $region57: #{digit_classifier_forward.1} parent=0 // pred_fallthru
    _
  // Predicated region
  $region58: #{digit_classifier_forward.1} parent=0 // pred_check
    _
  $region59: #{digit_classifier_forward.1} parent=0 // pred_check_branch
    %3615 = sbr.rel (0) target = $region61
  $region60: #{digit_classifier_forward.1} parent=0 // pred_region
    _
  $region61: #{digit_classifier_forward.1} parent=0 // pred_fallthru
    _

</llo_original>
